<compile_context>
chip_gen: v7x
topology: tpu7x:2x2x1
jax: 0.10.0
libtpu: 0.0.40
codegen_flags: <defaults>
</compile_context>

<pallas_src>
import functools

import jax
import jax.numpy as jnp
from jax import lax
from jax.experimental import pallas as pl
from jax.experimental.pallas import tpu as pltpu

EPS = 1e-5


def _vmem_limit_bytes():
    # Per-generation cap with double-buffer headroom (v7x has only 64 MiB).
    try:
        return int(pltpu.get_tpu_info().vmem_capacity_bytes * 3 // 4)
    except Exception:
        return 48 * 1024 * 1024


def _cparams(n_grid_dims):
    return pltpu.CompilerParams(
        dimension_semantics=("parallel",) * n_grid_dims,
        vmem_limit_bytes=_vmem_limit_bytes(),
    )


# --------------------------------------------------------------------------
# Pallas kernels
# --------------------------------------------------------------------------
def _conv3x3_kernel(prev_ref, main_ref, next_ref, w_ref, scl_ref, bias_ref,
                    o_ref, s_ref, *, apply_input_act):
    """3x3 'same' conv on one row tile of one image + per-tile BN partials.

    prev_ref : (1, 1,  W, Cin) bf16  image row just above the tile (dummy if none)
    main_ref : (1, TR, W, Cin) bf16  the TR rows this step produces
    next_ref : (1, 1,  W, Cin) bf16  image row just below the tile (dummy if none)
    w_ref    : (3, 3*Cin, Cout) bf16 weights, K = (dx, ci)
    scl_ref  : (1, Cin) f32          previous layer's folded BN scale (fused epilogue)
    bias_ref : (1, Cin) f32          previous layer's folded BN bias
    o_ref    : (1, TR, W, Cout) bf16 pre-BN conv output
    s_ref    : (1, 1, 2, Cout) f32   per-tile [sum, sum_sq] over the TR*W pixels
    """
    TR, W, Cin = main_ref.shape[1], main_ref.shape[2], main_ref.shape[3]
    Cout = o_ref.shape[3]
    j = pl.program_id(1)
    last = pl.num_programs(1) - 1

    def load_act(t):
        # Fused previous-layer BN+ReLU applied to the loaded input tile.
        if apply_input_act:
            t = jnp.maximum(t.astype(jnp.float32) * scl_ref[...] + bias_ref[...], 0.0)
            t = t.astype(jnp.bfloat16)
        return t

    top = load_act(prev_ref[0, 0])          # (W, Cin)
    mid = load_act(main_ref[0])             # (TR, W, Cin)
    bot = load_act(next_ref[0, 0])          # (W, Cin)

    # Halo rows outside the image must be zero *after* the fused activation.
    zrow = jnp.zeros_like(top)
    top = jnp.where(j > 0, top, zrow)
    bot = jnp.where(j < last, bot, zrow)

    rows = jnp.concatenate([top[None], mid, bot[None]], axis=0)   # (TR+2, W, Cin)
    zcol = jnp.zeros((TR + 2, 1, Cin), rows.dtype)
    xp = jnp.concatenate([zcol, rows, zcol], axis=1)              # (TR+2, W+2, Cin)

    acc = jnp.zeros((TR * W, Cout), jnp.float32)
    for dy in range(3):                     # unrolled: 3 MXU matmuls, K = 3*Cin
        xd = xp[dy:dy + TR]                 # (TR, W+2, Cin)
        patch = jnp.concatenate(
            [xd[:, 0:W], xd[:, 1:W + 1], xd[:, 2:W + 2]], axis=-1)
        patch = patch.reshape(TR * W, 3 * Cin)
        acc = acc + jnp.dot(patch, w_ref[dy],
                            preferred_element_type=jnp.float32)

    o_ref[0] = acc.reshape(TR, W, Cout).astype(o_ref.dtype)
    psum = jnp.sum(acc, axis=0, keepdims=True)          # (1, Cout)
    psq = jnp.sum(acc * acc, axis=0, keepdims=True)     # (1, Cout)
    s_ref[0, 0] = jnp.concatenate([psum, psq], axis=0)


def _bn_relu_kernel(z_ref, scl_ref, bias_ref, o_ref):
    """y = max(z * scale + bias, 0) with folded BN affine (f32 math)."""
    y = z_ref[...].astype(jnp.float32) * scl_ref[...] + bias_ref[...]
    o_ref[...] = jnp.maximum(y, 0.0).astype(o_ref.dtype)


# --------------------------------------------------------------------------
# Tiling helpers
# --------------------------------------------------------------------------
def _pick_row_tile(H, W, n_images, target_pixels=2048):
    """Image rows per conv grid step: ~target_pixels pixels, TR | H, and keep
    at least 2 grid steps overall so the parallel axis feeds both v7x cores."""
    divs = [d for d in range(1, H + 1) if H % d == 0]
    fits = [d for d in divs if d * W <= target_pixels]
    tr = max(fits) if fits else 1
    if n_images * (H // tr) < 2:
        smaller = [d for d in divs if d < tr]
        if smaller:
            tr = max(smaller)
    return tr


def _pick_epilogue_rows(M, target=8192):
    """Large lane-dense blocks for the elementwise epilogue (multiple of 8)."""
    divs = [d for d in range(8, M + 1, 8) if M % d == 0]
    if not divs:
        return M
    fits = [d for d in divs if d <= target]
    br = max(fits) if fits else min(divs)
    if M // br < 2:
        smaller = [d for d in divs if d < br and M // d >= 2]
        if smaller:
            br = max(smaller)
    return br


# --------------------------------------------------------------------------
# Conv3x3 (+ optional fused input BN/ReLU) with batch-stat partials
# --------------------------------------------------------------------------
def conv3x3_with_stats(x, w_oihw, in_scale=None, in_bias=None):
    """x: (N,H,W,Cin) bf16; w_oihw: (Cout,Cin,3,3) torch layout.

    If in_scale/in_bias are given, max(x*scale+bias, 0) (the previous layer's
    folded BN + ReLU) is applied to x inside the kernel before the conv.
    Returns (z, mean, var): z = pre-BN conv output (bf16), per-channel batch
    statistics of z computed from the f32 accumulator.
    """
    x = x.astype(jnp.bfloat16)
    N, H, W, Cin = x.shape
    Cout = w_oihw.shape[0]
    apply_act = in_scale is not None

    # (Cout, Cin, 3, 3) -> (dy, dx*Cin + ci, Cout), bf16 for the MXU.
    w_k = jnp.transpose(w_oihw, (2, 3, 1, 0)).reshape(3, 3 * Cin, Cout)
    w_k = w_k.astype(jnp.bfloat16)

    if not apply_act:
        in_scale = jnp.ones((Cin,), jnp.float32)
        in_bias = jnp.zeros((Cin,), jnp.float32)
    scl = in_scale.reshape(1, Cin).astype(jnp.float32)
    bia = in_bias.reshape(1, Cin).astype(jnp.float32)

    TR = _pick_row_tile(H, W, N)
    tpi = H // TR

    kernel = functools.partial(_conv3x3_kernel, apply_input_act=apply_act)

    z, stats = pl.pallas_call(
        kernel,
        grid=(N, tpi),
        in_specs=[
            # 1-row halo above the tile (clamped; masked to zero in-kernel at j==0)
            pl.BlockSpec((1, 1, W, Cin),
                         lambda n, j: (n, jnp.maximum(j * TR - 1, 0), 0, 0)),
            # the TR rows of this step (read exactly once)
            pl.BlockSpec((1, TR, W, Cin), lambda n, j: (n, j, 0, 0)),
            # 1-row halo below the tile (clamped; masked at j==tpi-1)
            pl.BlockSpec((1, 1, W, Cin),
                         lambda n, j: (n, jnp.minimum((j + 1) * TR, H - 1), 0, 0)),
            pl.BlockSpec((3, 3 * Cin, Cout), lambda n, j: (0, 0, 0)),
            pl.BlockSpec((1, Cin), lambda n, j: (0, 0)),
            pl.BlockSpec((1, Cin), lambda n, j: (0, 0)),
        ],
        out_specs=(
            pl.BlockSpec((1, TR, W, Cout), lambda n, j: (n, j, 0, 0)),
            pl.BlockSpec((1, 1, 2, Cout), lambda n, j: (n, j, 0, 0)),
        ),
        out_shape=(
            jax.ShapeDtypeStruct((N, H, W, Cout), jnp.bfloat16),
            jax.ShapeDtypeStruct((N, tpi, 2, Cout), jnp.float32),
        ),
        compiler_params=_cparams(2),
    )(x, x, x, w_k, scl, bia)

    # Training-mode (biased) batch statistics, finalized with a tiny JAX reduce.
    cnt = jnp.float32(N * H * W)
    mean = jnp.sum(stats[:, :, 0, :], axis=(0, 1)) / cnt
    var = jnp.maximum(jnp.sum(stats[:, :, 1, :], axis=(0, 1)) / cnt - mean * mean, 0.0)
    return z, mean, var


def fold_bn(gamma, beta, mean, var):
    scale = gamma * lax.rsqrt(var + EPS)
    bias = beta - mean * scale      # conv bias cancels against the BN mean
    return scale, bias


def bn_relu(z, scale, bias, out_dtype=jnp.float32):
    """Standalone BN+ReLU epilogue (only used after the last conv), large blocks."""
    N, H, W, C = z.shape
    M = N * H * W
    BR = _pick_epilogue_rows(M)
    y = pl.pallas_call(
        _bn_relu_kernel,
        grid=(M // BR,),
        in_specs=[
            pl.BlockSpec((BR, C), lambda i: (i, 0)),
            pl.BlockSpec((1, C), lambda i: (0, 0)),
            pl.BlockSpec((1, C), lambda i: (0, 0)),
        ],
        out_specs=pl.BlockSpec((BR, C), lambda i: (i, 0)),
        out_shape=jax.ShapeDtypeStruct((M, C), out_dtype),
        compiler_params=_cparams(1),
    )(z.reshape(M, C),
      scale.reshape(1, C).astype(jnp.float32),
      bias.reshape(1, C).astype(jnp.float32))
    return y.reshape(N, H, W, C)


# --------------------------------------------------------------------------
# Plain-JAX glue + Down module
# --------------------------------------------------------------------------
def maxpool2(x):  # NHWC, kernel=stride=2 (floor behaviour, like torch)
    N, H, W, C = x.shape
    H2, W2 = H // 2, W // 2
    x = x[:, :H2 * 2, :W2 * 2, :]
    return x.reshape(N, H2, 2, W2, 2, C).max(axis=(2, 4))


def down_forward(params, x_nchw):
    """Down: MaxPool2d(2) -> (Conv3x3 + BN + ReLU) x 2. NCHW in, NCHW out."""
    # TODO(synk): keep the surrounding UNet in NHWC to drop these two transposes.
    x = jnp.transpose(x_nchw, (0, 2, 3, 1))             # NCHW -> NHWC
    x = maxpool2(x).astype(jnp.bfloat16)

    z1, m1, v1 = conv3x3_with_stats(x, params["w1"])
    s1, b1 = fold_bn(params["g1"], params["be1"], m1, v1)

    # Layer-1's BN+ReLU is fused into layer-2's conv input load.
    z2, m2, v2 = conv3x3_with_stats(z1, params["w2"], s1, b1)
    s2, b2 = fold_bn(params["g2"], params["be2"], m2, v2)

    y = bn_relu(z2, s2, b2, out_dtype=jnp.float32)
    return jnp.transpose(y, (0, 3, 1, 2))                # NHWC -> NCHW


def init_down(key, cin, cout):
    # Conv biases are omitted: with training-mode BatchNorm right after the
    # conv, the bias is exactly cancelled by the mean subtraction.
    k1, k2 = jax.random.split(key)

    def conv_w(k, ci, co):
        std = (2.0 / (ci * 9)) ** 0.5
        return jax.random.normal(k, (co, ci, 3, 3), jnp.float32) * std  # OIHW

    ones = jnp.ones((cout,), jnp.float32)
    zeros = jnp.zeros((cout,), jnp.float32)
    return {
        "w1": conv_w(k1, cin, cout), "g1": ones, "be1": zeros,
        "w2": conv_w(k2, cout, cout), "g2": ones, "be2": zeros,
    }


# --------------------------------------------------------------------------
if __name__ == "__main__":
    IN_C, OUT_C = 64, 128          # a typical UNet Down stage (64 -> 128)
    N, H, W = 2, 32, 32

    key = jax.random.PRNGKey(0)
    pkey, xkey = jax.random.split(key)
    params = init_down(pkey, IN_C, OUT_C)
    x = jax.random.normal(xkey, (N, IN_C, H, W), jnp.float32)   # NCHW

    fwd = jax.jit(down_forward)
    out = fwd(params, x)
    jax.block_until_ready(out)

    assert out.shape == (N, OUT_C, H // 2, W // 2), out.shape
    assert out.dtype == jnp.float32
    assert bool(jnp.all(jnp.isfinite(out)))
    print("KERNEL_OK")
</pallas_src>

<mosaic_0001>
module attributes {stable_mosaic.version = 11 : i64} {
  func.func @_conv3x3_kernel(%arg0: i32, %arg1: i32, %arg2: memref<1x1x16x64xbf16, #tpu.memory_space<vmem>>, %arg3: memref<1x16x16x64xbf16, #tpu.memory_space<vmem>>, %arg4: memref<1x1x16x64xbf16, #tpu.memory_space<vmem>>, %arg5: memref<3x192x128xbf16, #tpu.memory_space<vmem>>, %arg6: memref<1x64xf32, #tpu.memory_space<vmem>>, %arg7: memref<1x64xf32, #tpu.memory_space<vmem>>, %arg8: memref<1x16x16x128xbf16, #tpu.memory_space<vmem>>, %arg9: memref<1x1x2x128xf32, #tpu.memory_space<vmem>>) attributes {dimension_semantics = [#tpu.dimension_semantics<parallel>, #tpu.dimension_semantics<parallel>], iteration_bounds = array<i64: 2, 1>, scalar_prefetch = 0 : i64, scratch_operands = 0 : i64, tpu.core_type = #tpu.core_type<tc>, window_params = [{transform_indices = @transform_0, window_bounds = array<i64: 1, 1, 16, 64>}, {transform_indices = @transform_1, window_bounds = array<i64: 1, 16, 16, 64>}, {transform_indices = @transform_2, window_bounds = array<i64: 1, 1, 16, 64>}, {pipeline_mode = #tpu.pipeline_mode<synchronous>, transform_indices = @transform_3, window_bounds = array<i64: 3, 192, 128>}, {pipeline_mode = #tpu.pipeline_mode<synchronous>, transform_indices = @transform_4, window_bounds = array<i64: 1, 64>}, {pipeline_mode = #tpu.pipeline_mode<synchronous>, transform_indices = @transform_5, window_bounds = array<i64: 1, 64>}, {transform_indices = @transform_6, window_bounds = array<i64: 1, 16, 16, 128>}, {transform_indices = @transform_7, window_bounds = array<i64: 1, 1, 2, 128>}]} {
    %c0 = arith.constant 0 : index
    %c0_0 = arith.constant 0 : index
    %c0_1 = arith.constant 0 : index
    %c0_2 = arith.constant 0 : index
    %0 = vector.load %arg2[%c0, %c0_0, %c0_1, %c0_2] : memref<1x1x16x64xbf16, #tpu.memory_space<vmem>>, vector<1x1x16x64xbf16>
    %1 = vector.shape_cast %0 : vector<1x1x16x64xbf16> to vector<16x64xbf16>
    %c0_3 = arith.constant 0 : index
    %c0_4 = arith.constant 0 : index
    %c0_5 = arith.constant 0 : index
    %c0_6 = arith.constant 0 : index
    %2 = vector.load %arg3[%c0_3, %c0_4, %c0_5, %c0_6] : memref<1x16x16x64xbf16, #tpu.memory_space<vmem>>, vector<1x16x16x64xbf16>
    %3 = vector.shape_cast %2 : vector<1x16x16x64xbf16> to vector<16x16x64xbf16>
    %c0_7 = arith.constant 0 : index
    %c0_8 = arith.constant 0 : index
    %c0_9 = arith.constant 0 : index
    %c0_10 = arith.constant 0 : index
    %4 = vector.load %arg4[%c0_7, %c0_8, %c0_9, %c0_10] : memref<1x1x16x64xbf16, #tpu.memory_space<vmem>>, vector<1x1x16x64xbf16>
    %5 = vector.shape_cast %4 : vector<1x1x16x64xbf16> to vector<16x64xbf16>
    %cst = arith.constant 0.000000e+00 : bf16
    %6 = vector.broadcast %cst : bf16 to vector<16x64xbf16>
    %c0_i32 = arith.constant 0 : i32
    %7 = arith.cmpi sgt, %arg1, %c0_i32 : i32
    %8 = arith.select %7, %1, %6 : vector<16x64xbf16>
    %c0_i32_11 = arith.constant 0 : i32
    %9 = arith.cmpi slt, %arg1, %c0_i32_11 : i32
    %10 = arith.select %9, %5, %6 : vector<16x64xbf16>
    %11 = vector.shape_cast %8 : vector<16x64xbf16> to vector<1x16x64xbf16>
    %12 = vector.shape_cast %10 : vector<16x64xbf16> to vector<1x16x64xbf16>
    %13 = tpu.concatenate %11, %3, %12 in 0 : vector<1x16x64xbf16>, vector<16x16x64xbf16>, vector<1x16x64xbf16> -> vector<18x16x64xbf16>
    %cst_12 = arith.constant 0.000000e+00 : bf16
    %14 = vector.broadcast %cst_12 : bf16 to vector<18x1x64xbf16>
    %15 = tpu.concatenate %14, %13, %14 in 1 : vector<18x1x64xbf16>, vector<18x16x64xbf16>, vector<18x1x64xbf16> -> vector<18x18x64xbf16>
    %cst_13 = arith.constant 0.000000e+00 : f32
    %16 = vector.broadcast %cst_13 : f32 to vector<256x128xf32>
    %17 = vector.extract_strided_slice %15 {offsets = [0, 0, 0], sizes = [16, 18, 64], strides = [1, 1, 1]} : vector<18x18x64xbf16> to vector<16x18x64xbf16>
    %18 = vector.extract_strided_slice %17 {offsets = [0, 0, 0], sizes = [16, 16, 64], strides = [1, 1, 1]} : vector<16x18x64xbf16> to vector<16x16x64xbf16>
    %19 = vector.extract_strided_slice %17 {offsets = [0, 1, 0], sizes = [16, 16, 64], strides = [1, 1, 1]} : vector<16x18x64xbf16> to vector<16x16x64xbf16>
    %20 = vector.extract_strided_slice %17 {offsets = [0, 2, 0], sizes = [16, 16, 64], strides = [1, 1, 1]} : vector<16x18x64xbf16> to vector<16x16x64xbf16>
    %21 = tpu.concatenate %18, %19, %20 in 2 : vector<16x16x64xbf16>, vector<16x16x64xbf16>, vector<16x16x64xbf16> -> vector<16x16x192xbf16>
    %22 = vector.shape_cast %21 : vector<16x16x192xbf16> to vector<256x192xbf16>
    %c0_14 = arith.constant 0 : index
    %c0_15 = arith.constant 0 : index
    %c0_16 = arith.constant 0 : index
    %23 = vector.load %arg5[%c0_14, %c0_15, %c0_16] : memref<3x192x128xbf16, #tpu.memory_space<vmem>>, vector<1x192x128xbf16>
    %24 = vector.shape_cast %23 : vector<1x192x128xbf16> to vector<192x128xbf16>
    %cst_17 = arith.constant dense<0.000000e+00> : vector<256x128xf32>
    %25 = tpu.matmul %22, %24, %cst_17 {dimension_numbers = #tpu.dot_dimension_numbers<[1], [0], [0], [1], [0, 0, 1, 1], [], []>} : vector<256x192xbf16>, vector<192x128xbf16>, vector<256x128xf32> -> vector<256x128xf32>
    %26 = arith.addf %16, %25 : vector<256x128xf32>
    %27 = vector.extract_strided_slice %15 {offsets = [1, 0, 0], sizes = [16, 18, 64], strides = [1, 1, 1]} : vector<18x18x64xbf16> to vector<16x18x64xbf16>
    %28 = vector.extract_strided_slice %27 {offsets = [0, 0, 0], sizes = [16, 16, 64], strides = [1, 1, 1]} : vector<16x18x64xbf16> to vector<16x16x64xbf16>
    %29 = vector.extract_strided_slice %27 {offsets = [0, 1, 0], sizes = [16, 16, 64], strides = [1, 1, 1]} : vector<16x18x64xbf16> to vector<16x16x64xbf16>
    %30 = vector.extract_strided_slice %27 {offsets = [0, 2, 0], sizes = [16, 16, 64], strides = [1, 1, 1]} : vector<16x18x64xbf16> to vector<16x16x64xbf16>
    %31 = tpu.concatenate %28, %29, %30 in 2 : vector<16x16x64xbf16>, vector<16x16x64xbf16>, vector<16x16x64xbf16> -> vector<16x16x192xbf16>
    %32 = vector.shape_cast %31 : vector<16x16x192xbf16> to vector<256x192xbf16>
    %c1 = arith.constant 1 : index
    %c0_18 = arith.constant 0 : index
    %c0_19 = arith.constant 0 : index
    %33 = vector.load %arg5[%c1, %c0_18, %c0_19] : memref<3x192x128xbf16, #tpu.memory_space<vmem>>, vector<1x192x128xbf16>
    %34 = vector.shape_cast %33 : vector<1x192x128xbf16> to vector<192x128xbf16>
    %cst_20 = arith.constant dense<0.000000e+00> : vector<256x128xf32>
    %35 = tpu.matmul %32, %34, %cst_20 {dimension_numbers = #tpu.dot_dimension_numbers<[1], [0], [0], [1], [0, 0, 1, 1], [], []>} : vector<256x192xbf16>, vector<192x128xbf16>, vector<256x128xf32> -> vector<256x128xf32>
    %36 = arith.addf %26, %35 : vector<256x128xf32>
    %37 = vector.extract_strided_slice %15 {offsets = [2, 0, 0], sizes = [16, 18, 64], strides = [1, 1, 1]} : vector<18x18x64xbf16> to vector<16x18x64xbf16>
    %38 = vector.extract_strided_slice %37 {offsets = [0, 0, 0], sizes = [16, 16, 64], strides = [1, 1, 1]} : vector<16x18x64xbf16> to vector<16x16x64xbf16>
    %39 = vector.extract_strided_slice %37 {offsets = [0, 1, 0], sizes = [16, 16, 64], strides = [1, 1, 1]} : vector<16x18x64xbf16> to vector<16x16x64xbf16>
    %40 = vector.extract_strided_slice %37 {offsets = [0, 2, 0], sizes = [16, 16, 64], strides = [1, 1, 1]} : vector<16x18x64xbf16> to vector<16x16x64xbf16>
    %41 = tpu.concatenate %38, %39, %40 in 2 : vector<16x16x64xbf16>, vector<16x16x64xbf16>, vector<16x16x64xbf16> -> vector<16x16x192xbf16>
    %42 = vector.shape_cast %41 : vector<16x16x192xbf16> to vector<256x192xbf16>
    %c2 = arith.constant 2 : index
    %c0_21 = arith.constant 0 : index
    %c0_22 = arith.constant 0 : index
    %43 = vector.load %arg5[%c2, %c0_21, %c0_22] : memref<3x192x128xbf16, #tpu.memory_space<vmem>>, vector<1x192x128xbf16>
    %44 = vector.shape_cast %43 : vector<1x192x128xbf16> to vector<192x128xbf16>
    %cst_23 = arith.constant dense<0.000000e+00> : vector<256x128xf32>
    %45 = tpu.matmul %42, %44, %cst_23 {dimension_numbers = #tpu.dot_dimension_numbers<[1], [0], [0], [1], [0, 0, 1, 1], [], []>} : vector<256x192xbf16>, vector<192x128xbf16>, vector<256x128xf32> -> vector<256x128xf32>
    %46 = arith.addf %36, %45 : vector<256x128xf32>
    %47 = vector.shape_cast %46 : vector<256x128xf32> to vector<16x16x128xf32>
    %48 = arith.truncf %47 : vector<16x16x128xf32> to vector<16x16x128xbf16>
    %c0_24 = arith.constant 0 : index
    %c0_25 = arith.constant 0 : index
    %c0_26 = arith.constant 0 : index
    %c0_27 = arith.constant 0 : index
    %49 = vector.load %arg8[%c0_24, %c0_25, %c0_26, %c0_27] : memref<1x16x16x128xbf16, #tpu.memory_space<vmem>>, vector<1x16x16x128xbf16>
    %50 = vector.shape_cast %49 : vector<1x16x16x128xbf16> to vector<16x16x128xbf16>
    %51 = vector.shape_cast %48 : vector<16x16x128xbf16> to vector<1x16x16x128xbf16>
    tpu.vector_store %arg8[%c0_24, %c0_25, %c0_26, %c0_27], %51 {strides = array<i32>} : memref<1x16x16x128xbf16, #tpu.memory_space<vmem>>, vector<1x16x16x128xbf16>,
    %cst_28 = arith.constant dense<0.000000e+00> : vector<128xf32>
    %52 = vector.multi_reduction <add>, %46, %cst_28 [0] : vector<256x128xf32> to vector<128xf32>
    %53 = vector.shape_cast %52 : vector<128xf32> to vector<1x128xf32>
    %54 = arith.mulf %46, %46 : vector<256x128xf32>
    %cst_29 = arith.constant dense<0.000000e+00> : vector<128xf32>
    %55 = vector.multi_reduction <add>, %54, %cst_29 [0] : vector<256x128xf32> to vector<128xf32>
    %56 = vector.shape_cast %55 : vector<128xf32> to vector<1x128xf32>
    %57 = tpu.concatenate %53, %56 in 0 : vector<1x128xf32>, vector<1x128xf32> -> vector<2x128xf32>
    %c0_30 = arith.constant 0 : index
    %c0_31 = arith.constant 0 : index
    %c0_32 = arith.constant 0 : index
    %c0_33 = arith.constant 0 : index
    %58 = vector.load %arg9[%c0_30, %c0_31, %c0_32, %c0_33] : memref<1x1x2x128xf32, #tpu.memory_space<vmem>>, vector<1x1x2x128xf32>
    %59 = vector.shape_cast %58 : vector<1x1x2x128xf32> to vector<2x128xf32>
    %60 = vector.shape_cast %57 : vector<2x128xf32> to vector<1x1x2x128xf32>
    tpu.vector_store %arg9[%c0_30, %c0_31, %c0_32, %c0_33], %60 {strides = array<i32>} : memref<1x1x2x128xf32, #tpu.memory_space<vmem>>, vector<1x1x2x128xf32>,
    return
  }
  func.func @transform_0(%arg0: i32, %arg1: i32) -> (i32, i32, i32, i32) {
    %c16_i32 = arith.constant 16 : i32
    %0 = arith.muli %arg1, %c16_i32 : i32
    %c1_i32 = arith.constant 1 : i32
    %1 = arith.subi %0, %c1_i32 : i32
    %c0_i32 = arith.constant 0 : i32
    %2 = arith.maxsi %1, %c0_i32 : i32
    %c0_i32_0 = arith.constant 0 : i32
    %c0_i32_1 = arith.constant 0 : i32
    %c0_i32_2 = arith.constant 0 : i32
    return %arg0, %2, %c0_i32_0, %c0_i32_1 : i32, i32, i32, i32
  }
  func.func @transform_1(%arg0: i32, %arg1: i32) -> (i32, i32, i32, i32) {
    %c0_i32 = arith.constant 0 : i32
    %c0_i32_0 = arith.constant 0 : i32
    %c0_i32_1 = arith.constant 0 : i32
    return %arg0, %arg1, %c0_i32, %c0_i32_0 : i32, i32, i32, i32
  }
  func.func @transform_2(%arg0: i32, %arg1: i32) -> (i32, i32, i32, i32) {
    %c1_i32 = arith.constant 1 : i32
    %0 = arith.addi %arg1, %c1_i32 : i32
    %c16_i32 = arith.constant 16 : i32
    %1 = arith.muli %0, %c16_i32 : i32
    %c15_i32 = arith.constant 15 : i32
    %2 = arith.minsi %1, %c15_i32 : i32
    %c0_i32 = arith.constant 0 : i32
    %c0_i32_0 = arith.constant 0 : i32
    %c0_i32_1 = arith.constant 0 : i32
    return %arg0, %2, %c0_i32, %c0_i32_0 : i32, i32, i32, i32
  }
  func.func @transform_3(%arg0: i32, %arg1: i32) -> (i32, i32, i32) {
    %c0_i32 = arith.constant 0 : i32
    %c0_i32_0 = arith.constant 0 : i32
    %c0_i32_1 = arith.constant 0 : i32
    %c0_i32_2 = arith.constant 0 : i32
    return %c0_i32, %c0_i32_0, %c0_i32_1 : i32, i32, i32
  }
  func.func @transform_4(%arg0: i32, %arg1: i32) -> (i32, i32) {
    %c0_i32 = arith.constant 0 : i32
    %c0_i32_0 = arith.constant 0 : i32
    %c0_i32_1 = arith.constant 0 : i32
    return %c0_i32, %c0_i32_0 : i32, i32
  }
  func.func @transform_5(%arg0: i32, %arg1: i32) -> (i32, i32) {
    %c0_i32 = arith.constant 0 : i32
    %c0_i32_0 = arith.constant 0 : i32
    %c0_i32_1 = arith.constant 0 : i32
    return %c0_i32, %c0_i32_0 : i32, i32
  }
  func.func @transform_6(%arg0: i32, %arg1: i32) -> (i32, i32, i32, i32) {
    %c0_i32 = arith.constant 0 : i32
    %c0_i32_0 = arith.constant 0 : i32
    %c0_i32_1 = arith.constant 0 : i32
    return %arg0, %arg1, %c0_i32, %c0_i32_0 : i32, i32, i32, i32
  }
  func.func @transform_7(%arg0: i32, %arg1: i32) -> (i32, i32, i32, i32) {
    %c0_i32 = arith.constant 0 : i32
    %c0_i32_0 = arith.constant 0 : i32
    %c0_i32_1 = arith.constant 0 : i32
    return %arg0, %arg1, %c0_i32, %c0_i32_0 : i32, i32, i32, i32
  }
}

module attributes {stable_mosaic.version = 11 : i64} {
  func.func @_conv3x3_kernel(%arg0: i32, %arg1: i32, %arg2: memref<1x1x16x128xbf16, #tpu.memory_space<vmem>>, %arg3: memref<1x16x16x128xbf16, #tpu.memory_space<vmem>>, %arg4: memref<1x1x16x128xbf16, #tpu.memory_space<vmem>>, %arg5: memref<3x384x128xbf16, #tpu.memory_space<vmem>>, %arg6: memref<1x128xf32, #tpu.memory_space<vmem>>, %arg7: memref<1x128xf32, #tpu.memory_space<vmem>>, %arg8: memref<1x16x16x128xbf16, #tpu.memory_space<vmem>>, %arg9: memref<1x1x2x128xf32, #tpu.memory_space<vmem>>) attributes {dimension_semantics = [#tpu.dimension_semantics<parallel>, #tpu.dimension_semantics<parallel>], iteration_bounds = array<i64: 2, 1>, scalar_prefetch = 0 : i64, scratch_operands = 0 : i64, tpu.core_type = #tpu.core_type<tc>, window_params = [{transform_indices = @transform_0, window_bounds = array<i64: 1, 1, 16, 128>}, {transform_indices = @transform_1, window_bounds = array<i64: 1, 16, 16, 128>}, {transform_indices = @transform_2, window_bounds = array<i64: 1, 1, 16, 128>}, {pipeline_mode = #tpu.pipeline_mode<synchronous>, transform_indices = @transform_3, window_bounds = array<i64: 3, 384, 128>}, {pipeline_mode = #tpu.pipeline_mode<synchronous>, transform_indices = @transform_4, window_bounds = array<i64: 1, 128>}, {pipeline_mode = #tpu.pipeline_mode<synchronous>, transform_indices = @transform_5, window_bounds = array<i64: 1, 128>}, {transform_indices = @transform_6, window_bounds = array<i64: 1, 16, 16, 128>}, {transform_indices = @transform_7, window_bounds = array<i64: 1, 1, 2, 128>}]} {
    %c0 = arith.constant 0 : index
    %c0_0 = arith.constant 0 : index
    %c0_1 = arith.constant 0 : index
    %c0_2 = arith.constant 0 : index
    %0 = vector.load %arg2[%c0, %c0_0, %c0_1, %c0_2] : memref<1x1x16x128xbf16, #tpu.memory_space<vmem>>, vector<1x1x16x128xbf16>
    %1 = vector.shape_cast %0 : vector<1x1x16x128xbf16> to vector<16x128xbf16>
    %2 = arith.extf %1 : vector<16x128xbf16> to vector<16x128xf32>
    %c0_3 = arith.constant 0 : index
    %c0_4 = arith.constant 0 : index
    %3 = vector.load %arg6[%c0_3, %c0_4] : memref<1x128xf32, #tpu.memory_space<vmem>>, vector<1x128xf32>
    %4 = vector.broadcast %3 : vector<1x128xf32> to vector<16x128xf32>
    %5 = arith.mulf %2, %4 : vector<16x128xf32>
    %c0_5 = arith.constant 0 : index
    %c0_6 = arith.constant 0 : index
    %6 = vector.load %arg7[%c0_5, %c0_6] : memref<1x128xf32, #tpu.memory_space<vmem>>, vector<1x128xf32>
    %7 = vector.broadcast %6 : vector<1x128xf32> to vector<16x128xf32>
    %8 = arith.addf %5, %7 : vector<16x128xf32>
    %cst = arith.constant 0.000000e+00 : f32
    %9 = vector.broadcast %cst : f32 to vector<16x128xf32>
    %10 = arith.maximumf %8, %9 : vector<16x128xf32>
    %11 = arith.truncf %10 : vector<16x128xf32> to vector<16x128xbf16>
    %c0_7 = arith.constant 0 : index
    %c0_8 = arith.constant 0 : index
    %c0_9 = arith.constant 0 : index
    %c0_10 = arith.constant 0 : index
    %12 = vector.load %arg3[%c0_7, %c0_8, %c0_9, %c0_10] : memref<1x16x16x128xbf16, #tpu.memory_space<vmem>>, vector<1x16x16x128xbf16>
    %13 = vector.shape_cast %12 : vector<1x16x16x128xbf16> to vector<16x16x128xbf16>
    %14 = arith.extf %13 : vector<16x16x128xbf16> to vector<16x16x128xf32>
    %c0_11 = arith.constant 0 : index
    %c0_12 = arith.constant 0 : index
    %15 = vector.load %arg6[%c0_11, %c0_12] : memref<1x128xf32, #tpu.memory_space<vmem>>, vector<1x128xf32>
    %16 = vector.shape_cast %15 : vector<1x128xf32> to vector<1x1x128xf32>
    %17 = vector.broadcast %16 : vector<1x1x128xf32> to vector<16x16x128xf32>
    %18 = arith.mulf %14, %17 : vector<16x16x128xf32>
    %c0_13 = arith.constant 0 : index
    %c0_14 = arith.constant 0 : index
    %19 = vector.load %arg7[%c0_13, %c0_14] : memref<1x128xf32, #tpu.memory_space<vmem>>, vector<1x128xf32>
    %20 = vector.shape_cast %19 : vector<1x128xf32> to vector<1x1x128xf32>
    %21 = vector.broadcast %20 : vector<1x1x128xf32> to vector<16x16x128xf32>
    %22 = arith.addf %18, %21 : vector<16x16x128xf32>
    %cst_15 = arith.constant 0.000000e+00 : f32
    %23 = vector.broadcast %cst_15 : f32 to vector<16x16x128xf32>
    %24 = arith.maximumf %22, %23 : vector<16x16x128xf32>
    %25 = arith.truncf %24 : vector<16x16x128xf32> to vector<16x16x128xbf16>
    %c0_16 = arith.constant 0 : index
    %c0_17 = arith.constant 0 : index
    %c0_18 = arith.constant 0 : index
    %c0_19 = arith.constant 0 : index
    %26 = vector.load %arg4[%c0_16, %c0_17, %c0_18, %c0_19] : memref<1x1x16x128xbf16, #tpu.memory_space<vmem>>, vector<1x1x16x128xbf16>
    %27 = vector.shape_cast %26 : vector<1x1x16x128xbf16> to vector<16x128xbf16>
    %28 = arith.extf %27 : vector<16x128xbf16> to vector<16x128xf32>
    %c0_20 = arith.constant 0 : index
    %c0_21 = arith.constant 0 : index
    %29 = vector.load %arg6[%c0_20, %c0_21] : memref<1x128xf32, #tpu.memory_space<vmem>>, vector<1x128xf32>
    %30 = vector.broadcast %29 : vector<1x128xf32> to vector<16x128xf32>
    %31 = arith.mulf %28, %30 : vector<16x128xf32>
    %c0_22 = arith.constant 0 : index
    %c0_23 = arith.constant 0 : index
    %32 = vector.load %arg7[%c0_22, %c0_23] : memref<1x128xf32, #tpu.memory_space<vmem>>, vector<1x128xf32>
    %33 = vector.broadcast %32 : vector<1x128xf32> to vector<16x128xf32>
    %34 = arith.addf %31, %33 : vector<16x128xf32>
    %cst_24 = arith.constant 0.000000e+00 : f32
    %35 = vector.broadcast %cst_24 : f32 to vector<16x128xf32>
    %36 = arith.maximumf %34, %35 : vector<16x128xf32>
    %37 = arith.truncf %36 : vector<16x128xf32> to vector<16x128xbf16>
    %cst_25 = arith.constant 0.000000e+00 : bf16
    %38 = vector.broadcast %cst_25 : bf16 to vector<16x128xbf16>
    %c0_i32 = arith.constant 0 : i32
    %39 = arith.cmpi sgt, %arg1, %c0_i32 : i32
    %40 = arith.select %39, %11, %38 : vector<16x128xbf16>
    %c0_i32_26 = arith.constant 0 : i32
    %41 = arith.cmpi slt, %arg1, %c0_i32_26 : i32
    %42 = arith.select %41, %37, %38 : vector<16x128xbf16>
    %43 = vector.shape_cast %40 : vector<16x128xbf16> to vector<1x16x128xbf16>
    %44 = vector.shape_cast %42 : vector<16x128xbf16> to vector<1x16x128xbf16>
    %45 = tpu.concatenate %43, %25, %44 in 0 : vector<1x16x128xbf16>, vector<16x16x128xbf16>, vector<1x16x128xbf16> -> vector<18x16x128xbf16>
    %cst_27 = arith.constant 0.000000e+00 : bf16
    %46 = vector.broadcast %cst_27 : bf16 to vector<18x1x128xbf16>
    %47 = tpu.concatenate %46, %45, %46 in 1 : vector<18x1x128xbf16>, vector<18x16x128xbf16>, vector<18x1x128xbf16> -> vector<18x18x128xbf16>
    %cst_28 = arith.constant 0.000000e+00 : f32
    %48 = vector.broadcast %cst_28 : f32 to vector<256x128xf32>
    %49 = vector.extract_strided_slice %47 {offsets = [0, 0, 0], sizes = [16, 18, 128], strides = [1, 1, 1]} : vector<18x18x128xbf16> to vector<16x18x128xbf16>
    %50 = vector.extract_strided_slice %49 {offsets = [0, 0, 0], sizes = [16, 16, 128], strides = [1, 1, 1]} : vector<16x18x128xbf16> to vector<16x16x128xbf16>
    %51 = vector.extract_strided_slice %49 {offsets = [0, 1, 0], sizes = [16, 16, 128], strides = [1, 1, 1]} : vector<16x18x128xbf16> to vector<16x16x128xbf16>
    %52 = vector.extract_strided_slice %49 {offsets = [0, 2, 0], sizes = [16, 16, 128], strides = [1, 1, 1]} : vector<16x18x128xbf16> to vector<16x16x128xbf16>
    %53 = tpu.concatenate %50, %51, %52 in 2 : vector<16x16x128xbf16>, vector<16x16x128xbf16>, vector<16x16x128xbf16> -> vector<16x16x384xbf16>
    %54 = vector.shape_cast %53 : vector<16x16x384xbf16> to vector<256x384xbf16>
    %c0_29 = arith.constant 0 : index
    %c0_30 = arith.constant 0 : index
    %c0_31 = arith.constant 0 : index
    %55 = vector.load %arg5[%c0_29, %c0_30, %c0_31] : memref<3x384x128xbf16, #tpu.memory_space<vmem>>, vector<1x384x128xbf16>
    %56 = vector.shape_cast %55 : vector<1x384x128xbf16> to vector<384x128xbf16>
    %cst_32 = arith.constant dense<0.000000e+00> : vector<256x128xf32>
    %57 = tpu.matmul %54, %56, %cst_32 {dimension_numbers = #tpu.dot_dimension_numbers<[1], [0], [0], [1], [0, 0, 1, 1], [], []>} : vector<256x384xbf16>, vector<384x128xbf16>, vector<256x128xf32> -> vector<256x128xf32>
    %58 = arith.addf %48, %57 : vector<256x128xf32>
    %59 = vector.extract_strided_slice %47 {offsets = [1, 0, 0], sizes = [16, 18, 128], strides = [1, 1, 1]} : vector<18x18x128xbf16> to vector<16x18x128xbf16>
    %60 = vector.extract_strided_slice %59 {offsets = [0, 0, 0], sizes = [16, 16, 128], strides = [1, 1, 1]} : vector<16x18x128xbf16> to vector<16x16x128xbf16>
    %61 = vector.extract_strided_slice %59 {offsets = [0, 1, 0], sizes = [16, 16, 128], strides = [1, 1, 1]} : vector<16x18x128xbf16> to vector<16x16x128xbf16>
    %62 = vector.extract_strided_slice %59 {offsets = [0, 2, 0], sizes = [16, 16, 128], strides = [1, 1, 1]} : vector<16x18x128xbf16> to vector<16x16x128xbf16>
    %63 = tpu.concatenate %60, %61, %62 in 2 : vector<16x16x128xbf16>, vector<16x16x128xbf16>, vector<16x16x128xbf16> -> vector<16x16x384xbf16>
    %64 = vector.shape_cast %63 : vector<16x16x384xbf16> to vector<256x384xbf16>
    %c1 = arith.constant 1 : index
    %c0_33 = arith.constant 0 : index
    %c0_34 = arith.constant 0 : index
    %65 = vector.load %arg5[%c1, %c0_33, %c0_34] : memref<3x384x128xbf16, #tpu.memory_space<vmem>>, vector<1x384x128xbf16>
    %66 = vector.shape_cast %65 : vector<1x384x128xbf16> to vector<384x128xbf16>
    %cst_35 = arith.constant dense<0.000000e+00> : vector<256x128xf32>
    %67 = tpu.matmul %64, %66, %cst_35 {dimension_numbers = #tpu.dot_dimension_numbers<[1], [0], [0], [1], [0, 0, 1, 1], [], []>} : vector<256x384xbf16>, vector<384x128xbf16>, vector<256x128xf32> -> vector<256x128xf32>
    %68 = arith.addf %58, %67 : vector<256x128xf32>
    %69 = vector.extract_strided_slice %47 {offsets = [2, 0, 0], sizes = [16, 18, 128], strides = [1, 1, 1]} : vector<18x18x128xbf16> to vector<16x18x128xbf16>
    %70 = vector.extract_strided_slice %69 {offsets = [0, 0, 0], sizes = [16, 16, 128], strides = [1, 1, 1]} : vector<16x18x128xbf16> to vector<16x16x128xbf16>
    %71 = vector.extract_strided_slice %69 {offsets = [0, 1, 0], sizes = [16, 16, 128], strides = [1, 1, 1]} : vector<16x18x128xbf16> to vector<16x16x128xbf16>
    %72 = vector.extract_strided_slice %69 {offsets = [0, 2, 0], sizes = [16, 16, 128], strides = [1, 1, 1]} : vector<16x18x128xbf16> to vector<16x16x128xbf16>
    %73 = tpu.concatenate %70, %71, %72 in 2 : vector<16x16x128xbf16>, vector<16x16x128xbf16>, vector<16x16x128xbf16> -> vector<16x16x384xbf16>
    %74 = vector.shape_cast %73 : vector<16x16x384xbf16> to vector<256x384xbf16>
    %c2 = arith.constant 2 : index
    %c0_36 = arith.constant 0 : index
    %c0_37 = arith.constant 0 : index
    %75 = vector.load %arg5[%c2, %c0_36, %c0_37] : memref<3x384x128xbf16, #tpu.memory_space<vmem>>, vector<1x384x128xbf16>
    %76 = vector.shape_cast %75 : vector<1x384x128xbf16> to vector<384x128xbf16>
    %cst_38 = arith.constant dense<0.000000e+00> : vector<256x128xf32>
    %77 = tpu.matmul %74, %76, %cst_38 {dimension_numbers = #tpu.dot_dimension_numbers<[1], [0], [0], [1], [0, 0, 1, 1], [], []>} : vector<256x384xbf16>, vector<384x128xbf16>, vector<256x128xf32> -> vector<256x128xf32>
    %78 = arith.addf %68, %77 : vector<256x128xf32>
    %79 = vector.shape_cast %78 : vector<256x128xf32> to vector<16x16x128xf32>
    %80 = arith.truncf %79 : vector<16x16x128xf32> to vector<16x16x128xbf16>
    %c0_39 = arith.constant 0 : index
    %c0_40 = arith.constant 0 : index
    %c0_41 = arith.constant 0 : index
    %c0_42 = arith.constant 0 : index
    %81 = vector.load %arg8[%c0_39, %c0_40, %c0_41, %c0_42] : memref<1x16x16x128xbf16, #tpu.memory_space<vmem>>, vector<1x16x16x128xbf16>
    %82 = vector.shape_cast %81 : vector<1x16x16x128xbf16> to vector<16x16x128xbf16>
    %83 = vector.shape_cast %80 : vector<16x16x128xbf16> to vector<1x16x16x128xbf16>
    tpu.vector_store %arg8[%c0_39, %c0_40, %c0_41, %c0_42], %83 {strides = array<i32>} : memref<1x16x16x128xbf16, #tpu.memory_space<vmem>>, vector<1x16x16x128xbf16>,
    %cst_43 = arith.constant dense<0.000000e+00> : vector<128xf32>
    %84 = vector.multi_reduction <add>, %78, %cst_43 [0] : vector<256x128xf32> to vector<128xf32>
    %85 = vector.shape_cast %84 : vector<128xf32> to vector<1x128xf32>
    %86 = arith.mulf %78, %78 : vector<256x128xf32>
    %cst_44 = arith.constant dense<0.000000e+00> : vector<128xf32>
    %87 = vector.multi_reduction <add>, %86, %cst_44 [0] : vector<256x128xf32> to vector<128xf32>
    %88 = vector.shape_cast %87 : vector<128xf32> to vector<1x128xf32>
    %89 = tpu.concatenate %85, %88 in 0 : vector<1x128xf32>, vector<1x128xf32> -> vector<2x128xf32>
    %c0_45 = arith.constant 0 : index
    %c0_46 = arith.constant 0 : index
    %c0_47 = arith.constant 0 : index
    %c0_48 = arith.constant 0 : index
    %90 = vector.load %arg9[%c0_45, %c0_46, %c0_47, %c0_48] : memref<1x1x2x128xf32, #tpu.memory_space<vmem>>, vector<1x1x2x128xf32>
    %91 = vector.shape_cast %90 : vector<1x1x2x128xf32> to vector<2x128xf32>
    %92 = vector.shape_cast %89 : vector<2x128xf32> to vector<1x1x2x128xf32>
    tpu.vector_store %arg9[%c0_45, %c0_46, %c0_47, %c0_48], %92 {strides = array<i32>} : memref<1x1x2x128xf32, #tpu.memory_space<vmem>>, vector<1x1x2x128xf32>,
    return
  }
  func.func @transform_0(%arg0: i32, %arg1: i32) -> (i32, i32, i32, i32) {
    %c16_i32 = arith.constant 16 : i32
    %0 = arith.muli %arg1, %c16_i32 : i32
    %c1_i32 = arith.constant 1 : i32
    %1 = arith.subi %0, %c1_i32 : i32
    %c0_i32 = arith.constant 0 : i32
    %2 = arith.maxsi %1, %c0_i32 : i32
    %c0_i32_0 = arith.constant 0 : i32
    %c0_i32_1 = arith.constant 0 : i32
    %c0_i32_2 = arith.constant 0 : i32
    return %arg0, %2, %c0_i32_0, %c0_i32_1 : i32, i32, i32, i32
  }
  func.func @transform_1(%arg0: i32, %arg1: i32) -> (i32, i32, i32, i32) {
    %c0_i32 = arith.constant 0 : i32
    %c0_i32_0 = arith.constant 0 : i32
    %c0_i32_1 = arith.constant 0 : i32
    return %arg0, %arg1, %c0_i32, %c0_i32_0 : i32, i32, i32, i32
  }
  func.func @transform_2(%arg0: i32, %arg1: i32) -> (i32, i32, i32, i32) {
    %c1_i32 = arith.constant 1 : i32
    %0 = arith.addi %arg1, %c1_i32 : i32
    %c16_i32 = arith.constant 16 : i32
    %1 = arith.muli %0, %c16_i32 : i32
    %c15_i32 = arith.constant 15 : i32
    %2 = arith.minsi %1, %c15_i32 : i32
    %c0_i32 = arith.constant 0 : i32
    %c0_i32_0 = arith.constant 0 : i32
    %c0_i32_1 = arith.constant 0 : i32
    return %arg0, %2, %c0_i32, %c0_i32_0 : i32, i32, i32, i32
  }
  func.func @transform_3(%arg0: i32, %arg1: i32) -> (i32, i32, i32) {
    %c0_i32 = arith.constant 0 : i32
    %c0_i32_0 = arith.constant 0 : i32
    %c0_i32_1 = arith.constant 0 : i32
    %c0_i32_2 = arith.constant 0 : i32
    return %c0_i32, %c0_i32_0, %c0_i32_1 : i32, i32, i32
  }
  func.func @transform_4(%arg0: i32, %arg1: i32) -> (i32, i32) {
    %c0_i32 = arith.constant 0 : i32
    %c0_i32_0 = arith.constant 0 : i32
    %c0_i32_1 = arith.constant 0 : i32
    return %c0_i32, %c0_i32_0 : i32, i32
  }
  func.func @transform_5(%arg0: i32, %arg1: i32) -> (i32, i32) {
    %c0_i32 = arith.constant 0 : i32
    %c0_i32_0 = arith.constant 0 : i32
    %c0_i32_1 = arith.constant 0 : i32
    return %c0_i32, %c0_i32_0 : i32, i32
  }
  func.func @transform_6(%arg0: i32, %arg1: i32) -> (i32, i32, i32, i32) {
    %c0_i32 = arith.constant 0 : i32
    %c0_i32_0 = arith.constant 0 : i32
    %c0_i32_1 = arith.constant 0 : i32
    return %arg0, %arg1, %c0_i32, %c0_i32_0 : i32, i32, i32, i32
  }
  func.func @transform_7(%arg0: i32, %arg1: i32) -> (i32, i32, i32, i32) {
    %c0_i32 = arith.constant 0 : i32
    %c0_i32_0 = arith.constant 0 : i32
    %c0_i32_1 = arith.constant 0 : i32
    return %arg0, %arg1, %c0_i32, %c0_i32_0 : i32, i32, i32, i32
  }
}

module attributes {stable_mosaic.version = 11 : i64} {
  func.func @_bn_relu_kernel(%arg0: i32, %arg1: memref<256x128xbf16, #tpu.memory_space<vmem>>, %arg2: memref<1x128xf32, #tpu.memory_space<vmem>>, %arg3: memref<1x128xf32, #tpu.memory_space<vmem>>, %arg4: memref<256x128xf32, #tpu.memory_space<vmem>>) attributes {dimension_semantics = [#tpu.dimension_semantics<parallel>], iteration_bounds = array<i64: 2>, scalar_prefetch = 0 : i64, scratch_operands = 0 : i64, tpu.core_type = #tpu.core_type<tc>, window_params = [{transform_indices = @transform_0, window_bounds = array<i64: 256, 128>}, {pipeline_mode = #tpu.pipeline_mode<synchronous>, transform_indices = @transform_1, window_bounds = array<i64: 1, 128>}, {pipeline_mode = #tpu.pipeline_mode<synchronous>, transform_indices = @transform_2, window_bounds = array<i64: 1, 128>}, {transform_indices = @transform_3, window_bounds = array<i64: 256, 128>}]} {
    %c0 = arith.constant 0 : index
    %c0_0 = arith.constant 0 : index
    %0 = vector.load %arg1[%c0, %c0_0] : memref<256x128xbf16, #tpu.memory_space<vmem>>, vector<256x128xbf16>
    %1 = arith.extf %0 : vector<256x128xbf16> to vector<256x128xf32>
    %c0_1 = arith.constant 0 : index
    %c0_2 = arith.constant 0 : index
    %2 = vector.load %arg2[%c0_1, %c0_2] : memref<1x128xf32, #tpu.memory_space<vmem>>, vector<1x128xf32>
    %3 = vector.broadcast %2 : vector<1x128xf32> to vector<256x128xf32>
    %4 = arith.mulf %1, %3 : vector<256x128xf32>
    %c0_3 = arith.constant 0 : index
    %c0_4 = arith.constant 0 : index
    %5 = vector.load %arg3[%c0_3, %c0_4] : memref<1x128xf32, #tpu.memory_space<vmem>>, vector<1x128xf32>
    %6 = vector.broadcast %5 : vector<1x128xf32> to vector<256x128xf32>
    %7 = arith.addf %4, %6 : vector<256x128xf32>
    %cst = arith.constant 0.000000e+00 : f32
    %8 = vector.broadcast %cst : f32 to vector<256x128xf32>
    %9 = arith.maximumf %7, %8 : vector<256x128xf32>
    %c0_5 = arith.constant 0 : index
    %c0_6 = arith.constant 0 : index
    %10 = vector.load %arg4[%c0_5, %c0_6] : memref<256x128xf32, #tpu.memory_space<vmem>>, vector<256x128xf32>
    tpu.vector_store %arg4[%c0_5, %c0_6], %9 {strides = array<i32>} : memref<256x128xf32, #tpu.memory_space<vmem>>, vector<256x128xf32>,
    return
  }
  func.func @transform_0(%arg0: i32) -> (i32, i32) {
    %c0_i32 = arith.constant 0 : i32
    %c0_i32_0 = arith.constant 0 : i32
    return %arg0, %c0_i32 : i32, i32
  }
  func.func @transform_1(%arg0: i32) -> (i32, i32) {
    %c0_i32 = arith.constant 0 : i32
    %c0_i32_0 = arith.constant 0 : i32
    %c0_i32_1 = arith.constant 0 : i32
    return %c0_i32, %c0_i32_0 : i32, i32
  }
  func.func @transform_2(%arg0: i32) -> (i32, i32) {
    %c0_i32 = arith.constant 0 : i32
    %c0_i32_0 = arith.constant 0 : i32
    %c0_i32_1 = arith.constant 0 : i32
    return %c0_i32, %c0_i32_0 : i32, i32
  }
  func.func @transform_3(%arg0: i32) -> (i32, i32) {
    %c0_i32 = arith.constant 0 : i32
    %c0_i32_0 = arith.constant 0 : i32
    return %arg0, %c0_i32 : i32, i32
  }
}

</mosaic_0001>

<llo_original>
// kernel: down_forward.3
$region0: #{down_forward.3}
  #allocation0 [shape = 'u32[]', space=smem, size = 0x4, offset = 0x4, fixed_abs, tag = 'smem constant byte address 0x4 - core index']
  #allocation1 [shape = 'u32[144,128]{1,0:T(1,128)}', space=vmem, size = 0x12000, scoped, tag = 'internal scratch']
  %s0 = inlined_call_operand.vmem [shape: bf16[2,16,16,64], index: 0, kind: input, shape index: {}, may-alias: {0,1,2}]
  %s1 = inlined_call_operand.vmem [shape: bf16[2,16,16,64], index: 1, kind: input, shape index: {}, may-alias: {0,1,2}]
  %s2 = inlined_call_operand.vmem [shape: bf16[2,16,16,64], index: 2, kind: input, shape index: {}, may-alias: {0,1,2}]
  %s3 = inlined_call_operand.vmem [shape: bf16[3,192,128], index: 3, kind: input, shape index: {}]
  %s4 = inlined_call_operand.vmem [shape: f32[1,64], index: 4, kind: input, shape index: {}]
  %s5 = inlined_call_operand.vmem [shape: f32[1,64], index: 5, kind: input, shape index: {}]
  %s6 = inlined_call_operand.vmem [shape: bf16[2,16,16,128], index: 6, kind: output, shape index: {0}]
  %s7 = inlined_call_operand.vmem [shape: f32[2,1,2,128], index: 7, kind: output, shape index: {1}]
  %8 = xla_tuple %s6, %s7
  %s9 = sld [smem:[#allocation0]]
  $region65: #{down_forward.3} parent=0
    _
  %s11 = ssub.s32 1, %s9
  %s12 = scalar_select 0, %s11, %s9
  loop: start=0, step=1, limit=4
  $region2: #{down_forward.3} parent=0 // loop_pre_header
    _
  $region3: #{down_forward.3} parent=0 // loop_header
    %s14 = sphi 0, %s18
    %p15 = scmp.ge.s32.totalorder %s14, 4
    %s21 = sphi 0, %s33
    %s22 = sphi 0, %s29
    %s23 = sphi 0, %s21
    %s24 = sphi 0, %s22
    %s25 = sphi 0, %s23
    %s26 = sphi 0, %s24
    %s46 = sphi 0, %s48
    %s49 = sphi 0, %s46
    %s50 = sphi 0, %s49
    %s66 = sphi 0, %s50
    %s74 = sphi 0, %s76
    %s77 = sphi 0, %s74
    %s78 = sphi 0, %s77
    %s94 = sphi 0, %s78
    %s110 = sphi 0, %s112
    %s113 = sphi 0, %s110
    %s114 = sphi 0, %s113
    %s130 = sphi 0, %s114
    %s134 = sphi 0, %s134
    %s136 = sphi 0, %s134
    %s137 = sphi 0, %s136
    %s151 = sphi 0, %s137
    %s155 = sphi 0, %s155
    %s157 = sphi 0, %s155
    %s158 = sphi 0, %s157
    %s172 = sphi 0, %s158
    %s176 = sphi 0, %s176
    %s178 = sphi 0, %s176
    %s179 = sphi 0, %s178
    %s193 = sphi 0, %s179
    %s201 = sphi 0, %s203
    %s204 = sphi 0, %s201
    %s205 = sphi 0, %s204
    %s221 = sphi 0, %s205
    %s229 = sphi 0, %s231
    %s232 = sphi 0, %s229
    %s233 = sphi 0, %s232
    %s249 = sphi 0, %s233
  $region4: #{down_forward.3} parent=0 // loop_header_branch
    %17 = sbr.rel (%p15) target = $region8
  $region5: #{down_forward.3} parent=0 // loop_body
    %s19 = ssub.s32 %s14, 1
    %s20 = ssub.s32 %s14, 2
    %s27 = sadd.s32 1, %s22
    %p28 = scmp.ge.s32.totalorder %s27, 1
    %s29 = scalar_select %p28, 0, %s27
    %s30 = sadd.s32 1, %s21
    %s31 = scalar_select %p28, %s30, %s21
    %p32 = scmp.ge.s32.totalorder %s31, 2
    %s33 = scalar_select %p32, 0, %s31
    %s34 = smul.u32 %s22, 16
    %s35 = ssub.s32 %s34, 1
    %p36 = scmp.gt.s32.totalorder %s35, 0
    %s37 = scalar_select %p36, %s35, 0
    %s38 = smul.u32 %s29, 16
    %s39 = ssub.s32 %s38, 1
    %p40 = scmp.gt.s32.totalorder %s39, 0
    %s41 = scalar_select %p40, %s39, 0
    %s42 = ssub.s32 %s21, %s33
    %s43 = ssub.s32 %s37, %s41
    %s44 = sor.u32 %s42, %s43
    %p45 = scmp.eq.s32.totalorder %s44, 0
    %s47 = sadd.s32 %s46, 1
    %s48 = scalar_select %p45, %s46, %s47
    %p51 = pneg %p45
    %p52 = scmp.eq.s32.totalorder %s14, 1
    %p53 = por %p51, %p52
    %p54 = scmp.ne.s32.totalorder %s46, %s49
    %p55 = scmp.eq.s32.totalorder %s14, 0
    %p56 = por %p54, %p55
    %p57 = scmp.ne.s32.totalorder %s46, %s49
    %p58 = scmp.eq.s32.totalorder %s19, 1
    %p59 = por %p57, %p58
    %p60 = scmp.ne.s32.totalorder %s49, %s50
    %p61 = scmp.eq.s32.totalorder %s19, 0
    %p62 = por %p60, %p61
    %p63 = scmp.ne.s32.totalorder %s49, %s50
    %p64 = scmp.eq.s32.totalorder %s20, 1
    %p65 = por %p63, %p64
    %p67 = scmp.ne.s32.totalorder %s50, %s66
    %p68 = scmp.eq.s32.totalorder %s20, 0
    %p69 = por %p67, %p68
    %s70 = ssub.s32 %s21, %s33
    %s71 = ssub.s32 %s22, %s29
    %s72 = sor.u32 %s70, %s71
    %p73 = scmp.eq.s32.totalorder %s72, 0
    %s75 = sadd.s32 %s74, 1
    %s76 = scalar_select %p73, %s74, %s75
    %p79 = pneg %p73
    %p80 = scmp.eq.s32.totalorder %s14, 1
    %p81 = por %p79, %p80
    %p82 = scmp.ne.s32.totalorder %s74, %s77
    %p83 = scmp.eq.s32.totalorder %s14, 0
    %p84 = por %p82, %p83
    %p85 = scmp.ne.s32.totalorder %s74, %s77
    %p86 = scmp.eq.s32.totalorder %s19, 1
    %p87 = por %p85, %p86
    %p88 = scmp.ne.s32.totalorder %s77, %s78
    %p89 = scmp.eq.s32.totalorder %s19, 0
    %p90 = por %p88, %p89
    %p91 = scmp.ne.s32.totalorder %s77, %s78
    %p92 = scmp.eq.s32.totalorder %s20, 1
    %p93 = por %p91, %p92
    %p95 = scmp.ne.s32.totalorder %s78, %s94
    %p96 = scmp.eq.s32.totalorder %s20, 0
    %p97 = por %p95, %p96
    %s98 = sadd.s32 %s22, 1
    %s99 = smul.u32 %s98, 16
    %p100 = scmp.lt.s32.totalorder %s99, 15
    %s101 = scalar_select %p100, %s99, 15
    %s102 = sadd.s32 %s29, 1
    %s103 = smul.u32 %s102, 16
    %p104 = scmp.lt.s32.totalorder %s103, 15
    %s105 = scalar_select %p104, %s103, 15
    %s106 = ssub.s32 %s21, %s33
    %s107 = ssub.s32 %s101, %s105
    %s108 = sor.u32 %s106, %s107
    %p109 = scmp.eq.s32.totalorder %s108, 0
    %s111 = sadd.s32 %s110, 1
    %s112 = scalar_select %p109, %s110, %s111
    %p115 = pneg %p109
    %p116 = scmp.eq.s32.totalorder %s14, 1
    %p117 = por %p115, %p116
    %p118 = scmp.ne.s32.totalorder %s110, %s113
    %p119 = scmp.eq.s32.totalorder %s14, 0
    %p120 = por %p118, %p119
    %p121 = scmp.ne.s32.totalorder %s110, %s113
    %p122 = scmp.eq.s32.totalorder %s19, 1
    %p123 = por %p121, %p122
    %p124 = scmp.ne.s32.totalorder %s113, %s114
    %p125 = scmp.eq.s32.totalorder %s19, 0
    %p126 = por %p124, %p125
    %p127 = scmp.ne.s32.totalorder %s113, %s114
    %p128 = scmp.eq.s32.totalorder %s20, 1
    %p129 = por %p127, %p128
    %p131 = scmp.ne.s32.totalorder %s114, %s130
    %p132 = scmp.eq.s32.totalorder %s20, 0
    %p133 = por %p131, %p132
    %s135 = sadd.s32 %s134, 1
    %p138 = scmp.eq.s32.totalorder %s14, 1
    %p139 = scmp.ne.s32.totalorder %s134, %s136
    %p140 = scmp.eq.s32.totalorder %s14, 0
    %p141 = por %p139, %p140
    %p142 = scmp.ne.s32.totalorder %s134, %s136
    %p143 = scmp.eq.s32.totalorder %s19, 1
    %p144 = por %p142, %p143
    %p145 = scmp.ne.s32.totalorder %s136, %s137
    %p146 = scmp.eq.s32.totalorder %s19, 0
    %p147 = por %p145, %p146
    %p148 = scmp.ne.s32.totalorder %s136, %s137
    %p149 = scmp.eq.s32.totalorder %s20, 1
    %p150 = por %p148, %p149
    %p152 = scmp.ne.s32.totalorder %s137, %s151
    %p153 = scmp.eq.s32.totalorder %s20, 0
    %p154 = por %p152, %p153
    %s156 = sadd.s32 %s155, 1
    %p159 = scmp.eq.s32.totalorder %s14, 1
    %p160 = scmp.ne.s32.totalorder %s155, %s157
    %p161 = scmp.eq.s32.totalorder %s14, 0
    %p162 = por %p160, %p161
    %p163 = scmp.ne.s32.totalorder %s155, %s157
    %p164 = scmp.eq.s32.totalorder %s19, 1
    %p165 = por %p163, %p164
    %p166 = scmp.ne.s32.totalorder %s157, %s158
    %p167 = scmp.eq.s32.totalorder %s19, 0
    %p168 = por %p166, %p167
    %p169 = scmp.ne.s32.totalorder %s157, %s158
    %p170 = scmp.eq.s32.totalorder %s20, 1
    %p171 = por %p169, %p170
    %p173 = scmp.ne.s32.totalorder %s158, %s172
    %p174 = scmp.eq.s32.totalorder %s20, 0
    %p175 = por %p173, %p174
    %s177 = sadd.s32 %s176, 1
    %p180 = scmp.eq.s32.totalorder %s14, 1
    %p181 = scmp.ne.s32.totalorder %s176, %s178
    %p182 = scmp.eq.s32.totalorder %s14, 0
    %p183 = por %p181, %p182
    %p184 = scmp.ne.s32.totalorder %s176, %s178
    %p185 = scmp.eq.s32.totalorder %s19, 1
    %p186 = por %p184, %p185
    %p187 = scmp.ne.s32.totalorder %s178, %s179
    %p188 = scmp.eq.s32.totalorder %s19, 0
    %p189 = por %p187, %p188
    %p190 = scmp.ne.s32.totalorder %s178, %s179
    %p191 = scmp.eq.s32.totalorder %s20, 1
    %p192 = por %p190, %p191
    %p194 = scmp.ne.s32.totalorder %s179, %s193
    %p195 = scmp.eq.s32.totalorder %s20, 0
    %p196 = por %p194, %p195
    %s197 = ssub.s32 %s21, %s33
    %s198 = ssub.s32 %s22, %s29
    %s199 = sor.u32 %s197, %s198
    %p200 = scmp.eq.s32.totalorder %s199, 0
    %s202 = sadd.s32 %s201, 1
    %s203 = scalar_select %p200, %s201, %s202
    %p206 = pneg %p200
    %p207 = scmp.eq.s32.totalorder %s14, 1
    %p208 = por %p206, %p207
    %p209 = scmp.ne.s32.totalorder %s201, %s204
    %p210 = scmp.eq.s32.totalorder %s14, 0
    %p211 = por %p209, %p210
    %p212 = scmp.ne.s32.totalorder %s201, %s204
    %p213 = scmp.eq.s32.totalorder %s19, 1
    %p214 = por %p212, %p213
    %p215 = scmp.ne.s32.totalorder %s204, %s205
    %p216 = scmp.eq.s32.totalorder %s19, 0
    %p217 = por %p215, %p216
    %p218 = scmp.ne.s32.totalorder %s204, %s205
    %p219 = scmp.eq.s32.totalorder %s20, 1
    %p220 = por %p218, %p219
    %p222 = scmp.ne.s32.totalorder %s205, %s221
    %p223 = scmp.eq.s32.totalorder %s20, 0
    %p224 = por %p222, %p223
    %s225 = ssub.s32 %s21, %s33
    %s226 = ssub.s32 %s22, %s29
    %s227 = sor.u32 %s225, %s226
    %p228 = scmp.eq.s32.totalorder %s227, 0
    %s230 = sadd.s32 %s229, 1
    %s231 = scalar_select %p228, %s229, %s230
    %p234 = pneg %p228
    %p235 = scmp.eq.s32.totalorder %s14, 1
    %p236 = por %p234, %p235
    %p237 = scmp.ne.s32.totalorder %s229, %s232
    %p238 = scmp.eq.s32.totalorder %s14, 0
    %p239 = por %p237, %p238
    %p240 = scmp.ne.s32.totalorder %s229, %s232
    %p241 = scmp.eq.s32.totalorder %s19, 1
    %p242 = por %p240, %p241
    %p243 = scmp.ne.s32.totalorder %s232, %s233
    %p244 = scmp.eq.s32.totalorder %s19, 0
    %p245 = por %p243, %p244
    %p246 = scmp.ne.s32.totalorder %s232, %s233
    %p247 = scmp.eq.s32.totalorder %s20, 1
    %p248 = por %p246, %p247
    %p250 = scmp.ne.s32.totalorder %s233, %s249
    %p251 = scmp.eq.s32.totalorder %s20, 0
    %p252 = por %p250, %p251
    %p253 = scmp.le.s32.totalorder 1, %s14
    %p254 = scmp.lt.s32.totalorder %s14, 3
    %p255 = pnand %p253, %p254
    %p256 = pneg %p255
    // Predicated region
    $region9: #{down_forward.3} parent=5 // pred_check
      _
    $region10: #{down_forward.3} parent=5 // pred_check_branch
      %258 = sbr.rel (%p255) target = $region12
    $region11: #{down_forward.3} parent=5 // pred_region
      %s259 = ssub.s32 %s14, 1
      // Predicated region
      $region13: #{down_forward.3} parent=11 // pred_check
        %p260 = pneg %p147
      $region14: #{down_forward.3} parent=11 // pred_check_branch
        %262 = sbr.rel (%p260) target = $region16
      $region15: #{down_forward.3} parent=11 // pred_region
        _
      $region16: #{down_forward.3} parent=11 // pred_fallthru
        _
      // Predicated region
      $region17: #{down_forward.3} parent=11 // pred_check
        %p263 = pneg %p168
      $region18: #{down_forward.3} parent=11 // pred_check_branch
        %265 = sbr.rel (%p263) target = $region20
      $region19: #{down_forward.3} parent=11 // pred_region
        _
      $region20: #{down_forward.3} parent=11 // pred_fallthru
        _
      // Predicated region
      $region21: #{down_forward.3} parent=11 // pred_check
        %p266 = pneg %p189
      $region22: #{down_forward.3} parent=11 // pred_check_branch
        %268 = sbr.rel (%p266) target = $region24
      $region23: #{down_forward.3} parent=11 // pred_region
        _
      $region24: #{down_forward.3} parent=11 // pred_fallthru
        _
    $region12: #{down_forward.3} parent=5 // pred_fallthru
      _
    %p269 = scmp.lt.s32.totalorder %s14, 2
    // Predicated region
    $region25: #{down_forward.3} parent=5 // pred_check
      %p270 = pneg %p269
    $region26: #{down_forward.3} parent=5 // pred_check_branch
      %272 = sbr.rel (%p270) target = $region28
    $region27: #{down_forward.3} parent=5 // pred_region
      // Predicated region
      $region29: #{down_forward.3} parent=27 // pred_check
        %p273 = pneg %p56
      $region30: #{down_forward.3} parent=27 // pred_check_branch
        %275 = sbr.rel (%p273) target = $region32
      $region31: #{down_forward.3} parent=27 // pred_region
        %s276 = smul.u32 %s22, 16
        %s277 = ssub.s32 %s276, 1
        %p278 = scmp.gt.s32.totalorder %s277, 0
        %s279 = scalar_select %p278, %s277, 0
        %p280 = scmp.lt.s32.totalorder %s21, 1
        %s281 = scalar_select %p280, %s21, 1
        %p282 = scmp.lt.s32.totalorder %s279, 15
        %s283 = scalar_select %p282, %s279, 15
        %s284 = smul.addr %s283, 2
        %s285 = smul.addr %s281, 32
        %s286 = sadd.s32 %s284, %s285
        %s287 = smul.addr %s286, 4
        %s288 = scalar_lea.vmem %s0, %s287
        %s289 = smul.u32 %s22, 16
        %s290 = ssub.s32 %s289, 1
        %p291 = scmp.gt.s32.totalorder %s290, 0
        %s292 = scalar_select %p291, %s290, 0
      $region32: #{down_forward.3} parent=27 // pred_fallthru
        _
      // Predicated region
      $region33: #{down_forward.3} parent=27 // pred_check
        %p293 = pneg %p84
      $region34: #{down_forward.3} parent=27 // pred_check_branch
        %295 = sbr.rel (%p293) target = $region36
      $region35: #{down_forward.3} parent=27 // pred_region
        %s296 = smul.u32 16, %s22
        %p297 = scmp.lt.s32.totalorder %s21, 1
        %s298 = scalar_select %p297, %s21, 1
        %p299 = scmp.lt.s32.totalorder %s296, 15
        %s300 = scalar_select %p299, %s296, 15
        %s301 = smul.addr %s300, 2
        %s302 = smul.addr %s298, 32
        %s303 = sadd.s32 %s301, %s302
        %s304 = smul.addr %s303, 4
        %s305 = scalar_lea.vmem %s1, %s304
        %s306 = smul.u32 16, %s22
      $region36: #{down_forward.3} parent=27 // pred_fallthru
        _
      // Predicated region
      $region37: #{down_forward.3} parent=27 // pred_check
        %p307 = pneg %p120
      $region38: #{down_forward.3} parent=27 // pred_check_branch
        %309 = sbr.rel (%p307) target = $region40
      $region39: #{down_forward.3} parent=27 // pred_region
        %s310 = sadd.s32 %s22, 1
        %s311 = smul.u32 %s310, 16
        %p312 = scmp.lt.s32.totalorder %s311, 15
        %s313 = scalar_select %p312, %s311, 15
        %p314 = scmp.lt.s32.totalorder %s21, 1
        %s315 = scalar_select %p314, %s21, 1
        %p316 = scmp.lt.s32.totalorder %s313, 15
        %s317 = scalar_select %p316, %s313, 15
        %s318 = smul.addr %s317, 2
        %s319 = smul.addr %s315, 32
        %s320 = sadd.s32 %s318, %s319
        %s321 = smul.addr %s320, 4
        %s322 = scalar_lea.vmem %s2, %s321
        %s323 = sadd.s32 %s22, 1
        %s324 = smul.u32 %s323, 16
        %p325 = scmp.lt.s32.totalorder %s324, 15
        %s326 = scalar_select %p325, %s324, 15
      $region40: #{down_forward.3} parent=27 // pred_fallthru
        _
    $region28: #{down_forward.3} parent=5 // pred_fallthru
      _
    %p327 = scmp.le.s32.totalorder 1, %s14
    %p328 = scmp.lt.s32.totalorder %s14, 3
    %p329 = pnand %p327, %p328
    %p330 = pneg %p329
    // Predicated region
    $region41: #{down_forward.3} parent=5 // pred_check
      _
    $region42: #{down_forward.3} parent=5 // pred_check_branch
      %332 = sbr.rel (%p329) target = $region44
    $region43: #{down_forward.3} parent=5 // pred_region
      %s333 = ssub.s32 %s14, 1
      %s334 = smul.u32 %s24, 16
      %s335 = ssub.s32 %s334, 1
      %p336 = scmp.gt.s32.totalorder %s335, 0
      %s337 = scalar_select %p336, %s335, 0
      %p338 = scmp.lt.s32.totalorder %s23, 1
      %s339 = scalar_select %p338, %s23, 1
      %p340 = scmp.lt.s32.totalorder %s337, 15
      %s341 = scalar_select %p340, %s337, 15
      %s342 = smul.addr %s341, 2
      %s343 = smul.addr %s339, 32
      %s344 = sadd.s32 %s342, %s343
      %s345 = smul.addr %s344, 4
      %s346 = scalar_lea.vmem %s0, %s345
      %p347 = pneg %p62
      %p348 = pneg %p59
      %s349 = smul.u32 16, %s24
      %p350 = scmp.lt.s32.totalorder %s23, 1
      %s351 = scalar_select %p350, %s23, 1
      %p352 = scmp.lt.s32.totalorder %s349, 15
      %s353 = scalar_select %p352, %s349, 15
      %s354 = smul.addr %s353, 2
      %s355 = smul.addr %s351, 32
      %s356 = sadd.s32 %s354, %s355
      %s357 = smul.addr %s356, 4
      %s358 = scalar_lea.vmem %s1, %s357
      %p359 = pneg %p90
      %p360 = pneg %p87
      %s361 = sadd.s32 %s24, 1
      %s362 = smul.u32 %s361, 16
      %p363 = scmp.lt.s32.totalorder %s362, 15
      %s364 = scalar_select %p363, %s362, 15
      %p365 = scmp.lt.s32.totalorder %s23, 1
      %s366 = scalar_select %p365, %s23, 1
      %p367 = scmp.lt.s32.totalorder %s364, 15
      %s368 = scalar_select %p367, %s364, 15
      %s369 = smul.addr %s368, 2
      %s370 = smul.addr %s366, 32
      %s371 = sadd.s32 %s369, %s370
      %s372 = smul.addr %s371, 4
      %s373 = scalar_lea.vmem %s2, %s372
      %p374 = pneg %p126
      %p375 = pneg %p123
      %p376 = pneg %p147
      %p377 = pneg %p144
      %p378 = pneg %p168
      %p379 = pneg %p165
      %p380 = pneg %p189
      %p381 = pneg %p186
      %p382 = pneg %p217
      %p383 = pneg %p214
      %s384 = smul.u32 16, %s24
      %p385 = scmp.lt.s32.totalorder %s23, 1
      %s386 = scalar_select %p385, %s23, 1
      %p387 = scmp.lt.s32.totalorder %s384, 15
      %s388 = scalar_select %p387, %s384, 15
      %s389 = smul.addr %s388, 2
      %s390 = smul.addr %s386, 32
      %s391 = sadd.s32 %s389, %s390
      %s392 = smul.addr %s391, 4
      %s393 = scalar_lea.vmem %s6, %s392
      %p394 = pneg %p245
      %p395 = pneg %p242
      %p396 = scmp.lt.s32.totalorder %s23, 1
      %s397 = scalar_select %p396, %s23, 1
      %p398 = scmp.lt.s32.totalorder %s24, 0
      %s399 = scalar_select %p398, %s24, 0
      %s400 = sadd.s32 %s399, %s397
      %s401 = smul.addr %s400, 2
      %s402 = scalar_lea.vmem %s7, %s401
      %s403 = smul.u32 %s24, 16
      %s404 = ssub.s32 %s403, 1
      %p405 = scmp.gt.s32.totalorder %s404, 0
      %s406 = scalar_select %p405, %s404, 0
      %p407 = scmp.lt.s32.totalorder %s23, 1
      %s408 = scalar_select %p407, %s23, 1
      %p409 = scmp.lt.s32.totalorder %s406, 15
      %s410 = scalar_select %p409, %s406, 15
      %s411 = smul.addr %s410, 2
      %s412 = smul.addr %s408, 32
      %s413 = sadd.s32 %s411, %s412
      %s414 = smul.addr %s413, 4
      %s415 = scalar_lea.vmem %s0, %s414
      %s416 = smul.u32 %s24, 16
      %s417 = ssub.s32 %s416, 1
      %p418 = scmp.gt.s32.totalorder %s417, 0
      %s419 = scalar_select %p418, %s417, 0
      %s420 = smul.u32 16, %s24
      %p421 = scmp.lt.s32.totalorder %s23, 1
      %s422 = scalar_select %p421, %s23, 1
      %p423 = scmp.lt.s32.totalorder %s420, 15
      %s424 = scalar_select %p423, %s420, 15
      %s425 = smul.addr %s424, 2
      %s426 = smul.addr %s422, 32
      %s427 = sadd.s32 %s425, %s426
      %s428 = smul.addr %s427, 4
      %s429 = scalar_lea.vmem %s1, %s428
      %s430 = smul.u32 16, %s24
      %s431 = sadd.s32 %s24, 1
      %s432 = smul.u32 %s431, 16
      %p433 = scmp.lt.s32.totalorder %s432, 15
      %s434 = scalar_select %p433, %s432, 15
      %p435 = scmp.lt.s32.totalorder %s23, 1
      %s436 = scalar_select %p435, %s23, 1
      %p437 = scmp.lt.s32.totalorder %s434, 15
      %s438 = scalar_select %p437, %s434, 15
      %s439 = smul.addr %s438, 2
      %s440 = smul.addr %s436, 32
      %s441 = sadd.s32 %s439, %s440
      %s442 = smul.addr %s441, 4
      %s443 = scalar_lea.vmem %s2, %s442
      %s444 = sadd.s32 %s24, 1
      %s445 = smul.u32 %s444, 16
      %p446 = scmp.lt.s32.totalorder %s445, 15
      %s447 = scalar_select %p446, %s445, 15
      %s448 = smul.u32 16, %s24
      %p449 = scmp.lt.s32.totalorder %s23, 1
      %s450 = scalar_select %p449, %s23, 1
      %p451 = scmp.lt.s32.totalorder %s448, 15
      %s452 = scalar_select %p451, %s448, 15
      %s453 = smul.addr %s452, 2
      %s454 = smul.addr %s450, 32
      %s455 = sadd.s32 %s453, %s454
      %s456 = smul.addr %s455, 4
      %s457 = scalar_lea.vmem %s6, %s456
      %s458 = smul.u32 16, %s24
      %p459 = scmp.lt.s32.totalorder %s23, 1
      %s460 = scalar_select %p459, %s23, 1
      %p461 = scmp.lt.s32.totalorder %s24, 0
      %s462 = scalar_select %p461, %s24, 0
      %s463 = sadd.s32 %s462, %s460
      %s464 = smul.addr %s463, 2
      %s465 = scalar_lea.vmem %s7, %s464
      %v467 = vld [vmem:[%s415] sm:$0xf]
      %v468 = vld [vmem:[%s415 + $0x4] sm:$0xf]
      %v469 = vld [vmem:[%s429] sm:$0xf]
      %v470 = vld [vmem:[%s429 + $0x4] sm:$0xf]
      %v471 = vld [vmem:[%s429 + $0x8] sm:$0xf]
      %v472 = vld [vmem:[%s429 + $0xc] sm:$0xf]
      %v473 = vld [vmem:[%s429 + $0x10] sm:$0xf]
      %v474 = vld [vmem:[%s429 + $0x14] sm:$0xf]
      %v475 = vld [vmem:[%s429 + $0x18] sm:$0xf]
      %v476 = vld [vmem:[%s429 + $0x1c] sm:$0xf]
      %v477 = vld [vmem:[%s429 + $0x20] sm:$0xf]
      %v478 = vld [vmem:[%s429 + $0x24] sm:$0xf]
      %v479 = vld [vmem:[%s429 + $0x28] sm:$0xf]
      %v480 = vld [vmem:[%s429 + $0x2c] sm:$0xf]
      %v481 = vld [vmem:[%s429 + $0x30] sm:$0xf]
      %v482 = vld [vmem:[%s429 + $0x34] sm:$0xf]
      %v483 = vld [vmem:[%s429 + $0x38] sm:$0xf]
      %v484 = vld [vmem:[%s429 + $0x3c] sm:$0xf]
      %v485 = vld [vmem:[%s429 + $0x40] sm:$0xf]
      %v486 = vld [vmem:[%s429 + $0x44] sm:$0xf]
      %v487 = vld [vmem:[%s429 + $0x48] sm:$0xf]
      %v488 = vld [vmem:[%s429 + $0x4c] sm:$0xf]
      %v489 = vld [vmem:[%s429 + $0x50] sm:$0xf]
      %v490 = vld [vmem:[%s429 + $0x54] sm:$0xf]
      %v491 = vld [vmem:[%s429 + $0x58] sm:$0xf]
      %v492 = vld [vmem:[%s429 + $0x5c] sm:$0xf]
      %v493 = vld [vmem:[%s429 + $0x60] sm:$0xf]
      %v494 = vld [vmem:[%s429 + $0x64] sm:$0xf]
      %v495 = vld [vmem:[%s429 + $0x68] sm:$0xf]
      %v496 = vld [vmem:[%s429 + $0x6c] sm:$0xf]
      %v497 = vld [vmem:[%s429 + $0x70] sm:$0xf]
      %v498 = vld [vmem:[%s429 + $0x74] sm:$0xf]
      %v499 = vld [vmem:[%s429 + $0x78] sm:$0xf]
      %v500 = vld [vmem:[%s429 + $0x7c] sm:$0xf]
      %v501 = vld [vmem:[%s443] sm:$0xf]
      %v502 = vld [vmem:[%s443 + $0x4] sm:$0xf]
      %p503 = scmp.gt.s32.totalorder %s24, 0
      %s504 = scalar_select %p503, 1, 0
      %v505 = vstv %s504
      %vm506 = vcmp.eq.s32.totalorder %v505, 1
      %v507 = vsel %vm506, %v467, 0
      %v508 = vsel %vm506, %v468, 0
      %p509 = scmp.lt.s32.totalorder %s24, 0
      %s510 = scalar_select %p509, 1, 0
      %v511 = vstv %s510
      %vm512 = vcmp.eq.s32.totalorder %v511, 1
      %v513 = vsel %vm512, %v501, 0
      %v514 = vsel %vm512, %v502, 0
      %v551 = vunpack.c.l.b16 %v507
      %v552 = vunpack.c.l.b16 %v508
      %v553 = vunpack.c.l.b16 %v469
      %v554 = vunpack.c.l.b16 %v470
      %v555 = vunpack.c.l.b16 %v471
      %v556 = vunpack.c.l.b16 %v472
      %v557 = vunpack.c.l.b16 %v473
      %v558 = vunpack.c.l.b16 %v474
      %v559 = vunpack.c.l.b16 %v475
      %v560 = vunpack.c.l.b16 %v476
      %v561 = vunpack.c.l.b16 %v477
      %v562 = vunpack.c.l.b16 %v478
      %v563 = vunpack.c.l.b16 %v479
      %v564 = vunpack.c.l.b16 %v480
      %v565 = vunpack.c.l.b16 %v481
      %v566 = vunpack.c.l.b16 %v482
      %v567 = vunpack.c.l.b16 %v483
      %v568 = vunpack.c.l.b16 %v484
      %v569 = vunpack.c.l.b16 %v485
      %v570 = vunpack.c.l.b16 %v486
      %v571 = vunpack.c.l.b16 %v487
      %v572 = vunpack.c.l.b16 %v488
      %v573 = vunpack.c.l.b16 %v489
      %v574 = vunpack.c.l.b16 %v490
      %v575 = vunpack.c.l.b16 %v491
      %v576 = vunpack.c.l.b16 %v492
      %v577 = vunpack.c.l.b16 %v493
      %v578 = vunpack.c.l.b16 %v494
      %v579 = vunpack.c.l.b16 %v495
      %v580 = vunpack.c.l.b16 %v496
      %v581 = vunpack.c.l.b16 %v497
      %v582 = vunpack.c.l.b16 %v498
      %v583 = vunpack.c.l.b16 %v499
      %v584 = vunpack.c.l.b16 %v500
      %v585 = vunpack.c.l.b16 %v513
      %v586 = vunpack.c.l.b16 %v514
      %v587 = vpack.c.b16 %v552, %v551
      %v588 = vpack.c.b16 %v554, %v553
      %v589 = vpack.c.b16 %v556, %v555
      %v590 = vpack.c.b16 %v558, %v557
      %v591 = vpack.c.b16 %v560, %v559
      %v592 = vpack.c.b16 %v562, %v561
      %v593 = vpack.c.b16 %v564, %v563
      %v594 = vpack.c.b16 %v566, %v565
      %v595 = vpack.c.b16 %v568, %v567
      %v596 = vpack.c.b16 %v570, %v569
      %v597 = vpack.c.b16 %v572, %v571
      %v598 = vpack.c.b16 %v574, %v573
      %v599 = vpack.c.b16 %v576, %v575
      %v600 = vpack.c.b16 %v578, %v577
      %v601 = vpack.c.b16 %v580, %v579
      %v602 = vpack.c.b16 %v582, %v581
      %v603 = vpack.c.b16 %v584, %v583
      %v604 = vpack.c.b16 %v586, %v585
      %v606 = vshrl.u32 %v587, 16
      %v608 = vrot.slane %v606, 7
      %v609 = vshll.u32 %v587, 16
      %v611 = vor.u32 %v608, %v609
      %v613 = vshrl.u32 %v588, 16
      %v615 = vrot.slane %v613, 7
      %v616 = vshll.u32 %v588, 16
      %v618 = vor.u32 %v615, %v616
      %v620 = vshrl.u32 %v589, 16
      %v622 = vrot.slane %v620, 7
      %v623 = vshll.u32 %v589, 16
      %v625 = vor.u32 %v622, %v623
      %v627 = vshrl.u32 %v590, 16
      %v629 = vrot.slane %v627, 7
      %v630 = vshll.u32 %v590, 16
      %v632 = vor.u32 %v629, %v630
      %v634 = vshrl.u32 %v591, 16
      %v636 = vrot.slane %v634, 7
      %v637 = vshll.u32 %v591, 16
      %v639 = vor.u32 %v636, %v637
      %v641 = vshrl.u32 %v592, 16
      %v643 = vrot.slane %v641, 7
      %v644 = vshll.u32 %v592, 16
      %v646 = vor.u32 %v643, %v644
      %v648 = vshrl.u32 %v593, 16
      %v650 = vrot.slane %v648, 7
      %v651 = vshll.u32 %v593, 16
      %v653 = vor.u32 %v650, %v651
      %v655 = vshrl.u32 %v594, 16
      %v657 = vrot.slane %v655, 7
      %v658 = vshll.u32 %v594, 16
      %v660 = vor.u32 %v657, %v658
      %v662 = vshrl.u32 %v595, 16
      %v664 = vrot.slane %v662, 7
      %v665 = vshll.u32 %v595, 16
      %v667 = vor.u32 %v664, %v665
      %v669 = vshrl.u32 %v596, 16
      %v671 = vrot.slane %v669, 7
      %v672 = vshll.u32 %v596, 16
      %v674 = vor.u32 %v671, %v672
      %v676 = vshrl.u32 %v597, 16
      %v678 = vrot.slane %v676, 7
      %v679 = vshll.u32 %v597, 16
      %v681 = vor.u32 %v678, %v679
      %v683 = vshrl.u32 %v598, 16
      %v685 = vrot.slane %v683, 7
      %v686 = vshll.u32 %v598, 16
      %v688 = vor.u32 %v685, %v686
      %v690 = vshrl.u32 %v599, 16
      %v692 = vrot.slane %v690, 7
      %v693 = vshll.u32 %v599, 16
      %v695 = vor.u32 %v692, %v693
      %v697 = vshrl.u32 %v600, 16
      %v699 = vrot.slane %v697, 7
      %v700 = vshll.u32 %v600, 16
      %v702 = vor.u32 %v699, %v700
      %v704 = vshrl.u32 %v601, 16
      %v706 = vrot.slane %v704, 7
      %v707 = vshll.u32 %v601, 16
      %v709 = vor.u32 %v706, %v707
      %v711 = vshrl.u32 %v602, 16
      %v713 = vrot.slane %v711, 7
      %v714 = vshll.u32 %v602, 16
      %v716 = vor.u32 %v713, %v714
      %v718 = vshrl.u32 %v603, 16
      %v720 = vrot.slane %v718, 7
      %v721 = vshll.u32 %v603, 16
      %v723 = vor.u32 %v720, %v721
      %v725 = vshrl.u32 %v604, 16
      %v727 = vrot.slane %v725, 7
      %v728 = vshll.u32 %v604, 16
      %v730 = vor.u32 %v727, %v728
      %vm767 = vcmask 1040384
      %vm768 = vsmask.f32 256
      %vm769 = vmand %vm767, %vm768
      %v770 = vsel %vm769, 0, %v611
      %v771 = vsel %vm769, 0, %v618
      %v772 = vsel %vm769, 0, %v625
      %v773 = vsel %vm769, 0, %v632
      %v774 = vsel %vm769, 0, %v639
      %v775 = vsel %vm769, 0, %v646
      %v776 = vsel %vm769, 0, %v653
      %v777 = vsel %vm769, 0, %v660
      %v778 = vsel %vm769, 0, %v667
      %v779 = vsel %vm769, 0, %v674
      %v780 = vsel %vm769, 0, %v681
      %v781 = vsel %vm769, 0, %v688
      %v782 = vsel %vm769, 0, %v695
      %v783 = vsel %vm769, 0, %v702
      %v784 = vsel %vm769, 0, %v709
      %v785 = vsel %vm769, 0, %v716
      %v786 = vsel %vm769, 0, %v723
      %v787 = vsel %vm769, 0, %v730
      %v788 = vsel %vm769, %v608, 0
      %v789 = vsel %vm769, %v615, 0
      %v790 = vsel %vm769, %v622, 0
      %v791 = vsel %vm769, %v629, 0
      %v792 = vsel %vm769, %v636, 0
      %v793 = vsel %vm769, %v643, 0
      %v794 = vsel %vm769, %v650, 0
      %v795 = vsel %vm769, %v657, 0
      %v796 = vsel %vm769, %v664, 0
      %v797 = vsel %vm769, %v671, 0
      %v798 = vsel %vm769, %v678, 0
      %v799 = vsel %vm769, %v685, 0
      %v800 = vsel %vm769, %v692, 0
      %v801 = vsel %vm769, %v699, 0
      %v802 = vsel %vm769, %v706, 0
      %v803 = vsel %vm769, %v713, 0
      %v804 = vsel %vm769, %v720, 0
      %v805 = vsel %vm769, %v727, 0
      %vm806 = vsmask.f32 7424
      %v808 = vshrl.u32 %v770, 16
      %v810 = vshll.u32 %v770, 16
      %v812 = vrot.slane %v810, 1
      %v813 = vor.u32 %v808, %v812
      %v815 = vshll.u32 %v788, 16
      %v817 = vrot.slane %v815, 1
      %v818 = vsel %vm806, %v813, %v817
      %v820 = vshrl.u32 %v771, 16
      %v822 = vshll.u32 %v771, 16
      %v824 = vrot.slane %v822, 1
      %v825 = vor.u32 %v820, %v824
      %v827 = vshll.u32 %v789, 16
      %v829 = vrot.slane %v827, 1
      %v830 = vsel %vm806, %v825, %v829
      %v832 = vshrl.u32 %v772, 16
      %v834 = vshll.u32 %v772, 16
      %v836 = vrot.slane %v834, 1
      %v837 = vor.u32 %v832, %v836
      %v839 = vshll.u32 %v790, 16
      %v841 = vrot.slane %v839, 1
      %v842 = vsel %vm806, %v837, %v841
      %v844 = vshrl.u32 %v773, 16
      %v846 = vshll.u32 %v773, 16
      %v848 = vrot.slane %v846, 1
      %v849 = vor.u32 %v844, %v848
      %v851 = vshll.u32 %v791, 16
      %v853 = vrot.slane %v851, 1
      %v854 = vsel %vm806, %v849, %v853
      %v856 = vshrl.u32 %v774, 16
      %v858 = vshll.u32 %v774, 16
      %v860 = vrot.slane %v858, 1
      %v861 = vor.u32 %v856, %v860
      %v863 = vshll.u32 %v792, 16
      %v865 = vrot.slane %v863, 1
      %v866 = vsel %vm806, %v861, %v865
      %v868 = vshrl.u32 %v775, 16
      %v870 = vshll.u32 %v775, 16
      %v872 = vrot.slane %v870, 1
      %v873 = vor.u32 %v868, %v872
      %v875 = vshll.u32 %v793, 16
      %v877 = vrot.slane %v875, 1
      %v878 = vsel %vm806, %v873, %v877
      %v880 = vshrl.u32 %v776, 16
      %v882 = vshll.u32 %v776, 16
      %v884 = vrot.slane %v882, 1
      %v885 = vor.u32 %v880, %v884
      %v887 = vshll.u32 %v794, 16
      %v889 = vrot.slane %v887, 1
      %v890 = vsel %vm806, %v885, %v889
      %v892 = vshrl.u32 %v777, 16
      %v894 = vshll.u32 %v777, 16
      %v896 = vrot.slane %v894, 1
      %v897 = vor.u32 %v892, %v896
      %v899 = vshll.u32 %v795, 16
      %v901 = vrot.slane %v899, 1
      %v902 = vsel %vm806, %v897, %v901
      %v904 = vshrl.u32 %v778, 16
      %v906 = vshll.u32 %v778, 16
      %v908 = vrot.slane %v906, 1
      %v909 = vor.u32 %v904, %v908
      %v911 = vshll.u32 %v796, 16
      %v913 = vrot.slane %v911, 1
      %v914 = vsel %vm806, %v909, %v913
      %v916 = vshrl.u32 %v779, 16
      %v918 = vshll.u32 %v779, 16
      %v920 = vrot.slane %v918, 1
      %v921 = vor.u32 %v916, %v920
      %v923 = vshll.u32 %v797, 16
      %v925 = vrot.slane %v923, 1
      %v926 = vsel %vm806, %v921, %v925
      %v928 = vshrl.u32 %v780, 16
      %v930 = vshll.u32 %v780, 16
      %v932 = vrot.slane %v930, 1
      %v933 = vor.u32 %v928, %v932
      %v935 = vshll.u32 %v798, 16
      %v937 = vrot.slane %v935, 1
      %v938 = vsel %vm806, %v933, %v937
      %v940 = vshrl.u32 %v781, 16
      %v942 = vshll.u32 %v781, 16
      %v944 = vrot.slane %v942, 1
      %v945 = vor.u32 %v940, %v944
      %v947 = vshll.u32 %v799, 16
      %v949 = vrot.slane %v947, 1
      %v950 = vsel %vm806, %v945, %v949
      %v952 = vshrl.u32 %v782, 16
      %v954 = vshll.u32 %v782, 16
      %v956 = vrot.slane %v954, 1
      %v957 = vor.u32 %v952, %v956
      %v959 = vshll.u32 %v800, 16
      %v961 = vrot.slane %v959, 1
      %v962 = vsel %vm806, %v957, %v961
      %v964 = vshrl.u32 %v783, 16
      %v966 = vshll.u32 %v783, 16
      %v968 = vrot.slane %v966, 1
      %v969 = vor.u32 %v964, %v968
      %v971 = vshll.u32 %v801, 16
      %v973 = vrot.slane %v971, 1
      %v974 = vsel %vm806, %v969, %v973
      %v976 = vshrl.u32 %v784, 16
      %v978 = vshll.u32 %v784, 16
      %v980 = vrot.slane %v978, 1
      %v981 = vor.u32 %v976, %v980
      %v983 = vshll.u32 %v802, 16
      %v985 = vrot.slane %v983, 1
      %v986 = vsel %vm806, %v981, %v985
      %v988 = vshrl.u32 %v785, 16
      %v990 = vshll.u32 %v785, 16
      %v992 = vrot.slane %v990, 1
      %v993 = vor.u32 %v988, %v992
      %v995 = vshll.u32 %v803, 16
      %v997 = vrot.slane %v995, 1
      %v998 = vsel %vm806, %v993, %v997
      %999 = vrot.lane.b32.xlu0 %v818, 64
      %v1000 = vpop.permute.xlu0 %999
      %1001 = vrot.lane.b32.xlu0 %v830, 64
      %v1002 = vpop.permute.xlu0 %1001
      %1003 = vrot.lane.b32.xlu0 %v842, 64
      %v1004 = vpop.permute.xlu0 %1003
      %1005 = vrot.lane.b32.xlu0 %v854, 64
      %v1006 = vpop.permute.xlu0 %1005
      %1007 = vrot.lane.b32.xlu0 %v866, 64
      %v1008 = vpop.permute.xlu0 %1007
      %1009 = vrot.lane.b32.xlu0 %v878, 64
      %v1010 = vpop.permute.xlu0 %1009
      %1011 = vrot.lane.b32.xlu0 %v890, 64
      %v1012 = vpop.permute.xlu0 %1011
      %1013 = vrot.lane.b32.xlu0 %v902, 64
      %v1014 = vpop.permute.xlu0 %1013
      %1015 = vrot.lane.b32.xlu0 %v914, 64
      %v1016 = vpop.permute.xlu0 %1015
      %1017 = vrot.lane.b32.xlu0 %v926, 64
      %v1018 = vpop.permute.xlu0 %1017
      %1019 = vrot.lane.b32.xlu0 %v938, 64
      %v1020 = vpop.permute.xlu0 %1019
      %1021 = vrot.lane.b32.xlu0 %v950, 64
      %v1022 = vpop.permute.xlu0 %1021
      %1023 = vrot.lane.b32.xlu0 %v962, 64
      %v1024 = vpop.permute.xlu0 %1023
      %1025 = vrot.lane.b32.xlu0 %v974, 64
      %v1026 = vpop.permute.xlu0 %1025
      %1027 = vrot.lane.b32.xlu0 %v986, 64
      %v1028 = vpop.permute.xlu0 %1027
      %1029 = vrot.lane.b32.xlu0 %v998, 64
      %v1030 = vpop.permute.xlu0 %1029
      %vm1063 = vcmask 1046528
      %v1064 = vrot.slane %v770, 1
      %v1065 = vrot.slane %v788, 1
      %v1066 = vsel %vm1063, %v1064, %v1065
      %v1067 = vrot.slane %v771, 1
      %v1068 = vrot.slane %v789, 1
      %v1069 = vsel %vm1063, %v1067, %v1068
      %v1070 = vrot.slane %v772, 1
      %v1071 = vrot.slane %v790, 1
      %v1072 = vsel %vm1063, %v1070, %v1071
      %v1073 = vrot.slane %v773, 1
      %v1074 = vrot.slane %v791, 1
      %v1075 = vsel %vm1063, %v1073, %v1074
      %v1076 = vrot.slane %v774, 1
      %v1077 = vrot.slane %v792, 1
      %v1078 = vsel %vm1063, %v1076, %v1077
      %v1079 = vrot.slane %v775, 1
      %v1080 = vrot.slane %v793, 1
      %v1081 = vsel %vm1063, %v1079, %v1080
      %v1082 = vrot.slane %v776, 1
      %v1083 = vrot.slane %v794, 1
      %v1084 = vsel %vm1063, %v1082, %v1083
      %v1085 = vrot.slane %v777, 1
      %v1086 = vrot.slane %v795, 1
      %v1087 = vsel %vm1063, %v1085, %v1086
      %v1088 = vrot.slane %v778, 1
      %v1089 = vrot.slane %v796, 1
      %v1090 = vsel %vm1063, %v1088, %v1089
      %v1091 = vrot.slane %v779, 1
      %v1092 = vrot.slane %v797, 1
      %v1093 = vsel %vm1063, %v1091, %v1092
      %v1094 = vrot.slane %v780, 1
      %v1095 = vrot.slane %v798, 1
      %v1096 = vsel %vm1063, %v1094, %v1095
      %v1097 = vrot.slane %v781, 1
      %v1098 = vrot.slane %v799, 1
      %v1099 = vsel %vm1063, %v1097, %v1098
      %v1100 = vrot.slane %v782, 1
      %v1101 = vrot.slane %v800, 1
      %v1102 = vsel %vm1063, %v1100, %v1101
      %v1103 = vrot.slane %v783, 1
      %v1104 = vrot.slane %v801, 1
      %v1105 = vsel %vm1063, %v1103, %v1104
      %v1106 = vrot.slane %v784, 1
      %v1107 = vrot.slane %v802, 1
      %v1108 = vsel %vm1063, %v1106, %v1107
      %v1109 = vrot.slane %v785, 1
      %v1110 = vrot.slane %v803, 1
      %v1111 = vsel %vm1063, %v1109, %v1110
      %vm1112 = vcmask 523264
      %v1114 = vsel %vm1112, %v770, %v1000
      %v1117 = vsel %vm1112, %v771, %v1002
      %v1120 = vsel %vm1112, %v772, %v1004
      %v1123 = vsel %vm1112, %v773, %v1006
      %v1126 = vsel %vm1112, %v774, %v1008
      %v1129 = vsel %vm1112, %v775, %v1010
      %v1132 = vsel %vm1112, %v776, %v1012
      %v1135 = vsel %vm1112, %v777, %v1014
      %v1138 = vsel %vm1112, %v778, %v1016
      %v1141 = vsel %vm1112, %v779, %v1018
      %v1144 = vsel %vm1112, %v780, %v1020
      %v1147 = vsel %vm1112, %v781, %v1022
      %v1150 = vsel %vm1112, %v782, %v1024
      %v1153 = vsel %vm1112, %v783, %v1026
      %v1156 = vsel %vm1112, %v784, %v1028
      %v1159 = vsel %vm1112, %v785, %v1030
      %v1161 = vld [vmem:[%s3] sm:$0xf]
      %v1162 = vld [vmem:[%s3 + $0x4] sm:$0xf]
      %v1163 = vld [vmem:[%s3 + $0x8] sm:$0xf]
      %v1164 = vld [vmem:[%s3 + $0xc] sm:$0xf]
      %v1165 = vld [vmem:[%s3 + $0x10] sm:$0xf]
      %v1166 = vld [vmem:[%s3 + $0x14] sm:$0xf]
      %v1167 = vld [vmem:[%s3 + $0x18] sm:$0xf]
      %v1168 = vld [vmem:[%s3 + $0x1c] sm:$0xf]
      %v1169 = vld [vmem:[%s3 + $0x20] sm:$0xf]
      %v1170 = vld [vmem:[%s3 + $0x24] sm:$0xf]
      %v1171 = vld [vmem:[%s3 + $0x28] sm:$0xf]
      %v1172 = vld [vmem:[%s3 + $0x2c] sm:$0xf]
      %v1173 = vld [vmem:[%s3 + $0x30] sm:$0xf]
      %v1174 = vld [vmem:[%s3 + $0x34] sm:$0xf]
      %v1175 = vld [vmem:[%s3 + $0x38] sm:$0xf]
      %v1176 = vld [vmem:[%s3 + $0x3c] sm:$0xf]
      %v1177 = vld [vmem:[%s3 + $0x40] sm:$0xf]
      %v1178 = vld [vmem:[%s3 + $0x44] sm:$0xf]
      %v1179 = vld [vmem:[%s3 + $0x48] sm:$0xf]
      %v1180 = vld [vmem:[%s3 + $0x4c] sm:$0xf]
      %v1181 = vld [vmem:[%s3 + $0x50] sm:$0xf]
      %v1182 = vld [vmem:[%s3 + $0x54] sm:$0xf]
      %v1183 = vld [vmem:[%s3 + $0x58] sm:$0xf]
      %v1184 = vld [vmem:[%s3 + $0x5c] sm:$0xf]
      %v1186 = vshrl.u32 %v786, 16
      %v1188 = vshll.u32 %v786, 16
      %v1190 = vrot.slane %v1188, 1
      %v1191 = vor.u32 %v1186, %v1190
      %v1193 = vshll.u32 %v804, 16
      %v1195 = vrot.slane %v1193, 1
      %v1196 = vsel %vm806, %v1191, %v1195
      %1197 = vrot.lane.b32.xlu0 %v1196, 64
      %v1198 = vpop.permute.xlu0 %1197
      %v1201 = vrot.slane %v786, 1
      %v1202 = vrot.slane %v804, 1
      %v1203 = vsel %vm1063, %v1201, %v1202
      %v1205 = vsel %vm1112, %v786, %v1198
      %s1207 = scalar_lea.vmem %s3, 96
      %v1208 = vld [vmem:[%s1207] sm:$0xf]
      %v1209 = vld [vmem:[%s1207 + $0x4] sm:$0xf]
      %v1210 = vld [vmem:[%s1207 + $0x8] sm:$0xf]
      %v1211 = vld [vmem:[%s1207 + $0xc] sm:$0xf]
      %v1212 = vld [vmem:[%s1207 + $0x10] sm:$0xf]
      %v1213 = vld [vmem:[%s1207 + $0x14] sm:$0xf]
      %v1214 = vld [vmem:[%s1207 + $0x18] sm:$0xf]
      %v1215 = vld [vmem:[%s1207 + $0x1c] sm:$0xf]
      %v1216 = vld [vmem:[%s1207 + $0x20] sm:$0xf]
      %v1217 = vld [vmem:[%s1207 + $0x24] sm:$0xf]
      %v1218 = vld [vmem:[%s1207 + $0x28] sm:$0xf]
      %v1219 = vld [vmem:[%s1207 + $0x2c] sm:$0xf]
      %v1220 = vld [vmem:[%s1207 + $0x30] sm:$0xf]
      %v1221 = vld [vmem:[%s1207 + $0x34] sm:$0xf]
      %v1222 = vld [vmem:[%s1207 + $0x38] sm:$0xf]
      %v1223 = vld [vmem:[%s1207 + $0x3c] sm:$0xf]
      %v1224 = vld [vmem:[%s1207 + $0x40] sm:$0xf]
      %v1225 = vld [vmem:[%s1207 + $0x44] sm:$0xf]
      %v1226 = vld [vmem:[%s1207 + $0x48] sm:$0xf]
      %v1227 = vld [vmem:[%s1207 + $0x4c] sm:$0xf]
      %v1228 = vld [vmem:[%s1207 + $0x50] sm:$0xf]
      %v1229 = vld [vmem:[%s1207 + $0x54] sm:$0xf]
      %v1230 = vld [vmem:[%s1207 + $0x58] sm:$0xf]
      %v1231 = vld [vmem:[%s1207 + $0x5c] sm:$0xf]
      %v1256 = vunpack.c.l.b16 %v1208
      %v1257 = vunpack.c.l.b16 %v1209
      %v1258 = vunpack.c.l.b16 %v1210
      %v1259 = vunpack.c.l.b16 %v1211
      %v1260 = vunpack.c.l.b16 %v1212
      %v1261 = vunpack.c.l.b16 %v1213
      %v1262 = vunpack.c.l.b16 %v1214
      %v1263 = vunpack.c.l.b16 %v1215
      %v1264 = vunpack.c.l.b16 %v1216
      %v1265 = vunpack.c.l.b16 %v1217
      %v1266 = vunpack.c.l.b16 %v1218
      %v1267 = vunpack.c.l.b16 %v1219
      %v1268 = vunpack.c.l.b16 %v1220
      %v1269 = vunpack.c.l.b16 %v1221
      %v1270 = vunpack.c.l.b16 %v1222
      %v1271 = vunpack.c.l.b16 %v1223
      %v1272 = vunpack.c.l.b16 %v1224
      %v1273 = vunpack.c.l.b16 %v1225
      %v1274 = vunpack.c.l.b16 %v1226
      %v1275 = vunpack.c.l.b16 %v1227
      %v1276 = vunpack.c.l.b16 %v1228
      %v1277 = vunpack.c.l.b16 %v1229
      %v1278 = vunpack.c.l.b16 %v1230
      %v1279 = vunpack.c.l.b16 %v1231
      %v1280 = vpack.c.b16 %v1257, %v1256
      %v1281 = vpack.c.b16 %v1259, %v1258
      %v1282 = vpack.c.b16 %v1261, %v1260
      %v1283 = vpack.c.b16 %v1263, %v1262
      %v1284 = vpack.c.b16 %v1265, %v1264
      %v1285 = vpack.c.b16 %v1267, %v1266
      %v1286 = vpack.c.b16 %v1269, %v1268
      %v1287 = vpack.c.b16 %v1271, %v1270
      %v1288 = vpack.c.b16 %v1273, %v1272
      %v1289 = vpack.c.b16 %v1275, %v1274
      %v1290 = vpack.c.b16 %v1277, %v1276
      %v1291 = vpack.c.b16 %v1279, %v1278
      %v1305 = vsel %vm1112, %v1069, 0
      %v1308 = vsel %vm1112, %v1072, 0
      %v1311 = vsel %vm1112, %v1075, 0
      %v1314 = vsel %vm1112, %v1078, 0
      %v1317 = vsel %vm1112, %v1081, 0
      %v1320 = vsel %vm1112, %v1084, 0
      %v1323 = vsel %vm1112, %v1087, 0
      %v1326 = vsel %vm1112, %v1090, 0
      %v1329 = vsel %vm1112, %v1093, 0
      %v1332 = vsel %vm1112, %v1096, 0
      %v1335 = vsel %vm1112, %v1099, 0
      %v1338 = vsel %vm1112, %v1102, 0
      %v1341 = vsel %vm1112, %v1105, 0
      %v1344 = vsel %vm1112, %v1108, 0
      %v1347 = vsel %vm1112, %v1111, 0
      %v1350 = vsel %vm1112, %v1203, 0
      %1352 = vmatprep.subr.bf16.mxu0 0
      %1353 = vmatpush1.bf16.msra.mxu0 %v1280
      %1354 = vmatprep.subr.bf16.mxu0 0
      %1355 = vmatpush1.bf16.msra.mxu0 %v1281
      %1356 = vmatprep.subr.bf16.mxu0 0
      %1357 = vmatpush1.bf16.msra.mxu0 %v1282
      %1358 = vmatprep.subr.bf16.mxu0 0
      %1359 = vmatpush1.bf16.msra.mxu0 %v1283
      %1360 = vmatprep.subr.bf16.mxu0 0
      %1361 = vmatpush1.bf16.msra.mxu0 %v1284
      %1362 = vmatprep.subr.bf16.mxu0 0
      %1363 = vmatpush1.bf16.msra.mxu0 %v1285
      %1364 = vmatprep.subr.bf16.mxu0 0
      %1365 = vmatpush1.bf16.msra.mxu0 %v1286
      %1366 = vmatprep.subr.bf16.mxu0 0
      %1367 = vmatpush1.bf16.msra.mxu0 %v1287
      %1368 = vmatprep.subr.bf16.mxu0 0
      %1369 = vmatpush1.bf16.msra.mxu0 %v1288
      %1370 = vmatprep.subr.bf16.mxu0 0
      %1371 = vmatpush1.bf16.msra.mxu0 %v1289
      %1372 = vmatprep.subr.bf16.mxu0 0
      %1373 = vmatpush1.bf16.msra.mxu0 %v1290
      %1374 = vmatprep.subr.bf16.mxu0 0
      %1375 = vmatpush1.bf16.msra.mxu0 %v1291
      %1376 = vmatprep.subr.bf16.mxu0 0
      %1377 = vmatpush1.bf16.msra.mxu0 0
      %1378 = vmatprep.subr.bf16.mxu0 0
      %1379 = vmatpush1.bf16.msra.mxu0 0
      %1380 = vmatprep.subr.bf16.mxu0 0
      %1381 = vmatpush1.bf16.msra.mxu0 0
      %1382 = vmatprep.subr.bf16.mxu0 0
      %1383 = vmatpush1.bf16.msra.mxu0 0
      %1384 = vmatprep.mubr.bf16.mxu0 %v1305
      %1385 = vmatmul.mubr.bf16.gmra.mrb[0].mxu0 %v1117
      %v1386 = vpop.f32.mrb[0].mxu0
      %v1387 = vadd.f32 0.0, %v1386
      %v1388 = vpop.f32.mrb[0].mxu0
      %v1389 = vpop.f32.mrb[0].mxu0
      %v1390 = vadd.f32 0.0, %v1389
      %v1391 = vpop.f32.mrb[0].mxu0
      %1392 = vmatprep.mubr.bf16.mxu0 %v1308
      %1393 = vmatmul.mubr.bf16.gmra.mrb[0].mxu0 %v1120
      %v1394 = vpop.f32.mrb[0].mxu0
      %v1395 = vadd.f32 0.0, %v1394
      %v1396 = vpop.f32.mrb[0].mxu0
      %v1397 = vpop.f32.mrb[0].mxu0
      %v1398 = vadd.f32 0.0, %v1397
      %v1399 = vpop.f32.mrb[0].mxu0
      %1400 = vmatprep.mubr.bf16.mxu0 %v1311
      %1401 = vmatmul.mubr.bf16.gmra.mrb[0].mxu0 %v1123
      %v1402 = vpop.f32.mrb[0].mxu0
      %v1403 = vadd.f32 0.0, %v1402
      %v1404 = vpop.f32.mrb[0].mxu0
      %v1405 = vpop.f32.mrb[0].mxu0
      %v1406 = vadd.f32 0.0, %v1405
      %v1407 = vpop.f32.mrb[0].mxu0
      %1408 = vmatprep.mubr.bf16.mxu0 %v1314
      %1409 = vmatmul.mubr.bf16.gmra.mrb[0].mxu0 %v1126
      %v1410 = vpop.f32.mrb[0].mxu0
      %v1411 = vadd.f32 0.0, %v1410
      %v1412 = vpop.f32.mrb[0].mxu0
      %v1413 = vpop.f32.mrb[0].mxu0
      %v1414 = vadd.f32 0.0, %v1413
      %v1415 = vpop.f32.mrb[0].mxu0
      %1416 = vmatprep.mubr.bf16.mxu0 %v1317
      %1417 = vmatmul.mubr.bf16.gmra.mrb[0].mxu0 %v1129
      %v1418 = vpop.f32.mrb[0].mxu0
      %v1419 = vadd.f32 0.0, %v1418
      %v1420 = vpop.f32.mrb[0].mxu0
      %v1421 = vpop.f32.mrb[0].mxu0
      %v1422 = vadd.f32 0.0, %v1421
      %v1423 = vpop.f32.mrb[0].mxu0
      %1424 = vmatprep.mubr.bf16.mxu0 %v1320
      %1425 = vmatmul.mubr.bf16.gmra.mrb[0].mxu0 %v1132
      %v1426 = vpop.f32.mrb[0].mxu0
      %v1427 = vadd.f32 0.0, %v1426
      %v1428 = vpop.f32.mrb[0].mxu0
      %v1429 = vpop.f32.mrb[0].mxu0
      %v1430 = vadd.f32 0.0, %v1429
      %v1431 = vpop.f32.mrb[0].mxu0
      %1432 = vmatprep.mubr.bf16.mxu0 %v1323
      %1433 = vmatmul.mubr.bf16.gmra.mrb[0].mxu0 %v1135
      %v1434 = vpop.f32.mrb[0].mxu0
      %v1435 = vadd.f32 0.0, %v1434
      %v1436 = vpop.f32.mrb[0].mxu0
      %v1437 = vpop.f32.mrb[0].mxu0
      %v1438 = vadd.f32 0.0, %v1437
      %v1439 = vpop.f32.mrb[0].mxu0
      %1440 = vmatprep.mubr.bf16.mxu0 %v1326
      %1441 = vmatmul.mubr.bf16.gmra.mrb[0].mxu0 %v1138
      %v1442 = vpop.f32.mrb[0].mxu0
      %v1443 = vadd.f32 0.0, %v1442
      %v1444 = vpop.f32.mrb[0].mxu0
      %v1445 = vpop.f32.mrb[0].mxu0
      %v1446 = vadd.f32 0.0, %v1445
      %v1447 = vpop.f32.mrb[0].mxu0
      %1448 = vmatprep.mubr.bf16.mxu0 %v1329
      %1449 = vmatmul.mubr.bf16.gmra.mrb[0].mxu0 %v1141
      %v1450 = vpop.f32.mrb[0].mxu0
      %v1451 = vadd.f32 0.0, %v1450
      %v1452 = vpop.f32.mrb[0].mxu0
      %v1453 = vpop.f32.mrb[0].mxu0
      %v1454 = vadd.f32 0.0, %v1453
      %v1455 = vpop.f32.mrb[0].mxu0
      %1456 = vmatprep.mubr.bf16.mxu0 %v1332
      %1457 = vmatmul.mubr.bf16.gmra.mrb[0].mxu0 %v1144
      %v1458 = vpop.f32.mrb[0].mxu0
      %v1459 = vadd.f32 0.0, %v1458
      %v1460 = vpop.f32.mrb[0].mxu0
      %v1461 = vpop.f32.mrb[0].mxu0
      %v1462 = vadd.f32 0.0, %v1461
      %v1463 = vpop.f32.mrb[0].mxu0
      %1464 = vmatprep.mubr.bf16.mxu0 %v1335
      %1465 = vmatmul.mubr.bf16.gmra.mrb[0].mxu0 %v1147
      %v1466 = vpop.f32.mrb[0].mxu0
      %v1467 = vadd.f32 0.0, %v1466
      %v1468 = vpop.f32.mrb[0].mxu0
      %v1469 = vpop.f32.mrb[0].mxu0
      %v1470 = vadd.f32 0.0, %v1469
      %v1471 = vpop.f32.mrb[0].mxu0
      %1472 = vmatprep.mubr.bf16.mxu0 %v1338
      %1473 = vmatmul.mubr.bf16.gmra.mrb[0].mxu0 %v1150
      %v1474 = vpop.f32.mrb[0].mxu0
      %v1475 = vadd.f32 0.0, %v1474
      %v1476 = vpop.f32.mrb[0].mxu0
      %v1477 = vpop.f32.mrb[0].mxu0
      %v1478 = vadd.f32 0.0, %v1477
      %v1479 = vpop.f32.mrb[0].mxu0
      %1480 = vmatprep.mubr.bf16.mxu0 %v1341
      %1481 = vmatmul.mubr.bf16.gmra.mrb[0].mxu0 %v1153
      %v1482 = vpop.f32.mrb[0].mxu0
      %v1483 = vadd.f32 0.0, %v1482
      %v1484 = vpop.f32.mrb[0].mxu0
      %v1485 = vpop.f32.mrb[0].mxu0
      %v1486 = vadd.f32 0.0, %v1485
      %v1487 = vpop.f32.mrb[0].mxu0
      %1488 = vmatprep.mubr.bf16.mxu0 %v1344
      %1489 = vmatmul.mubr.bf16.gmra.mrb[0].mxu0 %v1156
      %v1490 = vpop.f32.mrb[0].mxu0
      %v1491 = vadd.f32 0.0, %v1490
      %v1492 = vpop.f32.mrb[0].mxu0
      %v1493 = vpop.f32.mrb[0].mxu0
      %v1494 = vadd.f32 0.0, %v1493
      %v1495 = vpop.f32.mrb[0].mxu0
      %1496 = vmatprep.mubr.bf16.mxu0 %v1347
      %1497 = vmatmul.mubr.bf16.gmra.mrb[0].mxu0 %v1159
      %v1498 = vpop.f32.mrb[0].mxu0
      %v1499 = vadd.f32 0.0, %v1498
      %v1500 = vpop.f32.mrb[0].mxu0
      %v1501 = vpop.f32.mrb[0].mxu0
      %v1502 = vadd.f32 0.0, %v1501
      %v1503 = vpop.f32.mrb[0].mxu0
      %1504 = vmatprep.mubr.bf16.mxu0 %v1350
      %1505 = vmatmul.mubr.bf16.gmra.mrb[0].mxu0 %v1205
      %v1506 = vpop.f32.mrb[0].mxu0
      %v1507 = vadd.f32 0.0, %v1506
      %v1508 = vpop.f32.mrb[0].mxu0
      %v1509 = vpop.f32.mrb[0].mxu0
      %v1510 = vadd.f32 0.0, %v1509
      %v1511 = vpop.f32.mrb[0].mxu0
      %1512 = vdwg.mxu0
      %v1537 = vunpack.c.l.b16 %v1161
      %v1538 = vunpack.c.l.b16 %v1162
      %v1539 = vunpack.c.l.b16 %v1163
      %v1540 = vunpack.c.l.b16 %v1164
      %v1541 = vunpack.c.l.b16 %v1165
      %v1542 = vunpack.c.l.b16 %v1166
      %v1543 = vunpack.c.l.b16 %v1167
      %v1544 = vunpack.c.l.b16 %v1168
      %v1545 = vunpack.c.l.b16 %v1169
      %v1546 = vunpack.c.l.b16 %v1170
      %v1547 = vunpack.c.l.b16 %v1171
      %v1548 = vunpack.c.l.b16 %v1172
      %v1549 = vunpack.c.l.b16 %v1173
      %v1550 = vunpack.c.l.b16 %v1174
      %v1551 = vunpack.c.l.b16 %v1175
      %v1552 = vunpack.c.l.b16 %v1176
      %v1553 = vunpack.c.l.b16 %v1177
      %v1554 = vunpack.c.l.b16 %v1178
      %v1555 = vunpack.c.l.b16 %v1179
      %v1556 = vunpack.c.l.b16 %v1180
      %v1557 = vunpack.c.l.b16 %v1181
      %v1558 = vunpack.c.l.b16 %v1182
      %v1559 = vunpack.c.l.b16 %v1183
      %v1560 = vunpack.c.l.b16 %v1184
      %v1561 = vpack.c.b16 %v1538, %v1537
      %v1562 = vpack.c.b16 %v1540, %v1539
      %v1563 = vpack.c.b16 %v1542, %v1541
      %v1564 = vpack.c.b16 %v1544, %v1543
      %v1565 = vpack.c.b16 %v1546, %v1545
      %v1566 = vpack.c.b16 %v1548, %v1547
      %v1567 = vpack.c.b16 %v1550, %v1549
      %v1568 = vpack.c.b16 %v1552, %v1551
      %v1569 = vpack.c.b16 %v1554, %v1553
      %v1570 = vpack.c.b16 %v1556, %v1555
      %v1571 = vpack.c.b16 %v1558, %v1557
      %v1572 = vpack.c.b16 %v1560, %v1559
      %v1586 = vsel %vm1112, %v1066, 0
      %1588 = vmatprep.subr.bf16.mxu0 0
      %1589 = vmatpush1.bf16.msra.mxu0 %v1561
      %1590 = vmatprep.subr.bf16.mxu0 0
      %1591 = vmatpush1.bf16.msra.mxu0 %v1562
      %1592 = vmatprep.subr.bf16.mxu0 0
      %1593 = vmatpush1.bf16.msra.mxu0 %v1563
      %1594 = vmatprep.subr.bf16.mxu0 0
      %1595 = vmatpush1.bf16.msra.mxu0 %v1564
      %1596 = vmatprep.subr.bf16.mxu0 0
      %1597 = vmatpush1.bf16.msra.mxu0 %v1565
      %1598 = vmatprep.subr.bf16.mxu0 0
      %1599 = vmatpush1.bf16.msra.mxu0 %v1566
      %1600 = vmatprep.subr.bf16.mxu0 0
      %1601 = vmatpush1.bf16.msra.mxu0 %v1567
      %1602 = vmatprep.subr.bf16.mxu0 0
      %1603 = vmatpush1.bf16.msra.mxu0 %v1568
      %1604 = vmatprep.subr.bf16.mxu0 0
      %1605 = vmatpush1.bf16.msra.mxu0 %v1569
      %1606 = vmatprep.subr.bf16.mxu0 0
      %1607 = vmatpush1.bf16.msra.mxu0 %v1570
      %1608 = vmatprep.subr.bf16.mxu0 0
      %1609 = vmatpush1.bf16.msra.mxu0 %v1571
      %1610 = vmatprep.subr.bf16.mxu0 0
      %1611 = vmatpush1.bf16.msra.mxu0 %v1572
      %1612 = vmatprep.subr.bf16.mxu0 0
      %1613 = vmatpush1.bf16.msra.mxu0 0
      %1614 = vmatprep.subr.bf16.mxu0 0
      %1615 = vmatpush1.bf16.msra.mxu0 0
      %1616 = vmatprep.subr.bf16.mxu0 0
      %1617 = vmatpush1.bf16.msra.mxu0 0
      %1618 = vmatprep.subr.bf16.mxu0 0
      %1619 = vmatpush1.bf16.msra.mxu0 0
      %1620 = vmatprep.mubr.bf16.mxu0 %v1586
      %1621 = vmatmul.mubr.bf16.gmra.mrb[0].mxu0 %v1114
      %v1622 = vpop.f32.mrb[0].mxu0
      %v1623 = vadd.f32 %v1387, %v1622
      %v1624 = vpop.f32.mrb[0].mxu0
      %v1625 = vpop.f32.mrb[0].mxu0
      %v1626 = vadd.f32 %v1390, %v1625
      %v1627 = vpop.f32.mrb[0].mxu0
      %1628 = vmatprep.mubr.bf16.mxu0 %v1305
      %1629 = vmatmul.mubr.bf16.gmra.mrb[0].mxu0 %v1117
      %v1630 = vpop.f32.mrb[0].mxu0
      %v1631 = vadd.f32 %v1395, %v1630
      %v1632 = vpop.f32.mrb[0].mxu0
      %v1633 = vpop.f32.mrb[0].mxu0
      %v1634 = vadd.f32 %v1398, %v1633
      %v1635 = vpop.f32.mrb[0].mxu0
      %1636 = vmatprep.mubr.bf16.mxu0 %v1308
      %1637 = vmatmul.mubr.bf16.gmra.mrb[0].mxu0 %v1120
      %v1638 = vpop.f32.mrb[0].mxu0
      %v1639 = vadd.f32 %v1403, %v1638
      %v1640 = vpop.f32.mrb[0].mxu0
      %v1641 = vpop.f32.mrb[0].mxu0
      %v1642 = vadd.f32 %v1406, %v1641
      %v1643 = vpop.f32.mrb[0].mxu0
      %1644 = vmatprep.mubr.bf16.mxu0 %v1311
      %1645 = vmatmul.mubr.bf16.gmra.mrb[0].mxu0 %v1123
      %v1646 = vpop.f32.mrb[0].mxu0
      %v1647 = vadd.f32 %v1411, %v1646
      %v1648 = vpop.f32.mrb[0].mxu0
      %v1649 = vpop.f32.mrb[0].mxu0
      %v1650 = vadd.f32 %v1414, %v1649
      %v1651 = vpop.f32.mrb[0].mxu0
      %1652 = vmatprep.mubr.bf16.mxu0 %v1314
      %1653 = vmatmul.mubr.bf16.gmra.mrb[0].mxu0 %v1126
      %v1654 = vpop.f32.mrb[0].mxu0
      %v1655 = vadd.f32 %v1419, %v1654
      %v1656 = vpop.f32.mrb[0].mxu0
      %v1657 = vpop.f32.mrb[0].mxu0
      %v1658 = vadd.f32 %v1422, %v1657
      %v1659 = vpop.f32.mrb[0].mxu0
      %1660 = vmatprep.mubr.bf16.mxu0 %v1317
      %1661 = vmatmul.mubr.bf16.gmra.mrb[0].mxu0 %v1129
      %v1662 = vpop.f32.mrb[0].mxu0
      %v1663 = vadd.f32 %v1427, %v1662
      %v1664 = vpop.f32.mrb[0].mxu0
      %v1665 = vpop.f32.mrb[0].mxu0
      %v1666 = vadd.f32 %v1430, %v1665
      %v1667 = vpop.f32.mrb[0].mxu0
      %1668 = vmatprep.mubr.bf16.mxu0 %v1320
      %1669 = vmatmul.mubr.bf16.gmra.mrb[0].mxu0 %v1132
      %v1670 = vpop.f32.mrb[0].mxu0
      %v1671 = vadd.f32 %v1435, %v1670
      %v1672 = vpop.f32.mrb[0].mxu0
      %v1673 = vpop.f32.mrb[0].mxu0
      %v1674 = vadd.f32 %v1438, %v1673
      %v1675 = vpop.f32.mrb[0].mxu0
      %1676 = vmatprep.mubr.bf16.mxu0 %v1323
      %1677 = vmatmul.mubr.bf16.gmra.mrb[0].mxu0 %v1135
      %v1678 = vpop.f32.mrb[0].mxu0
      %v1679 = vadd.f32 %v1443, %v1678
      %v1680 = vpop.f32.mrb[0].mxu0
      %v1681 = vpop.f32.mrb[0].mxu0
      %v1682 = vadd.f32 %v1446, %v1681
      %v1683 = vpop.f32.mrb[0].mxu0
      %1684 = vmatprep.mubr.bf16.mxu0 %v1326
      %1685 = vmatmul.mubr.bf16.gmra.mrb[0].mxu0 %v1138
      %v1686 = vpop.f32.mrb[0].mxu0
      %v1687 = vadd.f32 %v1451, %v1686
      %v1688 = vpop.f32.mrb[0].mxu0
      %v1689 = vpop.f32.mrb[0].mxu0
      %v1690 = vadd.f32 %v1454, %v1689
      %v1691 = vpop.f32.mrb[0].mxu0
      %1692 = vmatprep.mubr.bf16.mxu0 %v1329
      %1693 = vmatmul.mubr.bf16.gmra.mrb[0].mxu0 %v1141
      %v1694 = vpop.f32.mrb[0].mxu0
      %v1695 = vadd.f32 %v1459, %v1694
      %v1696 = vpop.f32.mrb[0].mxu0
      %v1697 = vpop.f32.mrb[0].mxu0
      %v1698 = vadd.f32 %v1462, %v1697
      %v1699 = vpop.f32.mrb[0].mxu0
      %1700 = vmatprep.mubr.bf16.mxu0 %v1332
      %1701 = vmatmul.mubr.bf16.gmra.mrb[0].mxu0 %v1144
      %v1702 = vpop.f32.mrb[0].mxu0
      %v1703 = vadd.f32 %v1467, %v1702
      %v1704 = vpop.f32.mrb[0].mxu0
      %v1705 = vpop.f32.mrb[0].mxu0
      %v1706 = vadd.f32 %v1470, %v1705
      %v1707 = vpop.f32.mrb[0].mxu0
      %1708 = vmatprep.mubr.bf16.mxu0 %v1335
      %1709 = vmatmul.mubr.bf16.gmra.mrb[0].mxu0 %v1147
      %v1710 = vpop.f32.mrb[0].mxu0
      %v1711 = vadd.f32 %v1475, %v1710
      %v1712 = vpop.f32.mrb[0].mxu0
      %v1713 = vpop.f32.mrb[0].mxu0
      %v1714 = vadd.f32 %v1478, %v1713
      %v1715 = vpop.f32.mrb[0].mxu0
      %1716 = vmatprep.mubr.bf16.mxu0 %v1338
      %1717 = vmatmul.mubr.bf16.gmra.mrb[0].mxu0 %v1150
      %v1718 = vpop.f32.mrb[0].mxu0
      %v1719 = vadd.f32 %v1483, %v1718
      %v1720 = vpop.f32.mrb[0].mxu0
      %v1721 = vpop.f32.mrb[0].mxu0
      %v1722 = vadd.f32 %v1486, %v1721
      %v1723 = vpop.f32.mrb[0].mxu0
      %1724 = vmatprep.mubr.bf16.mxu0 %v1341
      %1725 = vmatmul.mubr.bf16.gmra.mrb[0].mxu0 %v1153
      %v1726 = vpop.f32.mrb[0].mxu0
      %v1727 = vadd.f32 %v1491, %v1726
      %v1728 = vpop.f32.mrb[0].mxu0
      %v1729 = vpop.f32.mrb[0].mxu0
      %v1730 = vadd.f32 %v1494, %v1729
      %v1731 = vpop.f32.mrb[0].mxu0
      %1732 = vmatprep.mubr.bf16.mxu0 %v1344
      %1733 = vmatmul.mubr.bf16.gmra.mrb[0].mxu0 %v1156
      %v1734 = vpop.f32.mrb[0].mxu0
      %v1735 = vadd.f32 %v1499, %v1734
      %v1736 = vpop.f32.mrb[0].mxu0
      %v1737 = vpop.f32.mrb[0].mxu0
      %v1738 = vadd.f32 %v1502, %v1737
      %v1739 = vpop.f32.mrb[0].mxu0
      %1740 = vmatprep.mubr.bf16.mxu0 %v1347
      %1741 = vmatmul.mubr.bf16.gmra.mrb[0].mxu0 %v1159
      %v1742 = vpop.f32.mrb[0].mxu0
      %v1743 = vadd.f32 %v1507, %v1742
      %v1744 = vpop.f32.mrb[0].mxu0
      %v1745 = vpop.f32.mrb[0].mxu0
      %v1746 = vadd.f32 %v1510, %v1745
      %v1747 = vpop.f32.mrb[0].mxu0
      %1748 = vdwg.mxu0
      %v1750 = vshrl.u32 %v787, 16
      %v1752 = vshll.u32 %v787, 16
      %v1754 = vrot.slane %v1752, 1
      %v1755 = vor.u32 %v1750, %v1754
      %v1757 = vshll.u32 %v805, 16
      %v1759 = vrot.slane %v1757, 1
      %v1760 = vsel %vm806, %v1755, %v1759
      %1761 = vrot.lane.b32.xlu0 %v1760, 64
      %v1762 = vpop.permute.xlu0 %1761
      %v1765 = vrot.slane %v787, 1
      %v1766 = vrot.slane %v805, 1
      %v1767 = vsel %vm1063, %v1765, %v1766
      %v1769 = vsel %vm1112, %v787, %v1762
      %s1771 = scalar_lea.vmem %s3, 192
      %v1772 = vld [vmem:[%s1771] sm:$0xf]
      %v1773 = vld [vmem:[%s1771 + $0x4] sm:$0xf]
      %v1774 = vld [vmem:[%s1771 + $0x8] sm:$0xf]
      %v1775 = vld [vmem:[%s1771 + $0xc] sm:$0xf]
      %v1776 = vld [vmem:[%s1771 + $0x10] sm:$0xf]
      %v1777 = vld [vmem:[%s1771 + $0x14] sm:$0xf]
      %v1778 = vld [vmem:[%s1771 + $0x18] sm:$0xf]
      %v1779 = vld [vmem:[%s1771 + $0x1c] sm:$0xf]
      %v1780 = vld [vmem:[%s1771 + $0x20] sm:$0xf]
      %v1781 = vld [vmem:[%s1771 + $0x24] sm:$0xf]
      %v1782 = vld [vmem:[%s1771 + $0x28] sm:$0xf]
      %v1783 = vld [vmem:[%s1771 + $0x2c] sm:$0xf]
      %v1784 = vld [vmem:[%s1771 + $0x30] sm:$0xf]
      %v1785 = vld [vmem:[%s1771 + $0x34] sm:$0xf]
      %v1786 = vld [vmem:[%s1771 + $0x38] sm:$0xf]
      %v1787 = vld [vmem:[%s1771 + $0x3c] sm:$0xf]
      %v1788 = vld [vmem:[%s1771 + $0x40] sm:$0xf]
      %v1789 = vld [vmem:[%s1771 + $0x44] sm:$0xf]
      %v1790 = vld [vmem:[%s1771 + $0x48] sm:$0xf]
      %v1791 = vld [vmem:[%s1771 + $0x4c] sm:$0xf]
      %v1792 = vld [vmem:[%s1771 + $0x50] sm:$0xf]
      %v1793 = vld [vmem:[%s1771 + $0x54] sm:$0xf]
      %v1794 = vld [vmem:[%s1771 + $0x58] sm:$0xf]
      %v1795 = vld [vmem:[%s1771 + $0x5c] sm:$0xf]
      %v1820 = vunpack.c.l.b16 %v1772
      %v1821 = vunpack.c.l.b16 %v1773
      %v1822 = vunpack.c.l.b16 %v1774
      %v1823 = vunpack.c.l.b16 %v1775
      %v1824 = vunpack.c.l.b16 %v1776
      %v1825 = vunpack.c.l.b16 %v1777
      %v1826 = vunpack.c.l.b16 %v1778
      %v1827 = vunpack.c.l.b16 %v1779
      %v1828 = vunpack.c.l.b16 %v1780
      %v1829 = vunpack.c.l.b16 %v1781
      %v1830 = vunpack.c.l.b16 %v1782
      %v1831 = vunpack.c.l.b16 %v1783
      %v1832 = vunpack.c.l.b16 %v1784
      %v1833 = vunpack.c.l.b16 %v1785
      %v1834 = vunpack.c.l.b16 %v1786
      %v1835 = vunpack.c.l.b16 %v1787
      %v1836 = vunpack.c.l.b16 %v1788
      %v1837 = vunpack.c.l.b16 %v1789
      %v1838 = vunpack.c.l.b16 %v1790
      %v1839 = vunpack.c.l.b16 %v1791
      %v1840 = vunpack.c.l.b16 %v1792
      %v1841 = vunpack.c.l.b16 %v1793
      %v1842 = vunpack.c.l.b16 %v1794
      %v1843 = vunpack.c.l.b16 %v1795
      %v1844 = vpack.c.b16 %v1821, %v1820
      %v1845 = vpack.c.b16 %v1823, %v1822
      %v1846 = vpack.c.b16 %v1825, %v1824
      %v1847 = vpack.c.b16 %v1827, %v1826
      %v1848 = vpack.c.b16 %v1829, %v1828
      %v1849 = vpack.c.b16 %v1831, %v1830
      %v1850 = vpack.c.b16 %v1833, %v1832
      %v1851 = vpack.c.b16 %v1835, %v1834
      %v1852 = vpack.c.b16 %v1837, %v1836
      %v1853 = vpack.c.b16 %v1839, %v1838
      %v1854 = vpack.c.b16 %v1841, %v1840
      %v1855 = vpack.c.b16 %v1843, %v1842
      %v1869 = vsel %vm1112, %v1767, 0
      %1871 = vmatprep.subr.bf16.mxu0 0
      %1872 = vmatpush1.bf16.msra.mxu0 %v1844
      %1873 = vmatprep.subr.bf16.mxu0 0
      %1874 = vmatpush1.bf16.msra.mxu0 %v1845
      %1875 = vmatprep.subr.bf16.mxu0 0
      %1876 = vmatpush1.bf16.msra.mxu0 %v1846
      %1877 = vmatprep.subr.bf16.mxu0 0
      %1878 = vmatpush1.bf16.msra.mxu0 %v1847
      %1879 = vmatprep.subr.bf16.mxu0 0
      %1880 = vmatpush1.bf16.msra.mxu0 %v1848
      %1881 = vmatprep.subr.bf16.mxu0 0
      %1882 = vmatpush1.bf16.msra.mxu0 %v1849
      %1883 = vmatprep.subr.bf16.mxu0 0
      %1884 = vmatpush1.bf16.msra.mxu0 %v1850
      %1885 = vmatprep.subr.bf16.mxu0 0
      %1886 = vmatpush1.bf16.msra.mxu0 %v1851
      %1887 = vmatprep.subr.bf16.mxu0 0
      %1888 = vmatpush1.bf16.msra.mxu0 %v1852
      %1889 = vmatprep.subr.bf16.mxu0 0
      %1890 = vmatpush1.bf16.msra.mxu0 %v1853
      %1891 = vmatprep.subr.bf16.mxu0 0
      %1892 = vmatpush1.bf16.msra.mxu0 %v1854
      %1893 = vmatprep.subr.bf16.mxu0 0
      %1894 = vmatpush1.bf16.msra.mxu0 %v1855
      %1895 = vmatprep.subr.bf16.mxu0 0
      %1896 = vmatpush1.bf16.msra.mxu0 0
      %1897 = vmatprep.subr.bf16.mxu0 0
      %1898 = vmatpush1.bf16.msra.mxu0 0
      %1899 = vmatprep.subr.bf16.mxu0 0
      %1900 = vmatpush1.bf16.msra.mxu0 0
      %1901 = vmatprep.subr.bf16.mxu0 0
      %1902 = vmatpush1.bf16.msra.mxu0 0
      %1903 = vmatprep.mubr.bf16.mxu0 %v1308
      %1904 = vmatmul.mubr.bf16.gmra.mrb[0].mxu0 %v1120
      %v1905 = vpop.f32.mrb[0].mxu0
      %v1906 = vadd.f32 0.0, %v1905
      %v1907 = vpop.f32.mrb[0].mxu0
      %v1908 = vpop.f32.mrb[0].mxu0
      %v1909 = vadd.f32 0.0, %v1908
      %v1910 = vpop.f32.mrb[0].mxu0
      %1911 = vmatprep.mubr.bf16.mxu0 %v1311
      %1912 = vmatmul.mubr.bf16.gmra.mrb[0].mxu0 %v1123
      %v1913 = vpop.f32.mrb[0].mxu0
      %v1914 = vadd.f32 0.0, %v1913
      %v1915 = vpop.f32.mrb[0].mxu0
      %v1916 = vpop.f32.mrb[0].mxu0
      %v1917 = vadd.f32 0.0, %v1916
      %v1918 = vpop.f32.mrb[0].mxu0
      %1919 = vmatprep.mubr.bf16.mxu0 %v1314
      %1920 = vmatmul.mubr.bf16.gmra.mrb[0].mxu0 %v1126
      %v1921 = vpop.f32.mrb[0].mxu0
      %v1922 = vadd.f32 0.0, %v1921
      %v1923 = vpop.f32.mrb[0].mxu0
      %v1924 = vpop.f32.mrb[0].mxu0
      %v1925 = vadd.f32 0.0, %v1924
      %v1926 = vpop.f32.mrb[0].mxu0
      %1927 = vmatprep.mubr.bf16.mxu0 %v1317
      %1928 = vmatmul.mubr.bf16.gmra.mrb[0].mxu0 %v1129
      %v1929 = vpop.f32.mrb[0].mxu0
      %v1930 = vadd.f32 0.0, %v1929
      %v1931 = vpop.f32.mrb[0].mxu0
      %v1932 = vpop.f32.mrb[0].mxu0
      %v1933 = vadd.f32 0.0, %v1932
      %v1934 = vpop.f32.mrb[0].mxu0
      %1935 = vmatprep.mubr.bf16.mxu0 %v1320
      %1936 = vmatmul.mubr.bf16.gmra.mrb[0].mxu0 %v1132
      %v1937 = vpop.f32.mrb[0].mxu0
      %v1938 = vadd.f32 0.0, %v1937
      %v1939 = vpop.f32.mrb[0].mxu0
      %v1940 = vpop.f32.mrb[0].mxu0
      %v1941 = vadd.f32 0.0, %v1940
      %v1942 = vpop.f32.mrb[0].mxu0
      %1943 = vmatprep.mubr.bf16.mxu0 %v1323
      %1944 = vmatmul.mubr.bf16.gmra.mrb[0].mxu0 %v1135
      %v1945 = vpop.f32.mrb[0].mxu0
      %v1946 = vadd.f32 0.0, %v1945
      %v1947 = vpop.f32.mrb[0].mxu0
      %v1948 = vpop.f32.mrb[0].mxu0
      %v1949 = vadd.f32 0.0, %v1948
      %v1950 = vpop.f32.mrb[0].mxu0
      %1951 = vmatprep.mubr.bf16.mxu0 %v1326
      %1952 = vmatmul.mubr.bf16.gmra.mrb[0].mxu0 %v1138
      %v1953 = vpop.f32.mrb[0].mxu0
      %v1954 = vadd.f32 0.0, %v1953
      %v1955 = vpop.f32.mrb[0].mxu0
      %v1956 = vpop.f32.mrb[0].mxu0
      %v1957 = vadd.f32 0.0, %v1956
      %v1958 = vpop.f32.mrb[0].mxu0
      %1959 = vmatprep.mubr.bf16.mxu0 %v1329
      %1960 = vmatmul.mubr.bf16.gmra.mrb[0].mxu0 %v1141
      %v1961 = vpop.f32.mrb[0].mxu0
      %v1962 = vadd.f32 0.0, %v1961
      %v1963 = vpop.f32.mrb[0].mxu0
      %v1964 = vpop.f32.mrb[0].mxu0
      %v1965 = vadd.f32 0.0, %v1964
      %v1966 = vpop.f32.mrb[0].mxu0
      %1967 = vmatprep.mubr.bf16.mxu0 %v1332
      %1968 = vmatmul.mubr.bf16.gmra.mrb[0].mxu0 %v1144
      %v1969 = vpop.f32.mrb[0].mxu0
      %v1970 = vadd.f32 0.0, %v1969
      %v1971 = vpop.f32.mrb[0].mxu0
      %v1972 = vpop.f32.mrb[0].mxu0
      %v1973 = vadd.f32 0.0, %v1972
      %v1974 = vpop.f32.mrb[0].mxu0
      %1975 = vmatprep.mubr.bf16.mxu0 %v1335
      %1976 = vmatmul.mubr.bf16.gmra.mrb[0].mxu0 %v1147
      %v1977 = vpop.f32.mrb[0].mxu0
      %v1978 = vadd.f32 0.0, %v1977
      %v1979 = vpop.f32.mrb[0].mxu0
      %v1980 = vpop.f32.mrb[0].mxu0
      %v1981 = vadd.f32 0.0, %v1980
      %v1982 = vpop.f32.mrb[0].mxu0
      %1983 = vmatprep.mubr.bf16.mxu0 %v1338
      %1984 = vmatmul.mubr.bf16.gmra.mrb[0].mxu0 %v1150
      %v1985 = vpop.f32.mrb[0].mxu0
      %v1986 = vadd.f32 0.0, %v1985
      %v1987 = vpop.f32.mrb[0].mxu0
      %v1988 = vpop.f32.mrb[0].mxu0
      %v1989 = vadd.f32 0.0, %v1988
      %v1990 = vpop.f32.mrb[0].mxu0
      %1991 = vmatprep.mubr.bf16.mxu0 %v1341
      %1992 = vmatmul.mubr.bf16.gmra.mrb[0].mxu0 %v1153
      %v1993 = vpop.f32.mrb[0].mxu0
      %v1994 = vadd.f32 0.0, %v1993
      %v1995 = vpop.f32.mrb[0].mxu0
      %v1996 = vpop.f32.mrb[0].mxu0
      %v1997 = vadd.f32 0.0, %v1996
      %v1998 = vpop.f32.mrb[0].mxu0
      %1999 = vmatprep.mubr.bf16.mxu0 %v1344
      %2000 = vmatmul.mubr.bf16.gmra.mrb[0].mxu0 %v1156
      %v2001 = vpop.f32.mrb[0].mxu0
      %v2002 = vadd.f32 0.0, %v2001
      %v2003 = vpop.f32.mrb[0].mxu0
      %v2004 = vpop.f32.mrb[0].mxu0
      %v2005 = vadd.f32 0.0, %v2004
      %v2006 = vpop.f32.mrb[0].mxu0
      %2007 = vmatprep.mubr.bf16.mxu0 %v1347
      %2008 = vmatmul.mubr.bf16.gmra.mrb[0].mxu0 %v1159
      %v2009 = vpop.f32.mrb[0].mxu0
      %v2010 = vadd.f32 0.0, %v2009
      %v2011 = vpop.f32.mrb[0].mxu0
      %v2012 = vpop.f32.mrb[0].mxu0
      %v2013 = vadd.f32 0.0, %v2012
      %v2014 = vpop.f32.mrb[0].mxu0
      %2015 = vmatprep.mubr.bf16.mxu0 %v1350
      %2016 = vmatmul.mubr.bf16.gmra.mrb[0].mxu0 %v1205
      %v2017 = vpop.f32.mrb[0].mxu0
      %v2018 = vadd.f32 0.0, %v2017
      %v2019 = vpop.f32.mrb[0].mxu0
      %v2020 = vpop.f32.mrb[0].mxu0
      %v2021 = vadd.f32 0.0, %v2020
      %v2022 = vpop.f32.mrb[0].mxu0
      %2023 = vmatprep.mubr.bf16.mxu0 %v1869
      %2024 = vmatmul.mubr.bf16.gmra.mrb[0].mxu0 %v1769
      %v2025 = vpop.f32.mrb[0].mxu0
      %v2026 = vadd.f32 0.0, %v2025
      %v2027 = vpop.f32.mrb[0].mxu0
      %v2028 = vpop.f32.mrb[0].mxu0
      %v2029 = vadd.f32 0.0, %v2028
      %v2030 = vpop.f32.mrb[0].mxu0
      %2031 = vdwg.mxu0
      %v2032 = vadd.f32 %v1623, %v1906
      %v2033 = vadd.f32 %v1626, %v1909
      %v2034 = vadd.f32 %v1631, %v1914
      %v2035 = vadd.f32 %v1634, %v1917
      %v2036 = vadd.f32 %v1639, %v1922
      %v2037 = vadd.f32 %v1642, %v1925
      %v2038 = vadd.f32 %v1647, %v1930
      %v2039 = vadd.f32 %v1650, %v1933
      %v2040 = vadd.f32 %v1655, %v1938
      %v2041 = vadd.f32 %v1658, %v1941
      %v2042 = vadd.f32 %v1663, %v1946
      %v2043 = vadd.f32 %v1666, %v1949
      %v2044 = vadd.f32 %v1671, %v1954
      %v2045 = vadd.f32 %v1674, %v1957
      %v2046 = vadd.f32 %v1679, %v1962
      %v2047 = vadd.f32 %v1682, %v1965
      %v2048 = vadd.f32 %v1687, %v1970
      %v2049 = vadd.f32 %v1690, %v1973
      %v2050 = vadd.f32 %v1695, %v1978
      %v2051 = vadd.f32 %v1698, %v1981
      %v2052 = vadd.f32 %v1703, %v1986
      %v2053 = vadd.f32 %v1706, %v1989
      %v2054 = vadd.f32 %v1711, %v1994
      %v2055 = vadd.f32 %v1714, %v1997
      %v2056 = vadd.f32 %v1719, %v2002
      %v2057 = vadd.f32 %v1722, %v2005
      %v2058 = vadd.f32 %v1727, %v2010
      %v2059 = vadd.f32 %v1730, %v2013
      %v2060 = vadd.f32 %v1735, %v2018
      %v2061 = vadd.f32 %v1738, %v2021
      %v2062 = vadd.f32 %v1743, %v2026
      %v2063 = vadd.f32 %v1746, %v2029
      %v2064 = vpack.c.bf16 %v2033, %v2032
      %v2065 = vpack.c.bf16 %v2035, %v2034
      %v2066 = vpack.c.bf16 %v2037, %v2036
      %v2067 = vpack.c.bf16 %v2039, %v2038
      %v2068 = vpack.c.bf16 %v2041, %v2040
      %v2069 = vpack.c.bf16 %v2043, %v2042
      %v2070 = vpack.c.bf16 %v2045, %v2044
      %v2071 = vpack.c.bf16 %v2047, %v2046
      %v2072 = vpack.c.bf16 %v2049, %v2048
      %v2073 = vpack.c.bf16 %v2051, %v2050
      %v2074 = vpack.c.bf16 %v2053, %v2052
      %v2075 = vpack.c.bf16 %v2055, %v2054
      %v2076 = vpack.c.bf16 %v2057, %v2056
      %v2077 = vpack.c.bf16 %v2059, %v2058
      %v2078 = vpack.c.bf16 %v2061, %v2060
      %v2079 = vpack.c.bf16 %v2063, %v2062
      %v2096 = vunpack.c.l.b16 %v2064
      %v2097 = vunpack.c.h.b16 %v2064
      %v2098 = vunpack.c.l.b16 %v2065
      %v2099 = vunpack.c.h.b16 %v2065
      %v2100 = vunpack.c.l.b16 %v2066
      %v2101 = vunpack.c.h.b16 %v2066
      %v2102 = vunpack.c.l.b16 %v2067
      %v2103 = vunpack.c.h.b16 %v2067
      %v2104 = vunpack.c.l.b16 %v2068
      %v2105 = vunpack.c.h.b16 %v2068
      %v2106 = vunpack.c.l.b16 %v2069
      %v2107 = vunpack.c.h.b16 %v2069
      %v2108 = vunpack.c.l.b16 %v2070
      %v2109 = vunpack.c.h.b16 %v2070
      %v2110 = vunpack.c.l.b16 %v2071
      %v2111 = vunpack.c.h.b16 %v2071
      %v2112 = vunpack.c.l.b16 %v2072
      %v2113 = vunpack.c.h.b16 %v2072
      %v2114 = vunpack.c.l.b16 %v2073
      %v2115 = vunpack.c.h.b16 %v2073
      %v2116 = vunpack.c.l.b16 %v2074
      %v2117 = vunpack.c.h.b16 %v2074
      %v2118 = vunpack.c.l.b16 %v2075
      %v2119 = vunpack.c.h.b16 %v2075
      %v2120 = vunpack.c.l.b16 %v2076
      %v2121 = vunpack.c.h.b16 %v2076
      %v2122 = vunpack.c.l.b16 %v2077
      %v2123 = vunpack.c.h.b16 %v2077
      %v2124 = vunpack.c.l.b16 %v2078
      %v2125 = vunpack.c.h.b16 %v2078
      %v2126 = vunpack.c.l.b16 %v2079
      %v2127 = vunpack.c.h.b16 %v2079
      %v2128 = vpack.c.b16 %v2096, %v2096
      %v2129 = vpack.c.b16 %v2097, %v2097
      %v2130 = vpack.c.b16 %v2098, %v2098
      %v2131 = vpack.c.b16 %v2099, %v2099
      %v2132 = vpack.c.b16 %v2100, %v2100
      %v2133 = vpack.c.b16 %v2101, %v2101
      %v2134 = vpack.c.b16 %v2102, %v2102
      %v2135 = vpack.c.b16 %v2103, %v2103
      %v2136 = vpack.c.b16 %v2104, %v2104
      %v2137 = vpack.c.b16 %v2105, %v2105
      %v2138 = vpack.c.b16 %v2106, %v2106
      %v2139 = vpack.c.b16 %v2107, %v2107
      %v2140 = vpack.c.b16 %v2108, %v2108
      %v2141 = vpack.c.b16 %v2109, %v2109
      %v2142 = vpack.c.b16 %v2110, %v2110
      %v2143 = vpack.c.b16 %v2111, %v2111
      %v2144 = vpack.c.b16 %v2112, %v2112
      %v2145 = vpack.c.b16 %v2113, %v2113
      %v2146 = vpack.c.b16 %v2114, %v2114
      %v2147 = vpack.c.b16 %v2115, %v2115
      %v2148 = vpack.c.b16 %v2116, %v2116
      %v2149 = vpack.c.b16 %v2117, %v2117
      %v2150 = vpack.c.b16 %v2118, %v2118
      %v2151 = vpack.c.b16 %v2119, %v2119
      %v2152 = vpack.c.b16 %v2120, %v2120
      %v2153 = vpack.c.b16 %v2121, %v2121
      %v2154 = vpack.c.b16 %v2122, %v2122
      %v2155 = vpack.c.b16 %v2123, %v2123
      %v2156 = vpack.c.b16 %v2124, %v2124
      %v2157 = vpack.c.b16 %v2125, %v2125
      %v2158 = vpack.c.b16 %v2126, %v2126
      %v2159 = vpack.c.b16 %v2127, %v2127
      %2192 = vst [vmem:[%s457] sm:$0xf] %v2128
      %2193 = vst [vmem:[%s457 + $0x4] sm:$0xf] %v2129
      %2194 = vst [vmem:[%s457 + $0x8] sm:$0xf] %v2130
      %2195 = vst [vmem:[%s457 + $0xc] sm:$0xf] %v2131
      %2196 = vst [vmem:[%s457 + $0x10] sm:$0xf] %v2132
      %2197 = vst [vmem:[%s457 + $0x14] sm:$0xf] %v2133
      %2198 = vst [vmem:[%s457 + $0x18] sm:$0xf] %v2134
      %2199 = vst [vmem:[%s457 + $0x1c] sm:$0xf] %v2135
      %2200 = vst [vmem:[%s457 + $0x20] sm:$0xf] %v2136
      %2201 = vst [vmem:[%s457 + $0x24] sm:$0xf] %v2137
      %2202 = vst [vmem:[%s457 + $0x28] sm:$0xf] %v2138
      %2203 = vst [vmem:[%s457 + $0x2c] sm:$0xf] %v2139
      %2204 = vst [vmem:[%s457 + $0x30] sm:$0xf] %v2140
      %2205 = vst [vmem:[%s457 + $0x34] sm:$0xf] %v2141
      %2206 = vst [vmem:[%s457 + $0x38] sm:$0xf] %v2142
      %2207 = vst [vmem:[%s457 + $0x3c] sm:$0xf] %v2143
      %2208 = vst [vmem:[%s457 + $0x40] sm:$0xf] %v2144
      %2209 = vst [vmem:[%s457 + $0x44] sm:$0xf] %v2145
      %2210 = vst [vmem:[%s457 + $0x48] sm:$0xf] %v2146
      %2211 = vst [vmem:[%s457 + $0x4c] sm:$0xf] %v2147
      %2212 = vst [vmem:[%s457 + $0x50] sm:$0xf] %v2148
      %2213 = vst [vmem:[%s457 + $0x54] sm:$0xf] %v2149
      %2214 = vst [vmem:[%s457 + $0x58] sm:$0xf] %v2150
      %2215 = vst [vmem:[%s457 + $0x5c] sm:$0xf] %v2151
      %2216 = vst [vmem:[%s457 + $0x60] sm:$0xf] %v2152
      %2217 = vst [vmem:[%s457 + $0x64] sm:$0xf] %v2153
      %2218 = vst [vmem:[%s457 + $0x68] sm:$0xf] %v2154
      %2219 = vst [vmem:[%s457 + $0x6c] sm:$0xf] %v2155
      %2220 = vst [vmem:[%s457 + $0x70] sm:$0xf] %v2156
      %2221 = vst [vmem:[%s457 + $0x74] sm:$0xf] %v2157
      %2222 = vst [vmem:[%s457 + $0x78] sm:$0xf] %v2158
      %2223 = vst [vmem:[%s457 + $0x7c] sm:$0xf] %v2159
      %v2224 = vadd.f32 %v2032, %v2033
      %v2225 = vadd.f32 %v2224, %v2034
      %v2226 = vadd.f32 %v2225, %v2035
      %v2227 = vadd.f32 %v2226, %v2036
      %v2228 = vadd.f32 %v2227, %v2037
      %v2229 = vadd.f32 %v2228, %v2038
      %v2230 = vadd.f32 %v2229, %v2039
      %v2231 = vadd.f32 %v2230, %v2040
      %v2232 = vadd.f32 %v2231, %v2041
      %v2233 = vadd.f32 %v2232, %v2042
      %v2234 = vadd.f32 %v2233, %v2043
      %v2235 = vadd.f32 %v2234, %v2044
      %v2236 = vadd.f32 %v2235, %v2045
      %v2237 = vadd.f32 %v2236, %v2046
      %v2238 = vadd.f32 %v2237, %v2047
      %v2239 = vadd.f32 %v2238, %v2048
      %v2240 = vadd.f32 %v2239, %v2049
      %v2241 = vadd.f32 %v2240, %v2050
      %v2242 = vadd.f32 %v2241, %v2051
      %v2243 = vadd.f32 %v2242, %v2052
      %v2244 = vadd.f32 %v2243, %v2053
      %v2245 = vadd.f32 %v2244, %v2054
      %v2246 = vadd.f32 %v2245, %v2055
      %v2247 = vadd.f32 %v2246, %v2056
      %v2248 = vadd.f32 %v2247, %v2057
      %v2249 = vadd.f32 %v2248, %v2058
      %v2250 = vadd.f32 %v2249, %v2059
      %v2251 = vadd.f32 %v2250, %v2060
      %v2252 = vadd.f32 %v2251, %v2061
      %v2253 = vadd.f32 %v2252, %v2062
      %v2254 = vadd.f32 %v2253, %v2063
      %v2255 = vrot.slane %v2254, 4
      %v2256 = vadd.f32 %v2254, %v2255
      %v2257 = vrot.slane %v2256, 2
      %v2258 = vadd.f32 %v2256, %v2257
      %v2259 = vrot.slane %v2258, 1
      %v2260 = vadd.f32 %v2258, %v2259
      %v2261 = vmul.f32 %v2032, %v2032
      %v2262 = vmul.f32 %v2033, %v2033
      %v2263 = vmul.f32 %v2034, %v2034
      %v2264 = vmul.f32 %v2035, %v2035
      %v2265 = vmul.f32 %v2036, %v2036
      %v2266 = vmul.f32 %v2037, %v2037
      %v2267 = vmul.f32 %v2038, %v2038
      %v2268 = vmul.f32 %v2039, %v2039
      %v2269 = vmul.f32 %v2040, %v2040
      %v2270 = vmul.f32 %v2041, %v2041
      %v2271 = vmul.f32 %v2042, %v2042
      %v2272 = vmul.f32 %v2043, %v2043
      %v2273 = vmul.f32 %v2044, %v2044
      %v2274 = vmul.f32 %v2045, %v2045
      %v2275 = vmul.f32 %v2046, %v2046
      %v2276 = vmul.f32 %v2047, %v2047
      %v2277 = vmul.f32 %v2048, %v2048
      %v2278 = vmul.f32 %v2049, %v2049
      %v2279 = vmul.f32 %v2050, %v2050
      %v2280 = vmul.f32 %v2051, %v2051
      %v2281 = vmul.f32 %v2052, %v2052
      %v2282 = vmul.f32 %v2053, %v2053
      %v2283 = vmul.f32 %v2054, %v2054
      %v2284 = vmul.f32 %v2055, %v2055
      %v2285 = vmul.f32 %v2056, %v2056
      %v2286 = vmul.f32 %v2057, %v2057
      %v2287 = vmul.f32 %v2058, %v2058
      %v2288 = vmul.f32 %v2059, %v2059
      %v2289 = vmul.f32 %v2060, %v2060
      %v2290 = vmul.f32 %v2061, %v2061
      %v2291 = vmul.f32 %v2062, %v2062
      %v2292 = vmul.f32 %v2063, %v2063
      %v2293 = vadd.f32 %v2261, %v2262
      %v2294 = vadd.f32 %v2293, %v2263
      %v2295 = vadd.f32 %v2294, %v2264
      %v2296 = vadd.f32 %v2295, %v2265
      %v2297 = vadd.f32 %v2296, %v2266
      %v2298 = vadd.f32 %v2297, %v2267
      %v2299 = vadd.f32 %v2298, %v2268
      %v2300 = vadd.f32 %v2299, %v2269
      %v2301 = vadd.f32 %v2300, %v2270
      %v2302 = vadd.f32 %v2301, %v2271
      %v2303 = vadd.f32 %v2302, %v2272
      %v2304 = vadd.f32 %v2303, %v2273
      %v2305 = vadd.f32 %v2304, %v2274
      %v2306 = vadd.f32 %v2305, %v2275
      %v2307 = vadd.f32 %v2306, %v2276
      %v2308 = vadd.f32 %v2307, %v2277
      %v2309 = vadd.f32 %v2308, %v2278
      %v2310 = vadd.f32 %v2309, %v2279
      %v2311 = vadd.f32 %v2310, %v2280
      %v2312 = vadd.f32 %v2311, %v2281
      %v2313 = vadd.f32 %v2312, %v2282
      %v2314 = vadd.f32 %v2313, %v2283
      %v2315 = vadd.f32 %v2314, %v2284
      %v2316 = vadd.f32 %v2315, %v2285
      %v2317 = vadd.f32 %v2316, %v2286
      %v2318 = vadd.f32 %v2317, %v2287
      %v2319 = vadd.f32 %v2318, %v2288
      %v2320 = vadd.f32 %v2319, %v2289
      %v2321 = vadd.f32 %v2320, %v2290
      %v2322 = vadd.f32 %v2321, %v2291
      %v2323 = vadd.f32 %v2322, %v2292
      %v2324 = vrot.slane %v2323, 4
      %v2325 = vadd.f32 %v2323, %v2324
      %v2326 = vrot.slane %v2325, 2
      %v2327 = vadd.f32 %v2325, %v2326
      %v2328 = vrot.slane %v2327, 1
      %v2329 = vadd.f32 %v2327, %v2328
      %vm2330 = vcmask 1040384
      %v2331 = vsel %vm2330, %v2260, %v2329
      %2332 = vst [vmem:[%s465] sm:$0x3] %v2331
      %s2333 = smul.u32 16, %s24
      %p2334 = scmp.lt.s32.totalorder %s23, 1
      %s2335 = scalar_select %p2334, %s23, 1
      %p2336 = scmp.lt.s32.totalorder %s2333, 15
      %s2337 = scalar_select %p2336, %s2333, 15
      %s2338 = smul.addr %s2337, 2
      %s2339 = smul.addr %s2335, 32
      %s2340 = sadd.s32 %s2338, %s2339
      %s2341 = smul.addr %s2340, 4
      %s2342 = scalar_lea.vmem %s6, %s2341
      %p2343 = scmp.lt.s32.totalorder %s23, 1
      %s2344 = scalar_select %p2343, %s23, 1
      %p2345 = scmp.lt.s32.totalorder %s24, 0
      %s2346 = scalar_select %p2345, %s24, 0
      %s2347 = sadd.s32 %s2346, %s2344
      %s2348 = smul.addr %s2347, 2
      %s2349 = scalar_lea.vmem %s7, %s2348
      // Predicated region
      $region45: #{down_forward.3} parent=43 // pred_check
        %p2350 = pneg %p214
      $region46: #{down_forward.3} parent=43 // pred_check_branch
        %2352 = sbr.rel (%p2350) target = $region48
      $region47: #{down_forward.3} parent=43 // pred_region
        %s2353 = smul.u32 16, %s24
      $region48: #{down_forward.3} parent=43 // pred_fallthru
        _
      // Predicated region
      $region49: #{down_forward.3} parent=43 // pred_check
        %p2354 = pneg %p242
      $region50: #{down_forward.3} parent=43 // pred_check_branch
        %2356 = sbr.rel (%p2354) target = $region52
      $region51: #{down_forward.3} parent=43 // pred_region
        _
      $region52: #{down_forward.3} parent=43 // pred_fallthru
        _
    $region44: #{down_forward.3} parent=5 // pred_fallthru
      _
    %p2357 = scmp.le.s32.totalorder 2, %s14
    // Predicated region
    $region53: #{down_forward.3} parent=5 // pred_check
      %p2358 = pneg %p2357
    $region54: #{down_forward.3} parent=5 // pred_check_branch
      %2360 = sbr.rel (%p2358) target = $region56
    $region55: #{down_forward.3} parent=5 // pred_region
      %s2361 = ssub.s32 %s14, 2
      // Predicated region
      $region57: #{down_forward.3} parent=55 // pred_check
        %p2362 = pneg %p220
      $region58: #{down_forward.3} parent=55 // pred_check_branch
        %2364 = sbr.rel (%p2362) target = $region60
      $region59: #{down_forward.3} parent=55 // pred_region
        %s2365 = smul.u32 16, %s26
        %p2366 = scmp.lt.s32.totalorder %s25, 1
        %s2367 = scalar_select %p2366, %s25, 1
        %p2368 = scmp.lt.s32.totalorder %s2365, 15
        %s2369 = scalar_select %p2368, %s2365, 15
        %s2370 = smul.addr %s2369, 2
        %s2371 = smul.addr %s2367, 32
        %s2372 = sadd.s32 %s2370, %s2371
        %s2373 = smul.addr %s2372, 4
        %s2374 = scalar_lea.vmem %s6, %s2373
      $region60: #{down_forward.3} parent=55 // pred_fallthru
        _
      // Predicated region
      $region61: #{down_forward.3} parent=55 // pred_check
        %p2375 = pneg %p248
      $region62: #{down_forward.3} parent=55 // pred_check_branch
        %2377 = sbr.rel (%p2375) target = $region64
      $region63: #{down_forward.3} parent=55 // pred_region
        %p2378 = scmp.lt.s32.totalorder %s25, 1
        %s2379 = scalar_select %p2378, %s25, 1
        %p2380 = scmp.lt.s32.totalorder %s26, 0
        %s2381 = scalar_select %p2380, %s26, 0
        %s2382 = sadd.s32 %s2381, %s2379
        %s2383 = smul.addr %s2382, 2
        %s2384 = scalar_lea.vmem %s7, %s2383
      $region64: #{down_forward.3} parent=55 // pred_fallthru
        _
    $region56: #{down_forward.3} parent=5 // pred_fallthru
      _
  $region6: #{down_forward.3} parent=0 // loop_footer
    %s18 = sadd.s32 1, %s14
  $region7: #{down_forward.3} parent=0 // loop_footer_branch
    %13 = sbr.rel target = $region3
  $region8: #{down_forward.3} parent=0 // loop_exit
    _

// kernel: down_forward.5
$region0: #{down_forward.5}
  #allocation0 [shape = 'u32[]', space=smem, size = 0x4, offset = 0x4, fixed_abs, tag = 'smem constant byte address 0x4 - core index']
  #allocation1 [shape = 'u32[144,128]{1,0:T(1,128)}', space=vmem, size = 0x12000, scoped, tag = 'internal scratch']
  %s0 = inlined_call_operand.vmem [shape: bf16[512,128], index: 0, kind: input, shape index: {}]
  %s1 = inlined_call_operand.vmem [shape: f32[1,128], index: 1, kind: input, shape index: {}]
  %s2 = inlined_call_operand.vmem [shape: f32[1,128], index: 2, kind: input, shape index: {}]
  %s3 = inlined_call_operand.hbm [shape: f32[512,128], index: 3, kind: output, shape index: {}]
  %s4 = sld [smem:[#allocation0]]
  $region45: #{down_forward.5} parent=0
    _
  %s6 = ssub.s32 1, %s4
  %s7 = scalar_select 0, %s6, %s4
  $region1: #{down_forward.5} parent=0
    #allocation2 [shape = 'u8[262144]{0}', space=vmem, size = 0x40000, scoped, tag = 'output window, operand 0']
    #allocation3 [shape = 's32[2]{0}', space=sflag, size = 0x8, scoped, tag = 'scoped memory for down_forward.5']
    %8 = vsyncpa [#allocation3], 0
    %s9 = scalar_lea.sflag [#allocation3], 1
    %10 = vsyncpa %s9, 0
    loop: start=0, step=1, limit=4
    $region2: #{down_forward.5} parent=1 // loop_pre_header
      _
    $region3: #{down_forward.5} parent=1 // loop_header
      %s12 = sphi 0, %s16
      %p13 = scmp.ge.s32.totalorder %s12, 4
      %s22 = sphi 0, %s24
      %s25 = sphi 0, %s22
      %s26 = sphi 0, %s25
      %s42 = sphi 0, %s26
      %s46 = sphi 0, %s46
      %s48 = sphi 0, %s46
      %s49 = sphi 0, %s48
      %s63 = sphi 0, %s49
      %s67 = sphi 0, %s67
      %s69 = sphi 0, %s67
      %s70 = sphi 0, %s69
      %s84 = sphi 0, %s70
      %s90 = sphi 0, %s92
      %s93 = sphi 0, %s90
      %s94 = sphi 0, %s93
      %s110 = sphi 0, %s94
    $region4: #{down_forward.5} parent=1 // loop_header_branch
      %15 = sbr.rel (%p13) target = $region8
    $region5: #{down_forward.5} parent=1 // loop_body
      %s17 = ssub.s32 %s12, 1
      %s18 = ssub.s32 %s12, 2
      %s19 = sadd.s32 %s12, 1
      %s20 = ssub.s32 %s12, %s19
      %p21 = scmp.eq.s32.totalorder %s20, 0
      %s23 = sadd.s32 %s22, 1
      %s24 = scalar_select %p21, %s22, %s23
      %p27 = pneg %p21
      %p28 = scmp.eq.s32.totalorder %s12, 1
      %p29 = por %p27, %p28
      %p30 = scmp.ne.s32.totalorder %s22, %s25
      %p31 = scmp.eq.s32.totalorder %s12, 0
      %p32 = por %p30, %p31
      %p33 = scmp.ne.s32.totalorder %s22, %s25
      %p34 = scmp.eq.s32.totalorder %s17, 1
      %p35 = por %p33, %p34
      %p36 = scmp.ne.s32.totalorder %s25, %s26
      %p37 = scmp.eq.s32.totalorder %s17, 0
      %p38 = por %p36, %p37
      %p39 = scmp.ne.s32.totalorder %s25, %s26
      %p40 = scmp.eq.s32.totalorder %s18, 1
      %p41 = por %p39, %p40
      %p43 = scmp.ne.s32.totalorder %s26, %s42
      %p44 = scmp.eq.s32.totalorder %s18, 0
      %p45 = por %p43, %p44
      %s47 = sadd.s32 %s46, 1
      %p50 = scmp.eq.s32.totalorder %s12, 1
      %p51 = scmp.ne.s32.totalorder %s46, %s48
      %p52 = scmp.eq.s32.totalorder %s12, 0
      %p53 = por %p51, %p52
      %p54 = scmp.ne.s32.totalorder %s46, %s48
      %p55 = scmp.eq.s32.totalorder %s17, 1
      %p56 = por %p54, %p55
      %p57 = scmp.ne.s32.totalorder %s48, %s49
      %p58 = scmp.eq.s32.totalorder %s17, 0
      %p59 = por %p57, %p58
      %p60 = scmp.ne.s32.totalorder %s48, %s49
      %p61 = scmp.eq.s32.totalorder %s18, 1
      %p62 = por %p60, %p61
      %p64 = scmp.ne.s32.totalorder %s49, %s63
      %p65 = scmp.eq.s32.totalorder %s18, 0
      %p66 = por %p64, %p65
      %s68 = sadd.s32 %s67, 1
      %p71 = scmp.eq.s32.totalorder %s12, 1
      %p72 = scmp.ne.s32.totalorder %s67, %s69
      %p73 = scmp.eq.s32.totalorder %s12, 0
      %p74 = por %p72, %p73
      %p75 = scmp.ne.s32.totalorder %s67, %s69
      %p76 = scmp.eq.s32.totalorder %s17, 1
      %p77 = por %p75, %p76
      %p78 = scmp.ne.s32.totalorder %s69, %s70
      %p79 = scmp.eq.s32.totalorder %s17, 0
      %p80 = por %p78, %p79
      %p81 = scmp.ne.s32.totalorder %s69, %s70
      %p82 = scmp.eq.s32.totalorder %s18, 1
      %p83 = por %p81, %p82
      %p85 = scmp.ne.s32.totalorder %s70, %s84
      %p86 = scmp.eq.s32.totalorder %s18, 0
      %p87 = por %p85, %p86
      %s88 = ssub.s32 %s12, %s19
      %p89 = scmp.eq.s32.totalorder %s88, 0
      %s91 = sadd.s32 %s90, 1
      %s92 = scalar_select %p89, %s90, %s91
      %p95 = pneg %p89
      %p96 = scmp.eq.s32.totalorder %s12, 1
      %p97 = por %p95, %p96
      %p98 = scmp.ne.s32.totalorder %s90, %s93
      %p99 = scmp.eq.s32.totalorder %s12, 0
      %p100 = por %p98, %p99
      %p101 = scmp.ne.s32.totalorder %s90, %s93
      %p102 = scmp.eq.s32.totalorder %s17, 1
      %p103 = por %p101, %p102
      %p104 = scmp.ne.s32.totalorder %s93, %s94
      %p105 = scmp.eq.s32.totalorder %s17, 0
      %p106 = por %p104, %p105
      %p107 = scmp.ne.s32.totalorder %s93, %s94
      %p108 = scmp.eq.s32.totalorder %s18, 1
      %p109 = por %p107, %p108
      %p111 = scmp.ne.s32.totalorder %s94, %s110
      %p112 = scmp.eq.s32.totalorder %s18, 0
      %p113 = por %p111, %p112
      %p114 = scmp.le.s32.totalorder 1, %s12
      %p115 = scmp.lt.s32.totalorder %s12, 3
      %p116 = pnand %p114, %p115
      %p117 = pneg %p116
      // Predicated region
      $region9: #{down_forward.5} parent=5 // pred_check
        _
      $region10: #{down_forward.5} parent=5 // pred_check_branch
        %119 = sbr.rel (%p116) target = $region12
      $region11: #{down_forward.5} parent=5 // pred_region
        %s120 = ssub.s32 %s12, 1
        // Predicated region
        $region13: #{down_forward.5} parent=11 // pred_check
          %p121 = pneg %p59
        $region14: #{down_forward.5} parent=11 // pred_check_branch
          %123 = sbr.rel (%p121) target = $region16
        $region15: #{down_forward.5} parent=11 // pred_region
          _
        $region16: #{down_forward.5} parent=11 // pred_fallthru
          _
        // Predicated region
        $region17: #{down_forward.5} parent=11 // pred_check
          %p124 = pneg %p80
        $region18: #{down_forward.5} parent=11 // pred_check_branch
          %126 = sbr.rel (%p124) target = $region20
        $region19: #{down_forward.5} parent=11 // pred_region
          _
        $region20: #{down_forward.5} parent=11 // pred_fallthru
          _
      $region12: #{down_forward.5} parent=5 // pred_fallthru
        _
      %p127 = scmp.lt.s32.totalorder %s12, 2
      // Predicated region
      $region21: #{down_forward.5} parent=5 // pred_check
        %p128 = pneg %p127
      $region22: #{down_forward.5} parent=5 // pred_check_branch
        %130 = sbr.rel (%p128) target = $region24
      $region23: #{down_forward.5} parent=5 // pred_region
        // Predicated region
        $region25: #{down_forward.5} parent=23 // pred_check
          %p131 = pneg %p32
        $region26: #{down_forward.5} parent=23 // pred_check_branch
          %133 = sbr.rel (%p131) target = $region28
        $region27: #{down_forward.5} parent=23 // pred_region
          %s134 = smul.u32 32, %s12
          %p135 = scmp.lt.s32.totalorder %s134, 63
          %s136 = scalar_select %p135, %s134, 63
          %s137 = smul.addr %s136, 4
          %s138 = scalar_lea.vmem %s0, %s137
          %s139 = smul.u32 32, %s12
        $region28: #{down_forward.5} parent=23 // pred_fallthru
          _
      $region24: #{down_forward.5} parent=5 // pred_fallthru
        _
      %p140 = scmp.le.s32.totalorder 1, %s12
      %p141 = scmp.lt.s32.totalorder %s12, 3
      %p142 = pnand %p140, %p141
      %p143 = pneg %p142
      // Predicated region
      $region29: #{down_forward.5} parent=5 // pred_check
        _
      $region30: #{down_forward.5} parent=5 // pred_check_branch
        %145 = sbr.rel (%p142) target = $region32
      $region31: #{down_forward.5} parent=5 // pred_region
        %s146 = ssub.s32 %s12, 1
        %s147 = smul.u32 32, %s17
        %p148 = scmp.lt.s32.totalorder %s147, 63
        %s149 = scalar_select %p148, %s147, 63
        %s150 = smul.addr %s149, 4
        %s151 = scalar_lea.vmem %s0, %s150
        %p152 = pneg %p38
        %p153 = pneg %p35
        %p154 = pneg %p59
        %p155 = pneg %p56
        %p156 = pneg %p80
        %p157 = pneg %p77
        %p158 = pneg %p106
        %p159 = pneg %p103
        %s160 = sand.u32 %s93, 1
        %s161 = scalar_lea.sflag [#allocation3], %s160
        %s162 = sand.u32 %s93, 1
        %s163 = smul.addr %s162, 256
        %s164 = scalar_lea.vmem [#allocation2], %s163
        %s165 = smul.u32 32, %s17
        %p166 = scmp.lt.s32.totalorder %s165, 63
        %s167 = scalar_select %p166, %s165, 63
        %s168 = smul.addr %s167, 4
        %s169 = scalar_lea.vmem %s0, %s168
        %s170 = smul.u32 32, %s17
        %s171 = smul.u32 32, %s17
        %v172 = vld [vmem:[%s169] sm:$0xf]
        %v173 = vld [vmem:[%s169 + $0x4] sm:$0xf]
        %v174 = vld [vmem:[%s169 + $0x8] sm:$0xf]
        %v175 = vld [vmem:[%s169 + $0xc] sm:$0xf]
        %v176 = vld [vmem:[%s169 + $0x10] sm:$0xf]
        %v177 = vld [vmem:[%s169 + $0x14] sm:$0xf]
        %v178 = vld [vmem:[%s169 + $0x18] sm:$0xf]
        %v179 = vld [vmem:[%s169 + $0x1c] sm:$0xf]
        %v180 = vld [vmem:[%s169 + $0x20] sm:$0xf]
        %v181 = vld [vmem:[%s169 + $0x24] sm:$0xf]
        %v182 = vld [vmem:[%s169 + $0x28] sm:$0xf]
        %v183 = vld [vmem:[%s169 + $0x2c] sm:$0xf]
        %v184 = vld [vmem:[%s169 + $0x30] sm:$0xf]
        %v185 = vld [vmem:[%s169 + $0x34] sm:$0xf]
        %v186 = vld [vmem:[%s169 + $0x38] sm:$0xf]
        %v187 = vld [vmem:[%s169 + $0x3c] sm:$0xf]
        %v188 = vld [vmem:[%s169 + $0x40] sm:$0xf]
        %v189 = vld [vmem:[%s169 + $0x44] sm:$0xf]
        %v190 = vld [vmem:[%s169 + $0x48] sm:$0xf]
        %v191 = vld [vmem:[%s169 + $0x4c] sm:$0xf]
        %v192 = vld [vmem:[%s169 + $0x50] sm:$0xf]
        %v193 = vld [vmem:[%s169 + $0x54] sm:$0xf]
        %v194 = vld [vmem:[%s169 + $0x58] sm:$0xf]
        %v195 = vld [vmem:[%s169 + $0x5c] sm:$0xf]
        %v196 = vld [vmem:[%s169 + $0x60] sm:$0xf]
        %v197 = vld [vmem:[%s169 + $0x64] sm:$0xf]
        %v198 = vld [vmem:[%s169 + $0x68] sm:$0xf]
        %v199 = vld [vmem:[%s169 + $0x6c] sm:$0xf]
        %v200 = vld [vmem:[%s169 + $0x70] sm:$0xf]
        %v201 = vld [vmem:[%s169 + $0x74] sm:$0xf]
        %v202 = vld [vmem:[%s169 + $0x78] sm:$0xf]
        %v203 = vld [vmem:[%s169 + $0x7c] sm:$0xf]
        %v204 = vunpack.c.l.bf16 %v172
        %v205 = vunpack.c.l.bf16 %v173
        %v206 = vunpack.c.l.bf16 %v174
        %v207 = vunpack.c.l.bf16 %v175
        %v208 = vunpack.c.l.bf16 %v176
        %v209 = vunpack.c.l.bf16 %v177
        %v210 = vunpack.c.l.bf16 %v178
        %v211 = vunpack.c.l.bf16 %v179
        %v212 = vunpack.c.l.bf16 %v180
        %v213 = vunpack.c.l.bf16 %v181
        %v214 = vunpack.c.l.bf16 %v182
        %v215 = vunpack.c.l.bf16 %v183
        %v216 = vunpack.c.l.bf16 %v184
        %v217 = vunpack.c.l.bf16 %v185
        %v218 = vunpack.c.l.bf16 %v186
        %v219 = vunpack.c.l.bf16 %v187
        %v220 = vunpack.c.l.bf16 %v188
        %v221 = vunpack.c.l.bf16 %v189
        %v222 = vunpack.c.l.bf16 %v190
        %v223 = vunpack.c.l.bf16 %v191
        %v224 = vunpack.c.l.bf16 %v192
        %v225 = vunpack.c.l.bf16 %v193
        %v226 = vunpack.c.l.bf16 %v194
        %v227 = vunpack.c.l.bf16 %v195
        %v228 = vunpack.c.l.bf16 %v196
        %v229 = vunpack.c.l.bf16 %v197
        %v230 = vunpack.c.l.bf16 %v198
        %v231 = vunpack.c.l.bf16 %v199
        %v232 = vunpack.c.l.bf16 %v200
        %v233 = vunpack.c.l.bf16 %v201
        %v234 = vunpack.c.l.bf16 %v202
        %v235 = vunpack.c.l.bf16 %v203
        %v236 = vld [vmem:[%s1] sm:$0x1]
        %v238 = vlaneseq
        %v239 = vshrl.u32 %v238, 7
        %v240 = vsub.s32 0, %v239
        %v241 = vrot.slane %v236, %v240
        %v243 = vmul.f32 %v204, %v241
        %v244 = vmul.f32 %v205, %v241
        %v245 = vmul.f32 %v206, %v241
        %v246 = vmul.f32 %v207, %v241
        %v247 = vmul.f32 %v208, %v241
        %v248 = vmul.f32 %v209, %v241
        %v249 = vmul.f32 %v210, %v241
        %v250 = vmul.f32 %v211, %v241
        %v251 = vmul.f32 %v212, %v241
        %v252 = vmul.f32 %v213, %v241
        %v253 = vmul.f32 %v214, %v241
        %v254 = vmul.f32 %v215, %v241
        %v255 = vmul.f32 %v216, %v241
        %v256 = vmul.f32 %v217, %v241
        %v257 = vmul.f32 %v218, %v241
        %v258 = vmul.f32 %v219, %v241
        %v259 = vmul.f32 %v220, %v241
        %v260 = vmul.f32 %v221, %v241
        %v261 = vmul.f32 %v222, %v241
        %v262 = vmul.f32 %v223, %v241
        %v263 = vmul.f32 %v224, %v241
        %v264 = vmul.f32 %v225, %v241
        %v265 = vmul.f32 %v226, %v241
        %v266 = vmul.f32 %v227, %v241
        %v267 = vmul.f32 %v228, %v241
        %v268 = vmul.f32 %v229, %v241
        %v269 = vmul.f32 %v230, %v241
        %v270 = vmul.f32 %v231, %v241
        %v271 = vmul.f32 %v232, %v241
        %v272 = vmul.f32 %v233, %v241
        %v273 = vmul.f32 %v234, %v241
        %v274 = vmul.f32 %v235, %v241
        %v275 = vld [vmem:[%s2] sm:$0x1]
        %v277 = vlaneseq
        %v278 = vshrl.u32 %v277, 7
        %v279 = vsub.s32 0, %v278
        %v280 = vrot.slane %v275, %v279
        %v282 = vadd.f32 %v243, %v280
        %v283 = vadd.f32 %v244, %v280
        %v284 = vadd.f32 %v245, %v280
        %v285 = vadd.f32 %v246, %v280
        %v286 = vadd.f32 %v247, %v280
        %v287 = vadd.f32 %v248, %v280
        %v288 = vadd.f32 %v249, %v280
        %v289 = vadd.f32 %v250, %v280
        %v290 = vadd.f32 %v251, %v280
        %v291 = vadd.f32 %v252, %v280
        %v292 = vadd.f32 %v253, %v280
        %v293 = vadd.f32 %v254, %v280
        %v294 = vadd.f32 %v255, %v280
        %v295 = vadd.f32 %v256, %v280
        %v296 = vadd.f32 %v257, %v280
        %v297 = vadd.f32 %v258, %v280
        %v298 = vadd.f32 %v259, %v280
        %v299 = vadd.f32 %v260, %v280
        %v300 = vadd.f32 %v261, %v280
        %v301 = vadd.f32 %v262, %v280
        %v302 = vadd.f32 %v263, %v280
        %v303 = vadd.f32 %v264, %v280
        %v304 = vadd.f32 %v265, %v280
        %v305 = vadd.f32 %v266, %v280
        %v306 = vadd.f32 %v267, %v280
        %v307 = vadd.f32 %v268, %v280
        %v308 = vadd.f32 %v269, %v280
        %v309 = vadd.f32 %v270, %v280
        %v310 = vadd.f32 %v271, %v280
        %v311 = vadd.f32 %v272, %v280
        %v312 = vadd.f32 %v273, %v280
        %v313 = vadd.f32 %v274, %v280
        %v314 = vmax.f32 %v282, 0.0
        %v315 = vmax.f32 %v283, 0.0
        %v316 = vmax.f32 %v284, 0.0
        %v317 = vmax.f32 %v285, 0.0
        %v318 = vmax.f32 %v286, 0.0
        %v319 = vmax.f32 %v287, 0.0
        %v320 = vmax.f32 %v288, 0.0
        %v321 = vmax.f32 %v289, 0.0
        %v322 = vmax.f32 %v290, 0.0
        %v323 = vmax.f32 %v291, 0.0
        %v324 = vmax.f32 %v292, 0.0
        %v325 = vmax.f32 %v293, 0.0
        %v326 = vmax.f32 %v294, 0.0
        %v327 = vmax.f32 %v295, 0.0
        %v328 = vmax.f32 %v296, 0.0
        %v329 = vmax.f32 %v297, 0.0
        %v330 = vmax.f32 %v298, 0.0
        %v331 = vmax.f32 %v299, 0.0
        %v332 = vmax.f32 %v300, 0.0
        %v333 = vmax.f32 %v301, 0.0
        %v334 = vmax.f32 %v302, 0.0
        %v335 = vmax.f32 %v303, 0.0
        %v336 = vmax.f32 %v304, 0.0
        %v337 = vmax.f32 %v305, 0.0
        %v338 = vmax.f32 %v306, 0.0
        %v339 = vmax.f32 %v307, 0.0
        %v340 = vmax.f32 %v308, 0.0
        %v341 = vmax.f32 %v309, 0.0
        %v342 = vmax.f32 %v310, 0.0
        %v343 = vmax.f32 %v311, 0.0
        %v344 = vmax.f32 %v312, 0.0
        %v345 = vmax.f32 %v313, 0.0
        %346 = vst [vmem:[%s164] sm:$0xff] %v314
        %347 = vst [vmem:[%s164 + $0x8] sm:$0xff] %v315
        %348 = vst [vmem:[%s164 + $0x10] sm:$0xff] %v316
        %349 = vst [vmem:[%s164 + $0x18] sm:$0xff] %v317
        %350 = vst [vmem:[%s164 + $0x20] sm:$0xff] %v318
        %351 = vst [vmem:[%s164 + $0x28] sm:$0xff] %v319
        %352 = vst [vmem:[%s164 + $0x30] sm:$0xff] %v320
        %353 = vst [vmem:[%s164 + $0x38] sm:$0xff] %v321
        %354 = vst [vmem:[%s164 + $0x40] sm:$0xff] %v322
        %355 = vst [vmem:[%s164 + $0x48] sm:$0xff] %v323
        %356 = vst [vmem:[%s164 + $0x50] sm:$0xff] %v324
        %357 = vst [vmem:[%s164 + $0x58] sm:$0xff] %v325
        %358 = vst [vmem:[%s164 + $0x60] sm:$0xff] %v326
        %359 = vst [vmem:[%s164 + $0x68] sm:$0xff] %v327
        %360 = vst [vmem:[%s164 + $0x70] sm:$0xff] %v328
        %361 = vst [vmem:[%s164 + $0x78] sm:$0xff] %v329
        %362 = vst [vmem:[%s164 + $0x80] sm:$0xff] %v330
        %363 = vst [vmem:[%s164 + $0x88] sm:$0xff] %v331
        %364 = vst [vmem:[%s164 + $0x90] sm:$0xff] %v332
        %365 = vst [vmem:[%s164 + $0x98] sm:$0xff] %v333
        %366 = vst [vmem:[%s164 + $0xa0] sm:$0xff] %v334
        %367 = vst [vmem:[%s164 + $0xa8] sm:$0xff] %v335
        %368 = vst [vmem:[%s164 + $0xb0] sm:$0xff] %v336
        %369 = vst [vmem:[%s164 + $0xb8] sm:$0xff] %v337
        %370 = vst [vmem:[%s164 + $0xc0] sm:$0xff] %v338
        %371 = vst [vmem:[%s164 + $0xc8] sm:$0xff] %v339
        %372 = vst [vmem:[%s164 + $0xd0] sm:$0xff] %v340
        %373 = vst [vmem:[%s164 + $0xd8] sm:$0xff] %v341
        %374 = vst [vmem:[%s164 + $0xe0] sm:$0xff] %v342
        %375 = vst [vmem:[%s164 + $0xe8] sm:$0xff] %v343
        %376 = vst [vmem:[%s164 + $0xf0] sm:$0xff] %v344
        %377 = vst [vmem:[%s164 + $0xf8] sm:$0xff] %v345
        %s378 = sand.u32 %s93, 1
        %s379 = scalar_lea.sflag [#allocation3], %s378
        %s380 = sand.u32 %s93, 1
        %s381 = smul.addr %s380, 256
        %s382 = scalar_lea.vmem [#allocation2], %s381
        // Predicated region
        $region33: #{down_forward.5} parent=31 // pred_check
          %p383 = pneg %p103
        $region34: #{down_forward.5} parent=31 // pred_check_branch
          %385 = sbr.rel (%p383) target = $region36
        $region35: #{down_forward.5} parent=31 // pred_region
          %s386 = smul.u32 32, %s17
          %s388 = ssub.s32 4096, 4096
          %389 = vsyncadd %s379, %s388
          %s390 = smul.addr %s386, 128
          %s391 = scalar_lea.hbm %s3, %s390
          %s392 = sshll.u32 %s382, 4
          %s393 = int_to_ptr.vmem [resolvable:$true] %s392
          %398 = dma.vmem_to_hbm [thread:$0]  %s393, 4096, %s391, %s379, 128, 128, 8
        $region36: #{down_forward.5} parent=31 // pred_fallthru
          _
      $region32: #{down_forward.5} parent=5 // pred_fallthru
        _
      %p399 = scmp.le.s32.totalorder 2, %s12
      // Predicated region
      $region37: #{down_forward.5} parent=5 // pred_check
        %p400 = pneg %p399
      $region38: #{down_forward.5} parent=5 // pred_check_branch
        %402 = sbr.rel (%p400) target = $region40
      $region39: #{down_forward.5} parent=5 // pred_region
        %s403 = ssub.s32 %s12, 2
        // Predicated region
        $region41: #{down_forward.5} parent=39 // pred_check
          %p404 = pneg %p109
        $region42: #{down_forward.5} parent=39 // pred_check_branch
          %406 = sbr.rel (%p404) target = $region44
        $region43: #{down_forward.5} parent=39 // pred_region
          %s407 = sand.u32 %s94, 1
          %s408 = scalar_lea.sflag [#allocation3], %s407
          %s409 = sand.u32 %s94, 1
          %s410 = smul.addr %s409, 256
          %s411 = scalar_lea.vmem [#allocation2], %s410
          %412 = dma.done %s408, 4096
        $region44: #{down_forward.5} parent=39 // pred_fallthru
          _
      $region40: #{down_forward.5} parent=5 // pred_fallthru
        _
    $region6: #{down_forward.5} parent=1 // loop_footer
      %s16 = sadd.s32 1, %s12
    $region7: #{down_forward.5} parent=1 // loop_footer_branch
      %11 = sbr.rel target = $region3
    $region8: #{down_forward.5} parent=1 // loop_exit
      _
    %413 = vsyncpa [#allocation3], 1
    %s414 = scalar_lea.sflag [#allocation3], 1
    %415 = vsyncpa %s414, 1

// kernel: down_forward.4
$region0: #{down_forward.4}
  #allocation0 [shape = 'u32[]', space=smem, size = 0x4, offset = 0x4, fixed_abs, tag = 'smem constant byte address 0x4 - core index']
  #allocation1 [shape = 'u32[144,128]{1,0:T(1,128)}', space=vmem, size = 0x12000, scoped, tag = 'internal scratch']
  %s0 = inlined_call_operand.vmem [shape: bf16[2,16,16,128], index: 0, kind: input, shape index: {}, may-alias: {0,1,2}]
  %s1 = inlined_call_operand.vmem [shape: bf16[2,16,16,128], index: 1, kind: input, shape index: {}, may-alias: {0,1,2}]
  %s2 = inlined_call_operand.vmem [shape: bf16[2,16,16,128], index: 2, kind: input, shape index: {}, may-alias: {0,1,2}]
  %s3 = inlined_call_operand.vmem [shape: bf16[3,384,128], index: 3, kind: input, shape index: {}]
  %s4 = inlined_call_operand.vmem [shape: f32[1,128], index: 4, kind: input, shape index: {}]
  %s5 = inlined_call_operand.vmem [shape: f32[1,128], index: 5, kind: input, shape index: {}]
  %s6 = inlined_call_operand.vmem [shape: bf16[2,16,16,128], index: 6, kind: output, shape index: {0}]
  %s7 = inlined_call_operand.vmem [shape: f32[2,1,2,128], index: 7, kind: output, shape index: {1}]
  %8 = xla_tuple %s6, %s7
  %s9 = sld [smem:[#allocation0]]
  $region65: #{down_forward.4} parent=0
    _
  %s11 = ssub.s32 1, %s9
  %s12 = scalar_select 0, %s11, %s9
  loop: start=0, step=1, limit=4
  $region2: #{down_forward.4} parent=0 // loop_pre_header
    _
  $region3: #{down_forward.4} parent=0 // loop_header
    %s14 = sphi 0, %s18
    %p15 = scmp.ge.s32.totalorder %s14, 4
    %s21 = sphi 0, %s33
    %s22 = sphi 0, %s29
    %s23 = sphi 0, %s21
    %s24 = sphi 0, %s22
    %s25 = sphi 0, %s23
    %s26 = sphi 0, %s24
    %s46 = sphi 0, %s48
    %s49 = sphi 0, %s46
    %s50 = sphi 0, %s49
    %s66 = sphi 0, %s50
    %s74 = sphi 0, %s76
    %s77 = sphi 0, %s74
    %s78 = sphi 0, %s77
    %s94 = sphi 0, %s78
    %s110 = sphi 0, %s112
    %s113 = sphi 0, %s110
    %s114 = sphi 0, %s113
    %s130 = sphi 0, %s114
    %s134 = sphi 0, %s134
    %s136 = sphi 0, %s134
    %s137 = sphi 0, %s136
    %s151 = sphi 0, %s137
    %s155 = sphi 0, %s155
    %s157 = sphi 0, %s155
    %s158 = sphi 0, %s157
    %s172 = sphi 0, %s158
    %s176 = sphi 0, %s176
    %s178 = sphi 0, %s176
    %s179 = sphi 0, %s178
    %s193 = sphi 0, %s179
    %s201 = sphi 0, %s203
    %s204 = sphi 0, %s201
    %s205 = sphi 0, %s204
    %s221 = sphi 0, %s205
    %s229 = sphi 0, %s231
    %s232 = sphi 0, %s229
    %s233 = sphi 0, %s232
    %s249 = sphi 0, %s233
  $region4: #{down_forward.4} parent=0 // loop_header_branch
    %17 = sbr.rel (%p15) target = $region8
  $region5: #{down_forward.4} parent=0 // loop_body
    %s19 = ssub.s32 %s14, 1
    %s20 = ssub.s32 %s14, 2
    %s27 = sadd.s32 1, %s22
    %p28 = scmp.ge.s32.totalorder %s27, 1
    %s29 = scalar_select %p28, 0, %s27
    %s30 = sadd.s32 1, %s21
    %s31 = scalar_select %p28, %s30, %s21
    %p32 = scmp.ge.s32.totalorder %s31, 2
    %s33 = scalar_select %p32, 0, %s31
    %s34 = smul.u32 %s22, 16
    %s35 = ssub.s32 %s34, 1
    %p36 = scmp.gt.s32.totalorder %s35, 0
    %s37 = scalar_select %p36, %s35, 0
    %s38 = smul.u32 %s29, 16
    %s39 = ssub.s32 %s38, 1
    %p40 = scmp.gt.s32.totalorder %s39, 0
    %s41 = scalar_select %p40, %s39, 0
    %s42 = ssub.s32 %s21, %s33
    %s43 = ssub.s32 %s37, %s41
    %s44 = sor.u32 %s42, %s43
    %p45 = scmp.eq.s32.totalorder %s44, 0
    %s47 = sadd.s32 %s46, 1
    %s48 = scalar_select %p45, %s46, %s47
    %p51 = pneg %p45
    %p52 = scmp.eq.s32.totalorder %s14, 1
    %p53 = por %p51, %p52
    %p54 = scmp.ne.s32.totalorder %s46, %s49
    %p55 = scmp.eq.s32.totalorder %s14, 0
    %p56 = por %p54, %p55
    %p57 = scmp.ne.s32.totalorder %s46, %s49
    %p58 = scmp.eq.s32.totalorder %s19, 1
    %p59 = por %p57, %p58
    %p60 = scmp.ne.s32.totalorder %s49, %s50
    %p61 = scmp.eq.s32.totalorder %s19, 0
    %p62 = por %p60, %p61
    %p63 = scmp.ne.s32.totalorder %s49, %s50
    %p64 = scmp.eq.s32.totalorder %s20, 1
    %p65 = por %p63, %p64
    %p67 = scmp.ne.s32.totalorder %s50, %s66
    %p68 = scmp.eq.s32.totalorder %s20, 0
    %p69 = por %p67, %p68
    %s70 = ssub.s32 %s21, %s33
    %s71 = ssub.s32 %s22, %s29
    %s72 = sor.u32 %s70, %s71
    %p73 = scmp.eq.s32.totalorder %s72, 0
    %s75 = sadd.s32 %s74, 1
    %s76 = scalar_select %p73, %s74, %s75
    %p79 = pneg %p73
    %p80 = scmp.eq.s32.totalorder %s14, 1
    %p81 = por %p79, %p80
    %p82 = scmp.ne.s32.totalorder %s74, %s77
    %p83 = scmp.eq.s32.totalorder %s14, 0
    %p84 = por %p82, %p83
    %p85 = scmp.ne.s32.totalorder %s74, %s77
    %p86 = scmp.eq.s32.totalorder %s19, 1
    %p87 = por %p85, %p86
    %p88 = scmp.ne.s32.totalorder %s77, %s78
    %p89 = scmp.eq.s32.totalorder %s19, 0
    %p90 = por %p88, %p89
    %p91 = scmp.ne.s32.totalorder %s77, %s78
    %p92 = scmp.eq.s32.totalorder %s20, 1
    %p93 = por %p91, %p92
    %p95 = scmp.ne.s32.totalorder %s78, %s94
    %p96 = scmp.eq.s32.totalorder %s20, 0
    %p97 = por %p95, %p96
    %s98 = sadd.s32 %s22, 1
    %s99 = smul.u32 %s98, 16
    %p100 = scmp.lt.s32.totalorder %s99, 15
    %s101 = scalar_select %p100, %s99, 15
    %s102 = sadd.s32 %s29, 1
    %s103 = smul.u32 %s102, 16
    %p104 = scmp.lt.s32.totalorder %s103, 15
    %s105 = scalar_select %p104, %s103, 15
    %s106 = ssub.s32 %s21, %s33
    %s107 = ssub.s32 %s101, %s105
    %s108 = sor.u32 %s106, %s107
    %p109 = scmp.eq.s32.totalorder %s108, 0
    %s111 = sadd.s32 %s110, 1
    %s112 = scalar_select %p109, %s110, %s111
    %p115 = pneg %p109
    %p116 = scmp.eq.s32.totalorder %s14, 1
    %p117 = por %p115, %p116
    %p118 = scmp.ne.s32.totalorder %s110, %s113
    %p119 = scmp.eq.s32.totalorder %s14, 0
    %p120 = por %p118, %p119
    %p121 = scmp.ne.s32.totalorder %s110, %s113
    %p122 = scmp.eq.s32.totalorder %s19, 1
    %p123 = por %p121, %p122
    %p124 = scmp.ne.s32.totalorder %s113, %s114
    %p125 = scmp.eq.s32.totalorder %s19, 0
    %p126 = por %p124, %p125
    %p127 = scmp.ne.s32.totalorder %s113, %s114
    %p128 = scmp.eq.s32.totalorder %s20, 1
    %p129 = por %p127, %p128
    %p131 = scmp.ne.s32.totalorder %s114, %s130
    %p132 = scmp.eq.s32.totalorder %s20, 0
    %p133 = por %p131, %p132
    %s135 = sadd.s32 %s134, 1
    %p138 = scmp.eq.s32.totalorder %s14, 1
    %p139 = scmp.ne.s32.totalorder %s134, %s136
    %p140 = scmp.eq.s32.totalorder %s14, 0
    %p141 = por %p139, %p140
    %p142 = scmp.ne.s32.totalorder %s134, %s136
    %p143 = scmp.eq.s32.totalorder %s19, 1
    %p144 = por %p142, %p143
    %p145 = scmp.ne.s32.totalorder %s136, %s137
    %p146 = scmp.eq.s32.totalorder %s19, 0
    %p147 = por %p145, %p146
    %p148 = scmp.ne.s32.totalorder %s136, %s137
    %p149 = scmp.eq.s32.totalorder %s20, 1
    %p150 = por %p148, %p149
    %p152 = scmp.ne.s32.totalorder %s137, %s151
    %p153 = scmp.eq.s32.totalorder %s20, 0
    %p154 = por %p152, %p153
    %s156 = sadd.s32 %s155, 1
    %p159 = scmp.eq.s32.totalorder %s14, 1
    %p160 = scmp.ne.s32.totalorder %s155, %s157
    %p161 = scmp.eq.s32.totalorder %s14, 0
    %p162 = por %p160, %p161
    %p163 = scmp.ne.s32.totalorder %s155, %s157
    %p164 = scmp.eq.s32.totalorder %s19, 1
    %p165 = por %p163, %p164
    %p166 = scmp.ne.s32.totalorder %s157, %s158
    %p167 = scmp.eq.s32.totalorder %s19, 0
    %p168 = por %p166, %p167
    %p169 = scmp.ne.s32.totalorder %s157, %s158
    %p170 = scmp.eq.s32.totalorder %s20, 1
    %p171 = por %p169, %p170
    %p173 = scmp.ne.s32.totalorder %s158, %s172
    %p174 = scmp.eq.s32.totalorder %s20, 0
    %p175 = por %p173, %p174
    %s177 = sadd.s32 %s176, 1
    %p180 = scmp.eq.s32.totalorder %s14, 1
    %p181 = scmp.ne.s32.totalorder %s176, %s178
    %p182 = scmp.eq.s32.totalorder %s14, 0
    %p183 = por %p181, %p182
    %p184 = scmp.ne.s32.totalorder %s176, %s178
    %p185 = scmp.eq.s32.totalorder %s19, 1
    %p186 = por %p184, %p185
    %p187 = scmp.ne.s32.totalorder %s178, %s179
    %p188 = scmp.eq.s32.totalorder %s19, 0
    %p189 = por %p187, %p188
    %p190 = scmp.ne.s32.totalorder %s178, %s179
    %p191 = scmp.eq.s32.totalorder %s20, 1
    %p192 = por %p190, %p191
    %p194 = scmp.ne.s32.totalorder %s179, %s193
    %p195 = scmp.eq.s32.totalorder %s20, 0
    %p196 = por %p194, %p195
    %s197 = ssub.s32 %s21, %s33
    %s198 = ssub.s32 %s22, %s29
    %s199 = sor.u32 %s197, %s198
    %p200 = scmp.eq.s32.totalorder %s199, 0
    %s202 = sadd.s32 %s201, 1
    %s203 = scalar_select %p200, %s201, %s202
    %p206 = pneg %p200
    %p207 = scmp.eq.s32.totalorder %s14, 1
    %p208 = por %p206, %p207
    %p209 = scmp.ne.s32.totalorder %s201, %s204
    %p210 = scmp.eq.s32.totalorder %s14, 0
    %p211 = por %p209, %p210
    %p212 = scmp.ne.s32.totalorder %s201, %s204
    %p213 = scmp.eq.s32.totalorder %s19, 1
    %p214 = por %p212, %p213
    %p215 = scmp.ne.s32.totalorder %s204, %s205
    %p216 = scmp.eq.s32.totalorder %s19, 0
    %p217 = por %p215, %p216
    %p218 = scmp.ne.s32.totalorder %s204, %s205
    %p219 = scmp.eq.s32.totalorder %s20, 1
    %p220 = por %p218, %p219
    %p222 = scmp.ne.s32.totalorder %s205, %s221
    %p223 = scmp.eq.s32.totalorder %s20, 0
    %p224 = por %p222, %p223
    %s225 = ssub.s32 %s21, %s33
    %s226 = ssub.s32 %s22, %s29
    %s227 = sor.u32 %s225, %s226
    %p228 = scmp.eq.s32.totalorder %s227, 0
    %s230 = sadd.s32 %s229, 1
    %s231 = scalar_select %p228, %s229, %s230
    %p234 = pneg %p228
    %p235 = scmp.eq.s32.totalorder %s14, 1
    %p236 = por %p234, %p235
    %p237 = scmp.ne.s32.totalorder %s229, %s232
    %p238 = scmp.eq.s32.totalorder %s14, 0
    %p239 = por %p237, %p238
    %p240 = scmp.ne.s32.totalorder %s229, %s232
    %p241 = scmp.eq.s32.totalorder %s19, 1
    %p242 = por %p240, %p241
    %p243 = scmp.ne.s32.totalorder %s232, %s233
    %p244 = scmp.eq.s32.totalorder %s19, 0
    %p245 = por %p243, %p244
    %p246 = scmp.ne.s32.totalorder %s232, %s233
    %p247 = scmp.eq.s32.totalorder %s20, 1
    %p248 = por %p246, %p247
    %p250 = scmp.ne.s32.totalorder %s233, %s249
    %p251 = scmp.eq.s32.totalorder %s20, 0
    %p252 = por %p250, %p251
    %p253 = scmp.le.s32.totalorder 1, %s14
    %p254 = scmp.lt.s32.totalorder %s14, 3
    %p255 = pnand %p253, %p254
    %p256 = pneg %p255
    // Predicated region
    $region9: #{down_forward.4} parent=5 // pred_check
      _
    $region10: #{down_forward.4} parent=5 // pred_check_branch
      %258 = sbr.rel (%p255) target = $region12
    $region11: #{down_forward.4} parent=5 // pred_region
      %s259 = ssub.s32 %s14, 1
      // Predicated region
      $region13: #{down_forward.4} parent=11 // pred_check
        %p260 = pneg %p147
      $region14: #{down_forward.4} parent=11 // pred_check_branch
        %262 = sbr.rel (%p260) target = $region16
      $region15: #{down_forward.4} parent=11 // pred_region
        _
      $region16: #{down_forward.4} parent=11 // pred_fallthru
        _
      // Predicated region
      $region17: #{down_forward.4} parent=11 // pred_check
        %p263 = pneg %p168
      $region18: #{down_forward.4} parent=11 // pred_check_branch
        %265 = sbr.rel (%p263) target = $region20
      $region19: #{down_forward.4} parent=11 // pred_region
        _
      $region20: #{down_forward.4} parent=11 // pred_fallthru
        _
      // Predicated region
      $region21: #{down_forward.4} parent=11 // pred_check
        %p266 = pneg %p189
      $region22: #{down_forward.4} parent=11 // pred_check_branch
        %268 = sbr.rel (%p266) target = $region24
      $region23: #{down_forward.4} parent=11 // pred_region
        _
      $region24: #{down_forward.4} parent=11 // pred_fallthru
        _
    $region12: #{down_forward.4} parent=5 // pred_fallthru
      _
    %p269 = scmp.lt.s32.totalorder %s14, 2
    // Predicated region
    $region25: #{down_forward.4} parent=5 // pred_check
      %p270 = pneg %p269
    $region26: #{down_forward.4} parent=5 // pred_check_branch
      %272 = sbr.rel (%p270) target = $region28
    $region27: #{down_forward.4} parent=5 // pred_region
      // Predicated region
      $region29: #{down_forward.4} parent=27 // pred_check
        %p273 = pneg %p56
      $region30: #{down_forward.4} parent=27 // pred_check_branch
        %275 = sbr.rel (%p273) target = $region32
      $region31: #{down_forward.4} parent=27 // pred_region
        %s276 = smul.u32 %s22, 16
        %s277 = ssub.s32 %s276, 1
        %p278 = scmp.gt.s32.totalorder %s277, 0
        %s279 = scalar_select %p278, %s277, 0
        %p280 = scmp.lt.s32.totalorder %s21, 1
        %s281 = scalar_select %p280, %s21, 1
        %p282 = scmp.lt.s32.totalorder %s279, 15
        %s283 = scalar_select %p282, %s279, 15
        %s284 = smul.addr %s283, 2
        %s285 = smul.addr %s281, 32
        %s286 = sadd.s32 %s284, %s285
        %s287 = smul.addr %s286, 4
        %s288 = scalar_lea.vmem %s0, %s287
        %s289 = smul.u32 %s22, 16
        %s290 = ssub.s32 %s289, 1
        %p291 = scmp.gt.s32.totalorder %s290, 0
        %s292 = scalar_select %p291, %s290, 0
      $region32: #{down_forward.4} parent=27 // pred_fallthru
        _
      // Predicated region
      $region33: #{down_forward.4} parent=27 // pred_check
        %p293 = pneg %p84
      $region34: #{down_forward.4} parent=27 // pred_check_branch
        %295 = sbr.rel (%p293) target = $region36
      $region35: #{down_forward.4} parent=27 // pred_region
        %s296 = smul.u32 16, %s22
        %p297 = scmp.lt.s32.totalorder %s21, 1
        %s298 = scalar_select %p297, %s21, 1
        %p299 = scmp.lt.s32.totalorder %s296, 15
        %s300 = scalar_select %p299, %s296, 15
        %s301 = smul.addr %s300, 2
        %s302 = smul.addr %s298, 32
        %s303 = sadd.s32 %s301, %s302
        %s304 = smul.addr %s303, 4
        %s305 = scalar_lea.vmem %s1, %s304
        %s306 = smul.u32 16, %s22
      $region36: #{down_forward.4} parent=27 // pred_fallthru
        _
      // Predicated region
      $region37: #{down_forward.4} parent=27 // pred_check
        %p307 = pneg %p120
      $region38: #{down_forward.4} parent=27 // pred_check_branch
        %309 = sbr.rel (%p307) target = $region40
      $region39: #{down_forward.4} parent=27 // pred_region
        %s310 = sadd.s32 %s22, 1
        %s311 = smul.u32 %s310, 16
        %p312 = scmp.lt.s32.totalorder %s311, 15
        %s313 = scalar_select %p312, %s311, 15
        %p314 = scmp.lt.s32.totalorder %s21, 1
        %s315 = scalar_select %p314, %s21, 1
        %p316 = scmp.lt.s32.totalorder %s313, 15
        %s317 = scalar_select %p316, %s313, 15
        %s318 = smul.addr %s317, 2
        %s319 = smul.addr %s315, 32
        %s320 = sadd.s32 %s318, %s319
        %s321 = smul.addr %s320, 4
        %s322 = scalar_lea.vmem %s2, %s321
        %s323 = sadd.s32 %s22, 1
        %s324 = smul.u32 %s323, 16
        %p325 = scmp.lt.s32.totalorder %s324, 15
        %s326 = scalar_select %p325, %s324, 15
      $region40: #{down_forward.4} parent=27 // pred_fallthru
        _
    $region28: #{down_forward.4} parent=5 // pred_fallthru
      _
    %p327 = scmp.le.s32.totalorder 1, %s14
    %p328 = scmp.lt.s32.totalorder %s14, 3
    %p329 = pnand %p327, %p328
    %p330 = pneg %p329
    // Predicated region
    $region41: #{down_forward.4} parent=5 // pred_check
      _
    $region42: #{down_forward.4} parent=5 // pred_check_branch
      %332 = sbr.rel (%p329) target = $region44
    $region43: #{down_forward.4} parent=5 // pred_region
      %s333 = ssub.s32 %s14, 1
      %s334 = smul.u32 %s24, 16
      %s335 = ssub.s32 %s334, 1
      %p336 = scmp.gt.s32.totalorder %s335, 0
      %s337 = scalar_select %p336, %s335, 0
      %p338 = scmp.lt.s32.totalorder %s23, 1
      %s339 = scalar_select %p338, %s23, 1
      %p340 = scmp.lt.s32.totalorder %s337, 15
      %s341 = scalar_select %p340, %s337, 15
      %s342 = smul.addr %s341, 2
      %s343 = smul.addr %s339, 32
      %s344 = sadd.s32 %s342, %s343
      %s345 = smul.addr %s344, 4
      %s346 = scalar_lea.vmem %s0, %s345
      %p347 = pneg %p62
      %p348 = pneg %p59
      %s349 = smul.u32 16, %s24
      %p350 = scmp.lt.s32.totalorder %s23, 1
      %s351 = scalar_select %p350, %s23, 1
      %p352 = scmp.lt.s32.totalorder %s349, 15
      %s353 = scalar_select %p352, %s349, 15
      %s354 = smul.addr %s353, 2
      %s355 = smul.addr %s351, 32
      %s356 = sadd.s32 %s354, %s355
      %s357 = smul.addr %s356, 4
      %s358 = scalar_lea.vmem %s1, %s357
      %p359 = pneg %p90
      %p360 = pneg %p87
      %s361 = sadd.s32 %s24, 1
      %s362 = smul.u32 %s361, 16
      %p363 = scmp.lt.s32.totalorder %s362, 15
      %s364 = scalar_select %p363, %s362, 15
      %p365 = scmp.lt.s32.totalorder %s23, 1
      %s366 = scalar_select %p365, %s23, 1
      %p367 = scmp.lt.s32.totalorder %s364, 15
      %s368 = scalar_select %p367, %s364, 15
      %s369 = smul.addr %s368, 2
      %s370 = smul.addr %s366, 32
      %s371 = sadd.s32 %s369, %s370
      %s372 = smul.addr %s371, 4
      %s373 = scalar_lea.vmem %s2, %s372
      %p374 = pneg %p126
      %p375 = pneg %p123
      %p376 = pneg %p147
      %p377 = pneg %p144
      %p378 = pneg %p168
      %p379 = pneg %p165
      %p380 = pneg %p189
      %p381 = pneg %p186
      %p382 = pneg %p217
      %p383 = pneg %p214
      %s384 = smul.u32 16, %s24
      %p385 = scmp.lt.s32.totalorder %s23, 1
      %s386 = scalar_select %p385, %s23, 1
      %p387 = scmp.lt.s32.totalorder %s384, 15
      %s388 = scalar_select %p387, %s384, 15
      %s389 = smul.addr %s388, 2
      %s390 = smul.addr %s386, 32
      %s391 = sadd.s32 %s389, %s390
      %s392 = smul.addr %s391, 4
      %s393 = scalar_lea.vmem %s6, %s392
      %p394 = pneg %p245
      %p395 = pneg %p242
      %p396 = scmp.lt.s32.totalorder %s23, 1
      %s397 = scalar_select %p396, %s23, 1
      %p398 = scmp.lt.s32.totalorder %s24, 0
      %s399 = scalar_select %p398, %s24, 0
      %s400 = sadd.s32 %s399, %s397
      %s401 = smul.addr %s400, 2
      %s402 = scalar_lea.vmem %s7, %s401
      %s403 = smul.u32 %s24, 16
      %s404 = ssub.s32 %s403, 1
      %p405 = scmp.gt.s32.totalorder %s404, 0
      %s406 = scalar_select %p405, %s404, 0
      %p407 = scmp.lt.s32.totalorder %s23, 1
      %s408 = scalar_select %p407, %s23, 1
      %p409 = scmp.lt.s32.totalorder %s406, 15
      %s410 = scalar_select %p409, %s406, 15
      %s411 = smul.addr %s410, 2
      %s412 = smul.addr %s408, 32
      %s413 = sadd.s32 %s411, %s412
      %s414 = smul.addr %s413, 4
      %s415 = scalar_lea.vmem %s0, %s414
      %s416 = smul.u32 %s24, 16
      %s417 = ssub.s32 %s416, 1
      %p418 = scmp.gt.s32.totalorder %s417, 0
      %s419 = scalar_select %p418, %s417, 0
      %s420 = smul.u32 16, %s24
      %p421 = scmp.lt.s32.totalorder %s23, 1
      %s422 = scalar_select %p421, %s23, 1
      %p423 = scmp.lt.s32.totalorder %s420, 15
      %s424 = scalar_select %p423, %s420, 15
      %s425 = smul.addr %s424, 2
      %s426 = smul.addr %s422, 32
      %s427 = sadd.s32 %s425, %s426
      %s428 = smul.addr %s427, 4
      %s429 = scalar_lea.vmem %s1, %s428
      %s430 = smul.u32 16, %s24
      %s431 = sadd.s32 %s24, 1
      %s432 = smul.u32 %s431, 16
      %p433 = scmp.lt.s32.totalorder %s432, 15
      %s434 = scalar_select %p433, %s432, 15
      %p435 = scmp.lt.s32.totalorder %s23, 1
      %s436 = scalar_select %p435, %s23, 1
      %p437 = scmp.lt.s32.totalorder %s434, 15
      %s438 = scalar_select %p437, %s434, 15
      %s439 = smul.addr %s438, 2
      %s440 = smul.addr %s436, 32
      %s441 = sadd.s32 %s439, %s440
      %s442 = smul.addr %s441, 4
      %s443 = scalar_lea.vmem %s2, %s442
      %s444 = sadd.s32 %s24, 1
      %s445 = smul.u32 %s444, 16
      %p446 = scmp.lt.s32.totalorder %s445, 15
      %s447 = scalar_select %p446, %s445, 15
      %s448 = smul.u32 16, %s24
      %p449 = scmp.lt.s32.totalorder %s23, 1
      %s450 = scalar_select %p449, %s23, 1
      %p451 = scmp.lt.s32.totalorder %s448, 15
      %s452 = scalar_select %p451, %s448, 15
      %s453 = smul.addr %s452, 2
      %s454 = smul.addr %s450, 32
      %s455 = sadd.s32 %s453, %s454
      %s456 = smul.addr %s455, 4
      %s457 = scalar_lea.vmem %s6, %s456
      %s458 = smul.u32 16, %s24
      %p459 = scmp.lt.s32.totalorder %s23, 1
      %s460 = scalar_select %p459, %s23, 1
      %p461 = scmp.lt.s32.totalorder %s24, 0
      %s462 = scalar_select %p461, %s24, 0
      %s463 = sadd.s32 %s462, %s460
      %s464 = smul.addr %s463, 2
      %s465 = scalar_lea.vmem %s7, %s464
      %v467 = vld [vmem:[%s415] sm:$0xf]
      %v468 = vld [vmem:[%s415 + $0x4] sm:$0xf]
      %v469 = vunpack.c.l.bf16 %v467
      %v470 = vunpack.c.l.bf16 %v468
      %v471 = vld [vmem:[%s4] sm:$0x1]
      %v473 = vlaneseq
      %v474 = vshrl.u32 %v473, 7
      %v475 = vsub.s32 0, %v474
      %v476 = vrot.slane %v471, %v475
      %v478 = vmul.f32 %v469, %v476
      %v479 = vmul.f32 %v470, %v476
      %v480 = vld [vmem:[%s5] sm:$0x1]
      %v482 = vlaneseq
      %v483 = vshrl.u32 %v482, 7
      %v484 = vsub.s32 0, %v483
      %v485 = vrot.slane %v480, %v484
      %v487 = vadd.f32 %v478, %v485
      %v488 = vadd.f32 %v479, %v485
      %v489 = vmax.f32 %v487, 0.0
      %v490 = vmax.f32 %v488, 0.0
      %v491 = vpack.c.bf16 %v490, %v489
      %v492 = vld [vmem:[%s429] sm:$0xf]
      %v493 = vld [vmem:[%s429 + $0x4] sm:$0xf]
      %v494 = vld [vmem:[%s429 + $0x8] sm:$0xf]
      %v495 = vld [vmem:[%s429 + $0xc] sm:$0xf]
      %v496 = vld [vmem:[%s429 + $0x10] sm:$0xf]
      %v497 = vld [vmem:[%s429 + $0x14] sm:$0xf]
      %v498 = vld [vmem:[%s429 + $0x18] sm:$0xf]
      %v499 = vld [vmem:[%s429 + $0x1c] sm:$0xf]
      %v500 = vld [vmem:[%s429 + $0x20] sm:$0xf]
      %v501 = vld [vmem:[%s429 + $0x24] sm:$0xf]
      %v502 = vld [vmem:[%s429 + $0x28] sm:$0xf]
      %v503 = vld [vmem:[%s429 + $0x2c] sm:$0xf]
      %v504 = vld [vmem:[%s429 + $0x30] sm:$0xf]
      %v505 = vld [vmem:[%s429 + $0x34] sm:$0xf]
      %v506 = vld [vmem:[%s429 + $0x38] sm:$0xf]
      %v507 = vld [vmem:[%s429 + $0x3c] sm:$0xf]
      %v508 = vld [vmem:[%s429 + $0x40] sm:$0xf]
      %v509 = vld [vmem:[%s429 + $0x44] sm:$0xf]
      %v510 = vld [vmem:[%s429 + $0x48] sm:$0xf]
      %v511 = vld [vmem:[%s429 + $0x4c] sm:$0xf]
      %v512 = vld [vmem:[%s429 + $0x50] sm:$0xf]
      %v513 = vld [vmem:[%s429 + $0x54] sm:$0xf]
      %v514 = vld [vmem:[%s429 + $0x58] sm:$0xf]
      %v515 = vld [vmem:[%s429 + $0x5c] sm:$0xf]
      %v516 = vld [vmem:[%s429 + $0x60] sm:$0xf]
      %v517 = vld [vmem:[%s429 + $0x64] sm:$0xf]
      %v518 = vld [vmem:[%s429 + $0x68] sm:$0xf]
      %v519 = vld [vmem:[%s429 + $0x6c] sm:$0xf]
      %v520 = vld [vmem:[%s429 + $0x70] sm:$0xf]
      %v521 = vld [vmem:[%s429 + $0x74] sm:$0xf]
      %v522 = vld [vmem:[%s429 + $0x78] sm:$0xf]
      %v523 = vld [vmem:[%s429 + $0x7c] sm:$0xf]
      %v524 = vunpack.c.l.bf16 %v492
      %v525 = vunpack.c.l.bf16 %v493
      %v526 = vunpack.c.l.bf16 %v494
      %v527 = vunpack.c.l.bf16 %v495
      %v528 = vunpack.c.l.bf16 %v496
      %v529 = vunpack.c.l.bf16 %v497
      %v530 = vunpack.c.l.bf16 %v498
      %v531 = vunpack.c.l.bf16 %v499
      %v532 = vunpack.c.l.bf16 %v500
      %v533 = vunpack.c.l.bf16 %v501
      %v534 = vunpack.c.l.bf16 %v502
      %v535 = vunpack.c.l.bf16 %v503
      %v536 = vunpack.c.l.bf16 %v504
      %v537 = vunpack.c.l.bf16 %v505
      %v538 = vunpack.c.l.bf16 %v506
      %v539 = vunpack.c.l.bf16 %v507
      %v540 = vunpack.c.l.bf16 %v508
      %v541 = vunpack.c.l.bf16 %v509
      %v542 = vunpack.c.l.bf16 %v510
      %v543 = vunpack.c.l.bf16 %v511
      %v544 = vunpack.c.l.bf16 %v512
      %v545 = vunpack.c.l.bf16 %v513
      %v546 = vunpack.c.l.bf16 %v514
      %v547 = vunpack.c.l.bf16 %v515
      %v548 = vunpack.c.l.bf16 %v516
      %v549 = vunpack.c.l.bf16 %v517
      %v550 = vunpack.c.l.bf16 %v518
      %v551 = vunpack.c.l.bf16 %v519
      %v552 = vunpack.c.l.bf16 %v520
      %v553 = vunpack.c.l.bf16 %v521
      %v554 = vunpack.c.l.bf16 %v522
      %v555 = vunpack.c.l.bf16 %v523
      %v556 = vmul.f32 %v524, %v476
      %v557 = vmul.f32 %v525, %v476
      %v558 = vmul.f32 %v526, %v476
      %v559 = vmul.f32 %v527, %v476
      %v560 = vmul.f32 %v528, %v476
      %v561 = vmul.f32 %v529, %v476
      %v562 = vmul.f32 %v530, %v476
      %v563 = vmul.f32 %v531, %v476
      %v564 = vmul.f32 %v532, %v476
      %v565 = vmul.f32 %v533, %v476
      %v566 = vmul.f32 %v534, %v476
      %v567 = vmul.f32 %v535, %v476
      %v568 = vmul.f32 %v536, %v476
      %v569 = vmul.f32 %v537, %v476
      %v570 = vmul.f32 %v538, %v476
      %v571 = vmul.f32 %v539, %v476
      %v572 = vmul.f32 %v540, %v476
      %v573 = vmul.f32 %v541, %v476
      %v574 = vmul.f32 %v542, %v476
      %v575 = vmul.f32 %v543, %v476
      %v576 = vmul.f32 %v544, %v476
      %v577 = vmul.f32 %v545, %v476
      %v578 = vmul.f32 %v546, %v476
      %v579 = vmul.f32 %v547, %v476
      %v580 = vmul.f32 %v548, %v476
      %v581 = vmul.f32 %v549, %v476
      %v582 = vmul.f32 %v550, %v476
      %v583 = vmul.f32 %v551, %v476
      %v584 = vmul.f32 %v552, %v476
      %v585 = vmul.f32 %v553, %v476
      %v586 = vmul.f32 %v554, %v476
      %v587 = vmul.f32 %v555, %v476
      %v588 = vadd.f32 %v556, %v485
      %v589 = vadd.f32 %v557, %v485
      %v590 = vadd.f32 %v558, %v485
      %v591 = vadd.f32 %v559, %v485
      %v592 = vadd.f32 %v560, %v485
      %v593 = vadd.f32 %v561, %v485
      %v594 = vadd.f32 %v562, %v485
      %v595 = vadd.f32 %v563, %v485
      %v596 = vadd.f32 %v564, %v485
      %v597 = vadd.f32 %v565, %v485
      %v598 = vadd.f32 %v566, %v485
      %v599 = vadd.f32 %v567, %v485
      %v600 = vadd.f32 %v568, %v485
      %v601 = vadd.f32 %v569, %v485
      %v602 = vadd.f32 %v570, %v485
      %v603 = vadd.f32 %v571, %v485
      %v604 = vadd.f32 %v572, %v485
      %v605 = vadd.f32 %v573, %v485
      %v606 = vadd.f32 %v574, %v485
      %v607 = vadd.f32 %v575, %v485
      %v608 = vadd.f32 %v576, %v485
      %v609 = vadd.f32 %v577, %v485
      %v610 = vadd.f32 %v578, %v485
      %v611 = vadd.f32 %v579, %v485
      %v612 = vadd.f32 %v580, %v485
      %v613 = vadd.f32 %v581, %v485
      %v614 = vadd.f32 %v582, %v485
      %v615 = vadd.f32 %v583, %v485
      %v616 = vadd.f32 %v584, %v485
      %v617 = vadd.f32 %v585, %v485
      %v618 = vadd.f32 %v586, %v485
      %v619 = vadd.f32 %v587, %v485
      %v620 = vmax.f32 %v588, 0.0
      %v621 = vmax.f32 %v589, 0.0
      %v622 = vmax.f32 %v590, 0.0
      %v623 = vmax.f32 %v591, 0.0
      %v624 = vmax.f32 %v592, 0.0
      %v625 = vmax.f32 %v593, 0.0
      %v626 = vmax.f32 %v594, 0.0
      %v627 = vmax.f32 %v595, 0.0
      %v628 = vmax.f32 %v596, 0.0
      %v629 = vmax.f32 %v597, 0.0
      %v630 = vmax.f32 %v598, 0.0
      %v631 = vmax.f32 %v599, 0.0
      %v632 = vmax.f32 %v600, 0.0
      %v633 = vmax.f32 %v601, 0.0
      %v634 = vmax.f32 %v602, 0.0
      %v635 = vmax.f32 %v603, 0.0
      %v636 = vmax.f32 %v604, 0.0
      %v637 = vmax.f32 %v605, 0.0
      %v638 = vmax.f32 %v606, 0.0
      %v639 = vmax.f32 %v607, 0.0
      %v640 = vmax.f32 %v608, 0.0
      %v641 = vmax.f32 %v609, 0.0
      %v642 = vmax.f32 %v610, 0.0
      %v643 = vmax.f32 %v611, 0.0
      %v644 = vmax.f32 %v612, 0.0
      %v645 = vmax.f32 %v613, 0.0
      %v646 = vmax.f32 %v614, 0.0
      %v647 = vmax.f32 %v615, 0.0
      %v648 = vmax.f32 %v616, 0.0
      %v649 = vmax.f32 %v617, 0.0
      %v650 = vmax.f32 %v618, 0.0
      %v651 = vmax.f32 %v619, 0.0
      %v652 = vpack.c.bf16 %v621, %v620
      %v653 = vpack.c.bf16 %v623, %v622
      %v654 = vpack.c.bf16 %v625, %v624
      %v655 = vpack.c.bf16 %v627, %v626
      %v656 = vpack.c.bf16 %v629, %v628
      %v657 = vpack.c.bf16 %v631, %v630
      %v658 = vpack.c.bf16 %v633, %v632
      %v659 = vpack.c.bf16 %v635, %v634
      %v660 = vpack.c.bf16 %v637, %v636
      %v661 = vpack.c.bf16 %v639, %v638
      %v662 = vpack.c.bf16 %v641, %v640
      %v663 = vpack.c.bf16 %v643, %v642
      %v664 = vpack.c.bf16 %v645, %v644
      %v665 = vpack.c.bf16 %v647, %v646
      %v666 = vpack.c.bf16 %v649, %v648
      %v667 = vpack.c.bf16 %v651, %v650
      %v668 = vld [vmem:[%s443] sm:$0xf]
      %v669 = vld [vmem:[%s443 + $0x4] sm:$0xf]
      %v670 = vunpack.c.l.bf16 %v668
      %v671 = vunpack.c.l.bf16 %v669
      %v672 = vmul.f32 %v670, %v476
      %v673 = vmul.f32 %v671, %v476
      %v674 = vadd.f32 %v672, %v485
      %v675 = vadd.f32 %v673, %v485
      %v676 = vmax.f32 %v674, 0.0
      %v677 = vmax.f32 %v675, 0.0
      %v678 = vpack.c.bf16 %v677, %v676
      %p679 = scmp.gt.s32.totalorder %s24, 0
      %s680 = scalar_select %p679, 1, 0
      %v681 = vstv %s680
      %vm682 = vcmp.eq.s32.totalorder %v681, 1
      %v683 = vsel %vm682, %v491, 0
      %p684 = scmp.lt.s32.totalorder %s24, 0
      %s685 = scalar_select %p684, 1, 0
      %v686 = vstv %s685
      %vm687 = vcmp.eq.s32.totalorder %v686, 1
      %v688 = vsel %vm687, %v678, 0
      %v690 = vshrl.u32 %v683, 16
      %v692 = vrot.slane %v690, 7
      %v693 = vshll.u32 %v683, 16
      %v695 = vor.u32 %v692, %v693
      %v697 = vshrl.u32 %v652, 16
      %v699 = vrot.slane %v697, 7
      %v700 = vshll.u32 %v652, 16
      %v702 = vor.u32 %v699, %v700
      %v704 = vshrl.u32 %v653, 16
      %v706 = vrot.slane %v704, 7
      %v707 = vshll.u32 %v653, 16
      %v709 = vor.u32 %v706, %v707
      %v711 = vshrl.u32 %v654, 16
      %v713 = vrot.slane %v711, 7
      %v714 = vshll.u32 %v654, 16
      %v716 = vor.u32 %v713, %v714
      %v718 = vshrl.u32 %v655, 16
      %v720 = vrot.slane %v718, 7
      %v721 = vshll.u32 %v655, 16
      %v723 = vor.u32 %v720, %v721
      %v725 = vshrl.u32 %v656, 16
      %v727 = vrot.slane %v725, 7
      %v728 = vshll.u32 %v656, 16
      %v730 = vor.u32 %v727, %v728
      %v732 = vshrl.u32 %v657, 16
      %v734 = vrot.slane %v732, 7
      %v735 = vshll.u32 %v657, 16
      %v737 = vor.u32 %v734, %v735
      %v739 = vshrl.u32 %v658, 16
      %v741 = vrot.slane %v739, 7
      %v742 = vshll.u32 %v658, 16
      %v744 = vor.u32 %v741, %v742
      %v746 = vshrl.u32 %v659, 16
      %v748 = vrot.slane %v746, 7
      %v749 = vshll.u32 %v659, 16
      %v751 = vor.u32 %v748, %v749
      %v753 = vshrl.u32 %v660, 16
      %v755 = vrot.slane %v753, 7
      %v756 = vshll.u32 %v660, 16
      %v758 = vor.u32 %v755, %v756
      %v760 = vshrl.u32 %v661, 16
      %v762 = vrot.slane %v760, 7
      %v763 = vshll.u32 %v661, 16
      %v765 = vor.u32 %v762, %v763
      %v767 = vshrl.u32 %v662, 16
      %v769 = vrot.slane %v767, 7
      %v770 = vshll.u32 %v662, 16
      %v772 = vor.u32 %v769, %v770
      %v774 = vshrl.u32 %v663, 16
      %v776 = vrot.slane %v774, 7
      %v777 = vshll.u32 %v663, 16
      %v779 = vor.u32 %v776, %v777
      %v781 = vshrl.u32 %v664, 16
      %v783 = vrot.slane %v781, 7
      %v784 = vshll.u32 %v664, 16
      %v786 = vor.u32 %v783, %v784
      %v788 = vshrl.u32 %v665, 16
      %v790 = vrot.slane %v788, 7
      %v791 = vshll.u32 %v665, 16
      %v793 = vor.u32 %v790, %v791
      %v795 = vshrl.u32 %v666, 16
      %v797 = vrot.slane %v795, 7
      %v798 = vshll.u32 %v666, 16
      %v800 = vor.u32 %v797, %v798
      %v802 = vshrl.u32 %v667, 16
      %v804 = vrot.slane %v802, 7
      %v805 = vshll.u32 %v667, 16
      %v807 = vor.u32 %v804, %v805
      %v809 = vshrl.u32 %v688, 16
      %v811 = vrot.slane %v809, 7
      %v812 = vshll.u32 %v688, 16
      %v814 = vor.u32 %v811, %v812
      %vm851 = vcmask 1040384
      %vm852 = vsmask.f32 256
      %vm853 = vmand %vm851, %vm852
      %v854 = vsel %vm853, 0, %v695
      %v855 = vsel %vm853, 0, %v702
      %v856 = vsel %vm853, 0, %v709
      %v857 = vsel %vm853, 0, %v716
      %v858 = vsel %vm853, 0, %v723
      %v859 = vsel %vm853, 0, %v730
      %v860 = vsel %vm853, 0, %v737
      %v861 = vsel %vm853, 0, %v744
      %v862 = vsel %vm853, 0, %v751
      %v863 = vsel %vm853, 0, %v758
      %v864 = vsel %vm853, 0, %v765
      %v865 = vsel %vm853, 0, %v772
      %v866 = vsel %vm853, 0, %v779
      %v867 = vsel %vm853, 0, %v786
      %v868 = vsel %vm853, 0, %v793
      %v869 = vsel %vm853, 0, %v800
      %v870 = vsel %vm853, 0, %v807
      %v871 = vsel %vm853, 0, %v814
      %v872 = vsel %vm853, %v692, 0
      %v873 = vsel %vm853, %v699, 0
      %v874 = vsel %vm853, %v706, 0
      %v875 = vsel %vm853, %v713, 0
      %v876 = vsel %vm853, %v720, 0
      %v877 = vsel %vm853, %v727, 0
      %v878 = vsel %vm853, %v734, 0
      %v879 = vsel %vm853, %v741, 0
      %v880 = vsel %vm853, %v748, 0
      %v881 = vsel %vm853, %v755, 0
      %v882 = vsel %vm853, %v762, 0
      %v883 = vsel %vm853, %v769, 0
      %v884 = vsel %vm853, %v776, 0
      %v885 = vsel %vm853, %v783, 0
      %v886 = vsel %vm853, %v790, 0
      %v887 = vsel %vm853, %v797, 0
      %v888 = vsel %vm853, %v804, 0
      %v889 = vsel %vm853, %v811, 0
      %vm890 = vsmask.f32 7424
      %v892 = vshrl.u32 %v854, 16
      %v894 = vshll.u32 %v854, 16
      %v896 = vrot.slane %v894, 1
      %v897 = vor.u32 %v892, %v896
      %v899 = vshll.u32 %v872, 16
      %v901 = vrot.slane %v899, 1
      %v902 = vsel %vm890, %v897, %v901
      %v904 = vshrl.u32 %v855, 16
      %v906 = vshll.u32 %v855, 16
      %v908 = vrot.slane %v906, 1
      %v909 = vor.u32 %v904, %v908
      %v911 = vshll.u32 %v873, 16
      %v913 = vrot.slane %v911, 1
      %v914 = vsel %vm890, %v909, %v913
      %v916 = vshrl.u32 %v856, 16
      %v918 = vshll.u32 %v856, 16
      %v920 = vrot.slane %v918, 1
      %v921 = vor.u32 %v916, %v920
      %v923 = vshll.u32 %v874, 16
      %v925 = vrot.slane %v923, 1
      %v926 = vsel %vm890, %v921, %v925
      %v928 = vshrl.u32 %v857, 16
      %v930 = vshll.u32 %v857, 16
      %v932 = vrot.slane %v930, 1
      %v933 = vor.u32 %v928, %v932
      %v935 = vshll.u32 %v875, 16
      %v937 = vrot.slane %v935, 1
      %v938 = vsel %vm890, %v933, %v937
      %v940 = vshrl.u32 %v858, 16
      %v942 = vshll.u32 %v858, 16
      %v944 = vrot.slane %v942, 1
      %v945 = vor.u32 %v940, %v944
      %v947 = vshll.u32 %v876, 16
      %v949 = vrot.slane %v947, 1
      %v950 = vsel %vm890, %v945, %v949
      %v952 = vshrl.u32 %v859, 16
      %v954 = vshll.u32 %v859, 16
      %v956 = vrot.slane %v954, 1
      %v957 = vor.u32 %v952, %v956
      %v959 = vshll.u32 %v877, 16
      %v961 = vrot.slane %v959, 1
      %v962 = vsel %vm890, %v957, %v961
      %v964 = vshrl.u32 %v860, 16
      %v966 = vshll.u32 %v860, 16
      %v968 = vrot.slane %v966, 1
      %v969 = vor.u32 %v964, %v968
      %v971 = vshll.u32 %v878, 16
      %v973 = vrot.slane %v971, 1
      %v974 = vsel %vm890, %v969, %v973
      %v976 = vshrl.u32 %v861, 16
      %v978 = vshll.u32 %v861, 16
      %v980 = vrot.slane %v978, 1
      %v981 = vor.u32 %v976, %v980
      %v983 = vshll.u32 %v879, 16
      %v985 = vrot.slane %v983, 1
      %v986 = vsel %vm890, %v981, %v985
      %v988 = vshrl.u32 %v862, 16
      %v990 = vshll.u32 %v862, 16
      %v992 = vrot.slane %v990, 1
      %v993 = vor.u32 %v988, %v992
      %v995 = vshll.u32 %v880, 16
      %v997 = vrot.slane %v995, 1
      %v998 = vsel %vm890, %v993, %v997
      %v1000 = vshrl.u32 %v863, 16
      %v1002 = vshll.u32 %v863, 16
      %v1004 = vrot.slane %v1002, 1
      %v1005 = vor.u32 %v1000, %v1004
      %v1007 = vshll.u32 %v881, 16
      %v1009 = vrot.slane %v1007, 1
      %v1010 = vsel %vm890, %v1005, %v1009
      %v1012 = vshrl.u32 %v864, 16
      %v1014 = vshll.u32 %v864, 16
      %v1016 = vrot.slane %v1014, 1
      %v1017 = vor.u32 %v1012, %v1016
      %v1019 = vshll.u32 %v882, 16
      %v1021 = vrot.slane %v1019, 1
      %v1022 = vsel %vm890, %v1017, %v1021
      %v1024 = vshrl.u32 %v865, 16
      %v1026 = vshll.u32 %v865, 16
      %v1028 = vrot.slane %v1026, 1
      %v1029 = vor.u32 %v1024, %v1028
      %v1031 = vshll.u32 %v883, 16
      %v1033 = vrot.slane %v1031, 1
      %v1034 = vsel %vm890, %v1029, %v1033
      %v1036 = vshrl.u32 %v866, 16
      %v1038 = vshll.u32 %v866, 16
      %v1040 = vrot.slane %v1038, 1
      %v1041 = vor.u32 %v1036, %v1040
      %v1043 = vshll.u32 %v884, 16
      %v1045 = vrot.slane %v1043, 1
      %v1046 = vsel %vm890, %v1041, %v1045
      %v1048 = vshrl.u32 %v867, 16
      %v1050 = vshll.u32 %v867, 16
      %v1052 = vrot.slane %v1050, 1
      %v1053 = vor.u32 %v1048, %v1052
      %v1055 = vshll.u32 %v885, 16
      %v1057 = vrot.slane %v1055, 1
      %v1058 = vsel %vm890, %v1053, %v1057
      %v1060 = vshrl.u32 %v868, 16
      %v1062 = vshll.u32 %v868, 16
      %v1064 = vrot.slane %v1062, 1
      %v1065 = vor.u32 %v1060, %v1064
      %v1067 = vshll.u32 %v886, 16
      %v1069 = vrot.slane %v1067, 1
      %v1070 = vsel %vm890, %v1065, %v1069
      %v1072 = vshrl.u32 %v869, 16
      %v1074 = vshll.u32 %v869, 16
      %v1076 = vrot.slane %v1074, 1
      %v1077 = vor.u32 %v1072, %v1076
      %v1079 = vshll.u32 %v887, 16
      %v1081 = vrot.slane %v1079, 1
      %v1082 = vsel %vm890, %v1077, %v1081
      %vm1131 = vcmask 1046528
      %v1132 = vrot.slane %v854, 1
      %v1133 = vrot.slane %v872, 1
      %v1134 = vsel %vm1131, %v1132, %v1133
      %v1135 = vrot.slane %v855, 1
      %v1136 = vrot.slane %v873, 1
      %v1137 = vsel %vm1131, %v1135, %v1136
      %v1138 = vrot.slane %v856, 1
      %v1139 = vrot.slane %v874, 1
      %v1140 = vsel %vm1131, %v1138, %v1139
      %v1141 = vrot.slane %v857, 1
      %v1142 = vrot.slane %v875, 1
      %v1143 = vsel %vm1131, %v1141, %v1142
      %v1144 = vrot.slane %v858, 1
      %v1145 = vrot.slane %v876, 1
      %v1146 = vsel %vm1131, %v1144, %v1145
      %v1147 = vrot.slane %v859, 1
      %v1148 = vrot.slane %v877, 1
      %v1149 = vsel %vm1131, %v1147, %v1148
      %v1150 = vrot.slane %v860, 1
      %v1151 = vrot.slane %v878, 1
      %v1152 = vsel %vm1131, %v1150, %v1151
      %v1153 = vrot.slane %v861, 1
      %v1154 = vrot.slane %v879, 1
      %v1155 = vsel %vm1131, %v1153, %v1154
      %v1156 = vrot.slane %v862, 1
      %v1157 = vrot.slane %v880, 1
      %v1158 = vsel %vm1131, %v1156, %v1157
      %v1159 = vrot.slane %v863, 1
      %v1160 = vrot.slane %v881, 1
      %v1161 = vsel %vm1131, %v1159, %v1160
      %v1162 = vrot.slane %v864, 1
      %v1163 = vrot.slane %v882, 1
      %v1164 = vsel %vm1131, %v1162, %v1163
      %v1165 = vrot.slane %v865, 1
      %v1166 = vrot.slane %v883, 1
      %v1167 = vsel %vm1131, %v1165, %v1166
      %v1168 = vrot.slane %v866, 1
      %v1169 = vrot.slane %v884, 1
      %v1170 = vsel %vm1131, %v1168, %v1169
      %v1171 = vrot.slane %v867, 1
      %v1172 = vrot.slane %v885, 1
      %v1173 = vsel %vm1131, %v1171, %v1172
      %v1174 = vrot.slane %v868, 1
      %v1175 = vrot.slane %v886, 1
      %v1176 = vsel %vm1131, %v1174, %v1175
      %v1177 = vrot.slane %v869, 1
      %v1178 = vrot.slane %v887, 1
      %v1179 = vsel %vm1131, %v1177, %v1178
      %v1196 = vld [vmem:[%s3] sm:$0xf]
      %v1197 = vld [vmem:[%s3 + $0x4] sm:$0xf]
      %v1198 = vld [vmem:[%s3 + $0x8] sm:$0xf]
      %v1199 = vld [vmem:[%s3 + $0xc] sm:$0xf]
      %v1200 = vld [vmem:[%s3 + $0x10] sm:$0xf]
      %v1201 = vld [vmem:[%s3 + $0x14] sm:$0xf]
      %v1202 = vld [vmem:[%s3 + $0x18] sm:$0xf]
      %v1203 = vld [vmem:[%s3 + $0x1c] sm:$0xf]
      %v1204 = vld [vmem:[%s3 + $0x20] sm:$0xf]
      %v1205 = vld [vmem:[%s3 + $0x24] sm:$0xf]
      %v1206 = vld [vmem:[%s3 + $0x28] sm:$0xf]
      %v1207 = vld [vmem:[%s3 + $0x2c] sm:$0xf]
      %v1208 = vld [vmem:[%s3 + $0x30] sm:$0xf]
      %v1209 = vld [vmem:[%s3 + $0x34] sm:$0xf]
      %v1210 = vld [vmem:[%s3 + $0x38] sm:$0xf]
      %v1211 = vld [vmem:[%s3 + $0x3c] sm:$0xf]
      %v1212 = vld [vmem:[%s3 + $0x40] sm:$0xf]
      %v1213 = vld [vmem:[%s3 + $0x44] sm:$0xf]
      %v1214 = vld [vmem:[%s3 + $0x48] sm:$0xf]
      %v1215 = vld [vmem:[%s3 + $0x4c] sm:$0xf]
      %v1216 = vld [vmem:[%s3 + $0x50] sm:$0xf]
      %v1217 = vld [vmem:[%s3 + $0x54] sm:$0xf]
      %v1218 = vld [vmem:[%s3 + $0x58] sm:$0xf]
      %v1219 = vld [vmem:[%s3 + $0x5c] sm:$0xf]
      %v1220 = vld [vmem:[%s3 + $0x60] sm:$0xf]
      %v1221 = vld [vmem:[%s3 + $0x64] sm:$0xf]
      %v1222 = vld [vmem:[%s3 + $0x68] sm:$0xf]
      %v1223 = vld [vmem:[%s3 + $0x6c] sm:$0xf]
      %v1224 = vld [vmem:[%s3 + $0x70] sm:$0xf]
      %v1225 = vld [vmem:[%s3 + $0x74] sm:$0xf]
      %v1226 = vld [vmem:[%s3 + $0x78] sm:$0xf]
      %v1227 = vld [vmem:[%s3 + $0x7c] sm:$0xf]
      %v1228 = vld [vmem:[%s3 + $0x80] sm:$0xf]
      %v1229 = vld [vmem:[%s3 + $0x84] sm:$0xf]
      %v1230 = vld [vmem:[%s3 + $0x88] sm:$0xf]
      %v1231 = vld [vmem:[%s3 + $0x8c] sm:$0xf]
      %v1232 = vld [vmem:[%s3 + $0x90] sm:$0xf]
      %v1233 = vld [vmem:[%s3 + $0x94] sm:$0xf]
      %v1234 = vld [vmem:[%s3 + $0x98] sm:$0xf]
      %v1235 = vld [vmem:[%s3 + $0x9c] sm:$0xf]
      %v1236 = vld [vmem:[%s3 + $0xa0] sm:$0xf]
      %v1237 = vld [vmem:[%s3 + $0xa4] sm:$0xf]
      %v1238 = vld [vmem:[%s3 + $0xa8] sm:$0xf]
      %v1239 = vld [vmem:[%s3 + $0xac] sm:$0xf]
      %v1240 = vld [vmem:[%s3 + $0xb0] sm:$0xf]
      %v1241 = vld [vmem:[%s3 + $0xb4] sm:$0xf]
      %v1242 = vld [vmem:[%s3 + $0xb8] sm:$0xf]
      %v1243 = vld [vmem:[%s3 + $0xbc] sm:$0xf]
      %v1245 = vshrl.u32 %v870, 16
      %v1247 = vshll.u32 %v870, 16
      %v1249 = vrot.slane %v1247, 1
      %v1250 = vor.u32 %v1245, %v1249
      %v1252 = vshll.u32 %v888, 16
      %v1254 = vrot.slane %v1252, 1
      %v1255 = vsel %vm890, %v1250, %v1254
      %v1259 = vrot.slane %v870, 1
      %v1260 = vrot.slane %v888, 1
      %v1261 = vsel %vm1131, %v1259, %v1260
      %s1263 = scalar_lea.vmem %s3, 192
      %v1264 = vld [vmem:[%s1263] sm:$0xf]
      %v1265 = vld [vmem:[%s1263 + $0x4] sm:$0xf]
      %v1266 = vld [vmem:[%s1263 + $0x8] sm:$0xf]
      %v1267 = vld [vmem:[%s1263 + $0xc] sm:$0xf]
      %v1268 = vld [vmem:[%s1263 + $0x10] sm:$0xf]
      %v1269 = vld [vmem:[%s1263 + $0x14] sm:$0xf]
      %v1270 = vld [vmem:[%s1263 + $0x18] sm:$0xf]
      %v1271 = vld [vmem:[%s1263 + $0x1c] sm:$0xf]
      %v1272 = vld [vmem:[%s1263 + $0x20] sm:$0xf]
      %v1273 = vld [vmem:[%s1263 + $0x24] sm:$0xf]
      %v1274 = vld [vmem:[%s1263 + $0x28] sm:$0xf]
      %v1275 = vld [vmem:[%s1263 + $0x2c] sm:$0xf]
      %v1276 = vld [vmem:[%s1263 + $0x30] sm:$0xf]
      %v1277 = vld [vmem:[%s1263 + $0x34] sm:$0xf]
      %v1278 = vld [vmem:[%s1263 + $0x38] sm:$0xf]
      %v1279 = vld [vmem:[%s1263 + $0x3c] sm:$0xf]
      %v1280 = vld [vmem:[%s1263 + $0x40] sm:$0xf]
      %v1281 = vld [vmem:[%s1263 + $0x44] sm:$0xf]
      %v1282 = vld [vmem:[%s1263 + $0x48] sm:$0xf]
      %v1283 = vld [vmem:[%s1263 + $0x4c] sm:$0xf]
      %v1284 = vld [vmem:[%s1263 + $0x50] sm:$0xf]
      %v1285 = vld [vmem:[%s1263 + $0x54] sm:$0xf]
      %v1286 = vld [vmem:[%s1263 + $0x58] sm:$0xf]
      %v1287 = vld [vmem:[%s1263 + $0x5c] sm:$0xf]
      %v1288 = vld [vmem:[%s1263 + $0x60] sm:$0xf]
      %v1289 = vld [vmem:[%s1263 + $0x64] sm:$0xf]
      %v1290 = vld [vmem:[%s1263 + $0x68] sm:$0xf]
      %v1291 = vld [vmem:[%s1263 + $0x6c] sm:$0xf]
      %v1292 = vld [vmem:[%s1263 + $0x70] sm:$0xf]
      %v1293 = vld [vmem:[%s1263 + $0x74] sm:$0xf]
      %v1294 = vld [vmem:[%s1263 + $0x78] sm:$0xf]
      %v1295 = vld [vmem:[%s1263 + $0x7c] sm:$0xf]
      %v1296 = vld [vmem:[%s1263 + $0x80] sm:$0xf]
      %v1297 = vld [vmem:[%s1263 + $0x84] sm:$0xf]
      %v1298 = vld [vmem:[%s1263 + $0x88] sm:$0xf]
      %v1299 = vld [vmem:[%s1263 + $0x8c] sm:$0xf]
      %v1300 = vld [vmem:[%s1263 + $0x90] sm:$0xf]
      %v1301 = vld [vmem:[%s1263 + $0x94] sm:$0xf]
      %v1302 = vld [vmem:[%s1263 + $0x98] sm:$0xf]
      %v1303 = vld [vmem:[%s1263 + $0x9c] sm:$0xf]
      %v1304 = vld [vmem:[%s1263 + $0xa0] sm:$0xf]
      %v1305 = vld [vmem:[%s1263 + $0xa4] sm:$0xf]
      %v1306 = vld [vmem:[%s1263 + $0xa8] sm:$0xf]
      %v1307 = vld [vmem:[%s1263 + $0xac] sm:$0xf]
      %v1308 = vld [vmem:[%s1263 + $0xb0] sm:$0xf]
      %v1309 = vld [vmem:[%s1263 + $0xb4] sm:$0xf]
      %v1310 = vld [vmem:[%s1263 + $0xb8] sm:$0xf]
      %v1311 = vld [vmem:[%s1263 + $0xbc] sm:$0xf]
      %v1360 = vunpack.c.l.b16 %v1264
      %v1361 = vunpack.c.l.b16 %v1265
      %v1362 = vunpack.c.l.b16 %v1266
      %v1363 = vunpack.c.l.b16 %v1267
      %v1364 = vunpack.c.l.b16 %v1268
      %v1365 = vunpack.c.l.b16 %v1269
      %v1366 = vunpack.c.l.b16 %v1270
      %v1367 = vunpack.c.l.b16 %v1271
      %v1368 = vunpack.c.l.b16 %v1272
      %v1369 = vunpack.c.l.b16 %v1273
      %v1370 = vunpack.c.l.b16 %v1274
      %v1371 = vunpack.c.l.b16 %v1275
      %v1372 = vunpack.c.l.b16 %v1276
      %v1373 = vunpack.c.l.b16 %v1277
      %v1374 = vunpack.c.l.b16 %v1278
      %v1375 = vunpack.c.l.b16 %v1279
      %v1376 = vunpack.c.l.b16 %v1280
      %v1377 = vunpack.c.l.b16 %v1281
      %v1378 = vunpack.c.l.b16 %v1282
      %v1379 = vunpack.c.l.b16 %v1283
      %v1380 = vunpack.c.l.b16 %v1284
      %v1381 = vunpack.c.l.b16 %v1285
      %v1382 = vunpack.c.l.b16 %v1286
      %v1383 = vunpack.c.l.b16 %v1287
      %v1384 = vunpack.c.l.b16 %v1288
      %v1385 = vunpack.c.l.b16 %v1289
      %v1386 = vunpack.c.l.b16 %v1290
      %v1387 = vunpack.c.l.b16 %v1291
      %v1388 = vunpack.c.l.b16 %v1292
      %v1389 = vunpack.c.l.b16 %v1293
      %v1390 = vunpack.c.l.b16 %v1294
      %v1391 = vunpack.c.l.b16 %v1295
      %v1392 = vunpack.c.l.b16 %v1296
      %v1393 = vunpack.c.l.b16 %v1297
      %v1394 = vunpack.c.l.b16 %v1298
      %v1395 = vunpack.c.l.b16 %v1299
      %v1396 = vunpack.c.l.b16 %v1300
      %v1397 = vunpack.c.l.b16 %v1301
      %v1398 = vunpack.c.l.b16 %v1302
      %v1399 = vunpack.c.l.b16 %v1303
      %v1400 = vunpack.c.l.b16 %v1304
      %v1401 = vunpack.c.l.b16 %v1305
      %v1402 = vunpack.c.l.b16 %v1306
      %v1403 = vunpack.c.l.b16 %v1307
      %v1404 = vunpack.c.l.b16 %v1308
      %v1405 = vunpack.c.l.b16 %v1309
      %v1406 = vunpack.c.l.b16 %v1310
      %v1407 = vunpack.c.l.b16 %v1311
      %v1408 = vpack.c.b16 %v1361, %v1360
      %v1409 = vpack.c.b16 %v1363, %v1362
      %v1410 = vpack.c.b16 %v1365, %v1364
      %v1411 = vpack.c.b16 %v1367, %v1366
      %v1412 = vpack.c.b16 %v1369, %v1368
      %v1413 = vpack.c.b16 %v1371, %v1370
      %v1414 = vpack.c.b16 %v1373, %v1372
      %v1415 = vpack.c.b16 %v1375, %v1374
      %v1416 = vpack.c.b16 %v1377, %v1376
      %v1417 = vpack.c.b16 %v1379, %v1378
      %v1418 = vpack.c.b16 %v1381, %v1380
      %v1419 = vpack.c.b16 %v1383, %v1382
      %v1420 = vpack.c.b16 %v1385, %v1384
      %v1421 = vpack.c.b16 %v1387, %v1386
      %v1422 = vpack.c.b16 %v1389, %v1388
      %v1423 = vpack.c.b16 %v1391, %v1390
      %v1424 = vpack.c.b16 %v1393, %v1392
      %v1425 = vpack.c.b16 %v1395, %v1394
      %v1426 = vpack.c.b16 %v1397, %v1396
      %v1427 = vpack.c.b16 %v1399, %v1398
      %v1428 = vpack.c.b16 %v1401, %v1400
      %v1429 = vpack.c.b16 %v1403, %v1402
      %v1430 = vpack.c.b16 %v1405, %v1404
      %v1431 = vpack.c.b16 %v1407, %v1406
      %1456 = vmatprep.subr.bf16.mxu0 0
      %1457 = vmatpush1.bf16.msra.mxu0 %v1408
      %1458 = vmatprep.subr.bf16.mxu0 0
      %1459 = vmatpush1.bf16.msra.mxu0 %v1409
      %1460 = vmatprep.subr.bf16.mxu0 0
      %1461 = vmatpush1.bf16.msra.mxu0 %v1410
      %1462 = vmatprep.subr.bf16.mxu0 0
      %1463 = vmatpush1.bf16.msra.mxu0 %v1411
      %1464 = vmatprep.subr.bf16.mxu0 0
      %1465 = vmatpush1.bf16.msra.mxu0 %v1412
      %1466 = vmatprep.subr.bf16.mxu0 0
      %1467 = vmatpush1.bf16.msra.mxu0 %v1413
      %1468 = vmatprep.subr.bf16.mxu0 0
      %1469 = vmatpush1.bf16.msra.mxu0 %v1414
      %1470 = vmatprep.subr.bf16.mxu0 0
      %1471 = vmatpush1.bf16.msra.mxu0 %v1415
      %1472 = vmatprep.subr.bf16.mxu0 0
      %1473 = vmatpush1.bf16.msra.mxu0 %v1416
      %1474 = vmatprep.subr.bf16.mxu0 0
      %1475 = vmatpush1.bf16.msra.mxu0 %v1417
      %1476 = vmatprep.subr.bf16.mxu0 0
      %1477 = vmatpush1.bf16.msra.mxu0 %v1418
      %1478 = vmatprep.subr.bf16.mxu0 0
      %1479 = vmatpush1.bf16.msra.mxu0 %v1419
      %1480 = vmatprep.subr.bf16.mxu0 0
      %1481 = vmatpush1.bf16.msra.mxu0 %v1420
      %1482 = vmatprep.subr.bf16.mxu0 0
      %1483 = vmatpush1.bf16.msra.mxu0 %v1421
      %1484 = vmatprep.subr.bf16.mxu0 0
      %1485 = vmatpush1.bf16.msra.mxu0 %v1422
      %1486 = vmatprep.subr.bf16.mxu0 0
      %1487 = vmatpush1.bf16.msra.mxu0 %v1423
      %1488 = vmatprep.mubr.bf16.mxu0 %v914
      %1489 = vmatmul.mubr.bf16.gmra.mrb[0].mxu0 %v855
      %v1490 = vpop.f32.mrb[0].mxu0
      %v1491 = vadd.f32 0.0, %v1490
      %v1492 = vpop.f32.mrb[0].mxu0
      %v1493 = vpop.f32.mrb[0].mxu0
      %v1494 = vadd.f32 0.0, %v1493
      %v1495 = vpop.f32.mrb[0].mxu0
      %1496 = vmatprep.mubr.bf16.mxu0 %v926
      %1497 = vmatmul.mubr.bf16.gmra.mrb[0].mxu0 %v856
      %v1498 = vpop.f32.mrb[0].mxu0
      %v1499 = vadd.f32 0.0, %v1498
      %v1500 = vpop.f32.mrb[0].mxu0
      %v1501 = vpop.f32.mrb[0].mxu0
      %v1502 = vadd.f32 0.0, %v1501
      %v1503 = vpop.f32.mrb[0].mxu0
      %1504 = vmatprep.mubr.bf16.mxu0 %v938
      %1505 = vmatmul.mubr.bf16.gmra.mrb[0].mxu0 %v857
      %v1506 = vpop.f32.mrb[0].mxu0
      %v1507 = vadd.f32 0.0, %v1506
      %v1508 = vpop.f32.mrb[0].mxu0
      %v1509 = vpop.f32.mrb[0].mxu0
      %v1510 = vadd.f32 0.0, %v1509
      %v1511 = vpop.f32.mrb[0].mxu0
      %1512 = vmatprep.mubr.bf16.mxu0 %v950
      %1513 = vmatmul.mubr.bf16.gmra.mrb[0].mxu0 %v858
      %v1514 = vpop.f32.mrb[0].mxu0
      %v1515 = vadd.f32 0.0, %v1514
      %v1516 = vpop.f32.mrb[0].mxu0
      %v1517 = vpop.f32.mrb[0].mxu0
      %v1518 = vadd.f32 0.0, %v1517
      %v1519 = vpop.f32.mrb[0].mxu0
      %1520 = vmatprep.mubr.bf16.mxu0 %v962
      %1521 = vmatmul.mubr.bf16.gmra.mrb[0].mxu0 %v859
      %v1522 = vpop.f32.mrb[0].mxu0
      %v1523 = vadd.f32 0.0, %v1522
      %v1524 = vpop.f32.mrb[0].mxu0
      %v1525 = vpop.f32.mrb[0].mxu0
      %v1526 = vadd.f32 0.0, %v1525
      %v1527 = vpop.f32.mrb[0].mxu0
      %1528 = vmatprep.mubr.bf16.mxu0 %v974
      %1529 = vmatmul.mubr.bf16.gmra.mrb[0].mxu0 %v860
      %v1530 = vpop.f32.mrb[0].mxu0
      %v1531 = vadd.f32 0.0, %v1530
      %v1532 = vpop.f32.mrb[0].mxu0
      %v1533 = vpop.f32.mrb[0].mxu0
      %v1534 = vadd.f32 0.0, %v1533
      %v1535 = vpop.f32.mrb[0].mxu0
      %1536 = vmatprep.mubr.bf16.mxu0 %v986
      %1537 = vmatmul.mubr.bf16.gmra.mrb[0].mxu0 %v861
      %v1538 = vpop.f32.mrb[0].mxu0
      %v1539 = vadd.f32 0.0, %v1538
      %v1540 = vpop.f32.mrb[0].mxu0
      %v1541 = vpop.f32.mrb[0].mxu0
      %v1542 = vadd.f32 0.0, %v1541
      %v1543 = vpop.f32.mrb[0].mxu0
      %1544 = vmatprep.mubr.bf16.mxu0 %v998
      %1545 = vmatmul.mubr.bf16.gmra.mrb[0].mxu0 %v862
      %v1546 = vpop.f32.mrb[0].mxu0
      %v1547 = vadd.f32 0.0, %v1546
      %v1548 = vpop.f32.mrb[0].mxu0
      %v1549 = vpop.f32.mrb[0].mxu0
      %v1550 = vadd.f32 0.0, %v1549
      %v1551 = vpop.f32.mrb[0].mxu0
      %1552 = vmatprep.mubr.bf16.mxu0 %v1010
      %1553 = vmatmul.mubr.bf16.gmra.mrb[0].mxu0 %v863
      %v1554 = vpop.f32.mrb[0].mxu0
      %v1555 = vadd.f32 0.0, %v1554
      %v1556 = vpop.f32.mrb[0].mxu0
      %v1557 = vpop.f32.mrb[0].mxu0
      %v1558 = vadd.f32 0.0, %v1557
      %v1559 = vpop.f32.mrb[0].mxu0
      %1560 = vmatprep.mubr.bf16.mxu0 %v1022
      %1561 = vmatmul.mubr.bf16.gmra.mrb[0].mxu0 %v864
      %v1562 = vpop.f32.mrb[0].mxu0
      %v1563 = vadd.f32 0.0, %v1562
      %v1564 = vpop.f32.mrb[0].mxu0
      %v1565 = vpop.f32.mrb[0].mxu0
      %v1566 = vadd.f32 0.0, %v1565
      %v1567 = vpop.f32.mrb[0].mxu0
      %1568 = vmatprep.mubr.bf16.mxu0 %v1034
      %1569 = vmatmul.mubr.bf16.gmra.mrb[0].mxu0 %v865
      %v1570 = vpop.f32.mrb[0].mxu0
      %v1571 = vadd.f32 0.0, %v1570
      %v1572 = vpop.f32.mrb[0].mxu0
      %v1573 = vpop.f32.mrb[0].mxu0
      %v1574 = vadd.f32 0.0, %v1573
      %v1575 = vpop.f32.mrb[0].mxu0
      %1576 = vmatprep.mubr.bf16.mxu0 %v1046
      %1577 = vmatmul.mubr.bf16.gmra.mrb[0].mxu0 %v866
      %v1578 = vpop.f32.mrb[0].mxu0
      %v1579 = vadd.f32 0.0, %v1578
      %v1580 = vpop.f32.mrb[0].mxu0
      %v1581 = vpop.f32.mrb[0].mxu0
      %v1582 = vadd.f32 0.0, %v1581
      %v1583 = vpop.f32.mrb[0].mxu0
      %1584 = vmatprep.mubr.bf16.mxu0 %v1058
      %1585 = vmatmul.mubr.bf16.gmra.mrb[0].mxu0 %v867
      %v1586 = vpop.f32.mrb[0].mxu0
      %v1587 = vadd.f32 0.0, %v1586
      %v1588 = vpop.f32.mrb[0].mxu0
      %v1589 = vpop.f32.mrb[0].mxu0
      %v1590 = vadd.f32 0.0, %v1589
      %v1591 = vpop.f32.mrb[0].mxu0
      %1592 = vmatprep.mubr.bf16.mxu0 %v1070
      %1593 = vmatmul.mubr.bf16.gmra.mrb[0].mxu0 %v868
      %v1594 = vpop.f32.mrb[0].mxu0
      %v1595 = vadd.f32 0.0, %v1594
      %v1596 = vpop.f32.mrb[0].mxu0
      %v1597 = vpop.f32.mrb[0].mxu0
      %v1598 = vadd.f32 0.0, %v1597
      %v1599 = vpop.f32.mrb[0].mxu0
      %1600 = vmatprep.mubr.bf16.mxu0 %v1082
      %1601 = vmatmul.mubr.bf16.gmra.mrb[0].mxu0 %v869
      %v1602 = vpop.f32.mrb[0].mxu0
      %v1603 = vadd.f32 0.0, %v1602
      %v1604 = vpop.f32.mrb[0].mxu0
      %v1605 = vpop.f32.mrb[0].mxu0
      %v1606 = vadd.f32 0.0, %v1605
      %v1607 = vpop.f32.mrb[0].mxu0
      %1608 = vmatprep.mubr.bf16.mxu0 %v1255
      %1609 = vmatmul.mubr.bf16.gmra.mrb[0].mxu0 %v870
      %v1610 = vpop.f32.mrb[0].mxu0
      %v1611 = vadd.f32 0.0, %v1610
      %v1612 = vpop.f32.mrb[0].mxu0
      %v1613 = vpop.f32.mrb[0].mxu0
      %v1614 = vadd.f32 0.0, %v1613
      %v1615 = vpop.f32.mrb[0].mxu0
      %1616 = vdwg.mxu0
      %1617 = vmatprep.subr.bf16.mxu0 0
      %1618 = vmatpush1.bf16.msra.mxu0 %v1424
      %1619 = vmatprep.subr.bf16.mxu0 0
      %1620 = vmatpush1.bf16.msra.mxu0 %v1425
      %1621 = vmatprep.subr.bf16.mxu0 0
      %1622 = vmatpush1.bf16.msra.mxu0 %v1426
      %1623 = vmatprep.subr.bf16.mxu0 0
      %1624 = vmatpush1.bf16.msra.mxu0 %v1427
      %1625 = vmatprep.subr.bf16.mxu0 0
      %1626 = vmatpush1.bf16.msra.mxu0 %v1428
      %1627 = vmatprep.subr.bf16.mxu0 0
      %1628 = vmatpush1.bf16.msra.mxu0 %v1429
      %1629 = vmatprep.subr.bf16.mxu0 0
      %1630 = vmatpush1.bf16.msra.mxu0 %v1430
      %1631 = vmatprep.subr.bf16.mxu0 0
      %1632 = vmatpush1.bf16.msra.mxu0 %v1431
      %1633 = vmatprep.subr.bf16.mxu0 0
      %1634 = vmatpush1.bf16.msra.mxu0 0
      %1635 = vmatprep.subr.bf16.mxu0 0
      %1636 = vmatpush1.bf16.msra.mxu0 0
      %1637 = vmatprep.subr.bf16.mxu0 0
      %1638 = vmatpush1.bf16.msra.mxu0 0
      %1639 = vmatprep.subr.bf16.mxu0 0
      %1640 = vmatpush1.bf16.msra.mxu0 0
      %1641 = vmatprep.subr.bf16.mxu0 0
      %1642 = vmatpush1.bf16.msra.mxu0 0
      %1643 = vmatprep.subr.bf16.mxu0 0
      %1644 = vmatpush1.bf16.msra.mxu0 0
      %1645 = vmatprep.subr.bf16.mxu0 0
      %1646 = vmatpush1.bf16.msra.mxu0 0
      %1647 = vmatprep.subr.bf16.mxu0 0
      %1648 = vmatpush1.bf16.msra.mxu0 0
      %1649 = vmatprep.mubr.bf16.mxu0 0
      %1650 = vmatmul.mubr.bf16.gmra.mrb[0].mxu0 %v1137
      %v1651 = vpop.f32.mrb[0].mxu0
      %v1652 = vadd.f32 %v1491, %v1651
      %v1653 = vpop.f32.mrb[0].mxu0
      %v1654 = vpop.f32.mrb[0].mxu0
      %v1655 = vadd.f32 %v1494, %v1654
      %v1656 = vpop.f32.mrb[0].mxu0
      %1657 = vmatprep.mubr.bf16.mxu0 0
      %1658 = vmatmul.mubr.bf16.gmra.mrb[0].mxu0 %v1140
      %v1659 = vpop.f32.mrb[0].mxu0
      %v1660 = vadd.f32 %v1499, %v1659
      %v1661 = vpop.f32.mrb[0].mxu0
      %v1662 = vpop.f32.mrb[0].mxu0
      %v1663 = vadd.f32 %v1502, %v1662
      %v1664 = vpop.f32.mrb[0].mxu0
      %1665 = vmatprep.mubr.bf16.mxu0 0
      %1666 = vmatmul.mubr.bf16.gmra.mrb[0].mxu0 %v1143
      %v1667 = vpop.f32.mrb[0].mxu0
      %v1668 = vadd.f32 %v1507, %v1667
      %v1669 = vpop.f32.mrb[0].mxu0
      %v1670 = vpop.f32.mrb[0].mxu0
      %v1671 = vadd.f32 %v1510, %v1670
      %v1672 = vpop.f32.mrb[0].mxu0
      %1673 = vmatprep.mubr.bf16.mxu0 0
      %1674 = vmatmul.mubr.bf16.gmra.mrb[0].mxu0 %v1146
      %v1675 = vpop.f32.mrb[0].mxu0
      %v1676 = vadd.f32 %v1515, %v1675
      %v1677 = vpop.f32.mrb[0].mxu0
      %v1678 = vpop.f32.mrb[0].mxu0
      %v1679 = vadd.f32 %v1518, %v1678
      %v1680 = vpop.f32.mrb[0].mxu0
      %1681 = vmatprep.mubr.bf16.mxu0 0
      %1682 = vmatmul.mubr.bf16.gmra.mrb[0].mxu0 %v1149
      %v1683 = vpop.f32.mrb[0].mxu0
      %v1684 = vadd.f32 %v1523, %v1683
      %v1685 = vpop.f32.mrb[0].mxu0
      %v1686 = vpop.f32.mrb[0].mxu0
      %v1687 = vadd.f32 %v1526, %v1686
      %v1688 = vpop.f32.mrb[0].mxu0
      %1689 = vmatprep.mubr.bf16.mxu0 0
      %1690 = vmatmul.mubr.bf16.gmra.mrb[0].mxu0 %v1152
      %v1691 = vpop.f32.mrb[0].mxu0
      %v1692 = vadd.f32 %v1531, %v1691
      %v1693 = vpop.f32.mrb[0].mxu0
      %v1694 = vpop.f32.mrb[0].mxu0
      %v1695 = vadd.f32 %v1534, %v1694
      %v1696 = vpop.f32.mrb[0].mxu0
      %1697 = vmatprep.mubr.bf16.mxu0 0
      %1698 = vmatmul.mubr.bf16.gmra.mrb[0].mxu0 %v1155
      %v1699 = vpop.f32.mrb[0].mxu0
      %v1700 = vadd.f32 %v1539, %v1699
      %v1701 = vpop.f32.mrb[0].mxu0
      %v1702 = vpop.f32.mrb[0].mxu0
      %v1703 = vadd.f32 %v1542, %v1702
      %v1704 = vpop.f32.mrb[0].mxu0
      %1705 = vmatprep.mubr.bf16.mxu0 0
      %1706 = vmatmul.mubr.bf16.gmra.mrb[0].mxu0 %v1158
      %v1707 = vpop.f32.mrb[0].mxu0
      %v1708 = vadd.f32 %v1547, %v1707
      %v1709 = vpop.f32.mrb[0].mxu0
      %v1710 = vpop.f32.mrb[0].mxu0
      %v1711 = vadd.f32 %v1550, %v1710
      %v1712 = vpop.f32.mrb[0].mxu0
      %1713 = vmatprep.mubr.bf16.mxu0 0
      %1714 = vmatmul.mubr.bf16.gmra.mrb[0].mxu0 %v1161
      %v1715 = vpop.f32.mrb[0].mxu0
      %v1716 = vadd.f32 %v1555, %v1715
      %v1717 = vpop.f32.mrb[0].mxu0
      %v1718 = vpop.f32.mrb[0].mxu0
      %v1719 = vadd.f32 %v1558, %v1718
      %v1720 = vpop.f32.mrb[0].mxu0
      %1721 = vmatprep.mubr.bf16.mxu0 0
      %1722 = vmatmul.mubr.bf16.gmra.mrb[0].mxu0 %v1164
      %v1723 = vpop.f32.mrb[0].mxu0
      %v1724 = vadd.f32 %v1563, %v1723
      %v1725 = vpop.f32.mrb[0].mxu0
      %v1726 = vpop.f32.mrb[0].mxu0
      %v1727 = vadd.f32 %v1566, %v1726
      %v1728 = vpop.f32.mrb[0].mxu0
      %1729 = vmatprep.mubr.bf16.mxu0 0
      %1730 = vmatmul.mubr.bf16.gmra.mrb[0].mxu0 %v1167
      %v1731 = vpop.f32.mrb[0].mxu0
      %v1732 = vadd.f32 %v1571, %v1731
      %v1733 = vpop.f32.mrb[0].mxu0
      %v1734 = vpop.f32.mrb[0].mxu0
      %v1735 = vadd.f32 %v1574, %v1734
      %v1736 = vpop.f32.mrb[0].mxu0
      %1737 = vmatprep.mubr.bf16.mxu0 0
      %1738 = vmatmul.mubr.bf16.gmra.mrb[0].mxu0 %v1170
      %v1739 = vpop.f32.mrb[0].mxu0
      %v1740 = vadd.f32 %v1579, %v1739
      %v1741 = vpop.f32.mrb[0].mxu0
      %v1742 = vpop.f32.mrb[0].mxu0
      %v1743 = vadd.f32 %v1582, %v1742
      %v1744 = vpop.f32.mrb[0].mxu0
      %1745 = vmatprep.mubr.bf16.mxu0 0
      %1746 = vmatmul.mubr.bf16.gmra.mrb[0].mxu0 %v1173
      %v1747 = vpop.f32.mrb[0].mxu0
      %v1748 = vadd.f32 %v1587, %v1747
      %v1749 = vpop.f32.mrb[0].mxu0
      %v1750 = vpop.f32.mrb[0].mxu0
      %v1751 = vadd.f32 %v1590, %v1750
      %v1752 = vpop.f32.mrb[0].mxu0
      %1753 = vmatprep.mubr.bf16.mxu0 0
      %1754 = vmatmul.mubr.bf16.gmra.mrb[0].mxu0 %v1176
      %v1755 = vpop.f32.mrb[0].mxu0
      %v1756 = vadd.f32 %v1595, %v1755
      %v1757 = vpop.f32.mrb[0].mxu0
      %v1758 = vpop.f32.mrb[0].mxu0
      %v1759 = vadd.f32 %v1598, %v1758
      %v1760 = vpop.f32.mrb[0].mxu0
      %1761 = vmatprep.mubr.bf16.mxu0 0
      %1762 = vmatmul.mubr.bf16.gmra.mrb[0].mxu0 %v1179
      %v1763 = vpop.f32.mrb[0].mxu0
      %v1764 = vadd.f32 %v1603, %v1763
      %v1765 = vpop.f32.mrb[0].mxu0
      %v1766 = vpop.f32.mrb[0].mxu0
      %v1767 = vadd.f32 %v1606, %v1766
      %v1768 = vpop.f32.mrb[0].mxu0
      %1769 = vmatprep.mubr.bf16.mxu0 0
      %1770 = vmatmul.mubr.bf16.gmra.mrb[0].mxu0 %v1261
      %v1771 = vpop.f32.mrb[0].mxu0
      %v1772 = vadd.f32 %v1611, %v1771
      %v1773 = vpop.f32.mrb[0].mxu0
      %v1774 = vpop.f32.mrb[0].mxu0
      %v1775 = vadd.f32 %v1614, %v1774
      %v1776 = vpop.f32.mrb[0].mxu0
      %1777 = vdwg.mxu0
      %v1826 = vunpack.c.l.b16 %v1196
      %v1827 = vunpack.c.l.b16 %v1197
      %v1828 = vunpack.c.l.b16 %v1198
      %v1829 = vunpack.c.l.b16 %v1199
      %v1830 = vunpack.c.l.b16 %v1200
      %v1831 = vunpack.c.l.b16 %v1201
      %v1832 = vunpack.c.l.b16 %v1202
      %v1833 = vunpack.c.l.b16 %v1203
      %v1834 = vunpack.c.l.b16 %v1204
      %v1835 = vunpack.c.l.b16 %v1205
      %v1836 = vunpack.c.l.b16 %v1206
      %v1837 = vunpack.c.l.b16 %v1207
      %v1838 = vunpack.c.l.b16 %v1208
      %v1839 = vunpack.c.l.b16 %v1209
      %v1840 = vunpack.c.l.b16 %v1210
      %v1841 = vunpack.c.l.b16 %v1211
      %v1842 = vunpack.c.l.b16 %v1212
      %v1843 = vunpack.c.l.b16 %v1213
      %v1844 = vunpack.c.l.b16 %v1214
      %v1845 = vunpack.c.l.b16 %v1215
      %v1846 = vunpack.c.l.b16 %v1216
      %v1847 = vunpack.c.l.b16 %v1217
      %v1848 = vunpack.c.l.b16 %v1218
      %v1849 = vunpack.c.l.b16 %v1219
      %v1850 = vunpack.c.l.b16 %v1220
      %v1851 = vunpack.c.l.b16 %v1221
      %v1852 = vunpack.c.l.b16 %v1222
      %v1853 = vunpack.c.l.b16 %v1223
      %v1854 = vunpack.c.l.b16 %v1224
      %v1855 = vunpack.c.l.b16 %v1225
      %v1856 = vunpack.c.l.b16 %v1226
      %v1857 = vunpack.c.l.b16 %v1227
      %v1858 = vunpack.c.l.b16 %v1228
      %v1859 = vunpack.c.l.b16 %v1229
      %v1860 = vunpack.c.l.b16 %v1230
      %v1861 = vunpack.c.l.b16 %v1231
      %v1862 = vunpack.c.l.b16 %v1232
      %v1863 = vunpack.c.l.b16 %v1233
      %v1864 = vunpack.c.l.b16 %v1234
      %v1865 = vunpack.c.l.b16 %v1235
      %v1866 = vunpack.c.l.b16 %v1236
      %v1867 = vunpack.c.l.b16 %v1237
      %v1868 = vunpack.c.l.b16 %v1238
      %v1869 = vunpack.c.l.b16 %v1239
      %v1870 = vunpack.c.l.b16 %v1240
      %v1871 = vunpack.c.l.b16 %v1241
      %v1872 = vunpack.c.l.b16 %v1242
      %v1873 = vunpack.c.l.b16 %v1243
      %v1874 = vpack.c.b16 %v1827, %v1826
      %v1875 = vpack.c.b16 %v1829, %v1828
      %v1876 = vpack.c.b16 %v1831, %v1830
      %v1877 = vpack.c.b16 %v1833, %v1832
      %v1878 = vpack.c.b16 %v1835, %v1834
      %v1879 = vpack.c.b16 %v1837, %v1836
      %v1880 = vpack.c.b16 %v1839, %v1838
      %v1881 = vpack.c.b16 %v1841, %v1840
      %v1882 = vpack.c.b16 %v1843, %v1842
      %v1883 = vpack.c.b16 %v1845, %v1844
      %v1884 = vpack.c.b16 %v1847, %v1846
      %v1885 = vpack.c.b16 %v1849, %v1848
      %v1886 = vpack.c.b16 %v1851, %v1850
      %v1887 = vpack.c.b16 %v1853, %v1852
      %v1888 = vpack.c.b16 %v1855, %v1854
      %v1889 = vpack.c.b16 %v1857, %v1856
      %v1890 = vpack.c.b16 %v1859, %v1858
      %v1891 = vpack.c.b16 %v1861, %v1860
      %v1892 = vpack.c.b16 %v1863, %v1862
      %v1893 = vpack.c.b16 %v1865, %v1864
      %v1894 = vpack.c.b16 %v1867, %v1866
      %v1895 = vpack.c.b16 %v1869, %v1868
      %v1896 = vpack.c.b16 %v1871, %v1870
      %v1897 = vpack.c.b16 %v1873, %v1872
      %1922 = vmatprep.subr.bf16.mxu0 0
      %1923 = vmatpush1.bf16.msra.mxu0 %v1874
      %1924 = vmatprep.subr.bf16.mxu0 0
      %1925 = vmatpush1.bf16.msra.mxu0 %v1875
      %1926 = vmatprep.subr.bf16.mxu0 0
      %1927 = vmatpush1.bf16.msra.mxu0 %v1876
      %1928 = vmatprep.subr.bf16.mxu0 0
      %1929 = vmatpush1.bf16.msra.mxu0 %v1877
      %1930 = vmatprep.subr.bf16.mxu0 0
      %1931 = vmatpush1.bf16.msra.mxu0 %v1878
      %1932 = vmatprep.subr.bf16.mxu0 0
      %1933 = vmatpush1.bf16.msra.mxu0 %v1879
      %1934 = vmatprep.subr.bf16.mxu0 0
      %1935 = vmatpush1.bf16.msra.mxu0 %v1880
      %1936 = vmatprep.subr.bf16.mxu0 0
      %1937 = vmatpush1.bf16.msra.mxu0 %v1881
      %1938 = vmatprep.subr.bf16.mxu0 0
      %1939 = vmatpush1.bf16.msra.mxu0 %v1882
      %1940 = vmatprep.subr.bf16.mxu0 0
      %1941 = vmatpush1.bf16.msra.mxu0 %v1883
      %1942 = vmatprep.subr.bf16.mxu0 0
      %1943 = vmatpush1.bf16.msra.mxu0 %v1884
      %1944 = vmatprep.subr.bf16.mxu0 0
      %1945 = vmatpush1.bf16.msra.mxu0 %v1885
      %1946 = vmatprep.subr.bf16.mxu0 0
      %1947 = vmatpush1.bf16.msra.mxu0 %v1886
      %1948 = vmatprep.subr.bf16.mxu0 0
      %1949 = vmatpush1.bf16.msra.mxu0 %v1887
      %1950 = vmatprep.subr.bf16.mxu0 0
      %1951 = vmatpush1.bf16.msra.mxu0 %v1888
      %1952 = vmatprep.subr.bf16.mxu0 0
      %1953 = vmatpush1.bf16.msra.mxu0 %v1889
      %1954 = vmatprep.mubr.bf16.mxu0 %v902
      %1955 = vmatmul.mubr.bf16.gmra.mrb[0].mxu0 %v854
      %v1956 = vpop.f32.mrb[0].mxu0
      %v1957 = vadd.f32 %v1652, %v1956
      %v1958 = vpop.f32.mrb[0].mxu0
      %v1959 = vpop.f32.mrb[0].mxu0
      %v1960 = vadd.f32 %v1655, %v1959
      %v1961 = vpop.f32.mrb[0].mxu0
      %1962 = vmatprep.mubr.bf16.mxu0 %v914
      %1963 = vmatmul.mubr.bf16.gmra.mrb[0].mxu0 %v855
      %v1964 = vpop.f32.mrb[0].mxu0
      %v1965 = vadd.f32 %v1660, %v1964
      %v1966 = vpop.f32.mrb[0].mxu0
      %v1967 = vpop.f32.mrb[0].mxu0
      %v1968 = vadd.f32 %v1663, %v1967
      %v1969 = vpop.f32.mrb[0].mxu0
      %1970 = vmatprep.mubr.bf16.mxu0 %v926
      %1971 = vmatmul.mubr.bf16.gmra.mrb[0].mxu0 %v856
      %v1972 = vpop.f32.mrb[0].mxu0
      %v1973 = vadd.f32 %v1668, %v1972
      %v1974 = vpop.f32.mrb[0].mxu0
      %v1975 = vpop.f32.mrb[0].mxu0
      %v1976 = vadd.f32 %v1671, %v1975
      %v1977 = vpop.f32.mrb[0].mxu0
      %1978 = vmatprep.mubr.bf16.mxu0 %v938
      %1979 = vmatmul.mubr.bf16.gmra.mrb[0].mxu0 %v857
      %v1980 = vpop.f32.mrb[0].mxu0
      %v1981 = vadd.f32 %v1676, %v1980
      %v1982 = vpop.f32.mrb[0].mxu0
      %v1983 = vpop.f32.mrb[0].mxu0
      %v1984 = vadd.f32 %v1679, %v1983
      %v1985 = vpop.f32.mrb[0].mxu0
      %1986 = vmatprep.mubr.bf16.mxu0 %v950
      %1987 = vmatmul.mubr.bf16.gmra.mrb[0].mxu0 %v858
      %v1988 = vpop.f32.mrb[0].mxu0
      %v1989 = vadd.f32 %v1684, %v1988
      %v1990 = vpop.f32.mrb[0].mxu0
      %v1991 = vpop.f32.mrb[0].mxu0
      %v1992 = vadd.f32 %v1687, %v1991
      %v1993 = vpop.f32.mrb[0].mxu0
      %1994 = vmatprep.mubr.bf16.mxu0 %v962
      %1995 = vmatmul.mubr.bf16.gmra.mrb[0].mxu0 %v859
      %v1996 = vpop.f32.mrb[0].mxu0
      %v1997 = vadd.f32 %v1692, %v1996
      %v1998 = vpop.f32.mrb[0].mxu0
      %v1999 = vpop.f32.mrb[0].mxu0
      %v2000 = vadd.f32 %v1695, %v1999
      %v2001 = vpop.f32.mrb[0].mxu0
      %2002 = vmatprep.mubr.bf16.mxu0 %v974
      %2003 = vmatmul.mubr.bf16.gmra.mrb[0].mxu0 %v860
      %v2004 = vpop.f32.mrb[0].mxu0
      %v2005 = vadd.f32 %v1700, %v2004
      %v2006 = vpop.f32.mrb[0].mxu0
      %v2007 = vpop.f32.mrb[0].mxu0
      %v2008 = vadd.f32 %v1703, %v2007
      %v2009 = vpop.f32.mrb[0].mxu0
      %2010 = vmatprep.mubr.bf16.mxu0 %v986
      %2011 = vmatmul.mubr.bf16.gmra.mrb[0].mxu0 %v861
      %v2012 = vpop.f32.mrb[0].mxu0
      %v2013 = vadd.f32 %v1708, %v2012
      %v2014 = vpop.f32.mrb[0].mxu0
      %v2015 = vpop.f32.mrb[0].mxu0
      %v2016 = vadd.f32 %v1711, %v2015
      %v2017 = vpop.f32.mrb[0].mxu0
      %2018 = vmatprep.mubr.bf16.mxu0 %v998
      %2019 = vmatmul.mubr.bf16.gmra.mrb[0].mxu0 %v862
      %v2020 = vpop.f32.mrb[0].mxu0
      %v2021 = vadd.f32 %v1716, %v2020
      %v2022 = vpop.f32.mrb[0].mxu0
      %v2023 = vpop.f32.mrb[0].mxu0
      %v2024 = vadd.f32 %v1719, %v2023
      %v2025 = vpop.f32.mrb[0].mxu0
      %2026 = vmatprep.mubr.bf16.mxu0 %v1010
      %2027 = vmatmul.mubr.bf16.gmra.mrb[0].mxu0 %v863
      %v2028 = vpop.f32.mrb[0].mxu0
      %v2029 = vadd.f32 %v1724, %v2028
      %v2030 = vpop.f32.mrb[0].mxu0
      %v2031 = vpop.f32.mrb[0].mxu0
      %v2032 = vadd.f32 %v1727, %v2031
      %v2033 = vpop.f32.mrb[0].mxu0
      %2034 = vmatprep.mubr.bf16.mxu0 %v1022
      %2035 = vmatmul.mubr.bf16.gmra.mrb[0].mxu0 %v864
      %v2036 = vpop.f32.mrb[0].mxu0
      %v2037 = vadd.f32 %v1732, %v2036
      %v2038 = vpop.f32.mrb[0].mxu0
      %v2039 = vpop.f32.mrb[0].mxu0
      %v2040 = vadd.f32 %v1735, %v2039
      %v2041 = vpop.f32.mrb[0].mxu0
      %2042 = vmatprep.mubr.bf16.mxu0 %v1034
      %2043 = vmatmul.mubr.bf16.gmra.mrb[0].mxu0 %v865
      %v2044 = vpop.f32.mrb[0].mxu0
      %v2045 = vadd.f32 %v1740, %v2044
      %v2046 = vpop.f32.mrb[0].mxu0
      %v2047 = vpop.f32.mrb[0].mxu0
      %v2048 = vadd.f32 %v1743, %v2047
      %v2049 = vpop.f32.mrb[0].mxu0
      %2050 = vmatprep.mubr.bf16.mxu0 %v1046
      %2051 = vmatmul.mubr.bf16.gmra.mrb[0].mxu0 %v866
      %v2052 = vpop.f32.mrb[0].mxu0
      %v2053 = vadd.f32 %v1748, %v2052
      %v2054 = vpop.f32.mrb[0].mxu0
      %v2055 = vpop.f32.mrb[0].mxu0
      %v2056 = vadd.f32 %v1751, %v2055
      %v2057 = vpop.f32.mrb[0].mxu0
      %2058 = vmatprep.mubr.bf16.mxu0 %v1058
      %2059 = vmatmul.mubr.bf16.gmra.mrb[0].mxu0 %v867
      %v2060 = vpop.f32.mrb[0].mxu0
      %v2061 = vadd.f32 %v1756, %v2060
      %v2062 = vpop.f32.mrb[0].mxu0
      %v2063 = vpop.f32.mrb[0].mxu0
      %v2064 = vadd.f32 %v1759, %v2063
      %v2065 = vpop.f32.mrb[0].mxu0
      %2066 = vmatprep.mubr.bf16.mxu0 %v1070
      %2067 = vmatmul.mubr.bf16.gmra.mrb[0].mxu0 %v868
      %v2068 = vpop.f32.mrb[0].mxu0
      %v2069 = vadd.f32 %v1764, %v2068
      %v2070 = vpop.f32.mrb[0].mxu0
      %v2071 = vpop.f32.mrb[0].mxu0
      %v2072 = vadd.f32 %v1767, %v2071
      %v2073 = vpop.f32.mrb[0].mxu0
      %2074 = vmatprep.mubr.bf16.mxu0 %v1082
      %2075 = vmatmul.mubr.bf16.gmra.mrb[0].mxu0 %v869
      %v2076 = vpop.f32.mrb[0].mxu0
      %v2077 = vadd.f32 %v1772, %v2076
      %v2078 = vpop.f32.mrb[0].mxu0
      %v2079 = vpop.f32.mrb[0].mxu0
      %v2080 = vadd.f32 %v1775, %v2079
      %v2081 = vpop.f32.mrb[0].mxu0
      %2082 = vdwg.mxu0
      %2083 = vmatprep.subr.bf16.mxu0 0
      %2084 = vmatpush1.bf16.msra.mxu0 %v1890
      %2085 = vmatprep.subr.bf16.mxu0 0
      %2086 = vmatpush1.bf16.msra.mxu0 %v1891
      %2087 = vmatprep.subr.bf16.mxu0 0
      %2088 = vmatpush1.bf16.msra.mxu0 %v1892
      %2089 = vmatprep.subr.bf16.mxu0 0
      %2090 = vmatpush1.bf16.msra.mxu0 %v1893
      %2091 = vmatprep.subr.bf16.mxu0 0
      %2092 = vmatpush1.bf16.msra.mxu0 %v1894
      %2093 = vmatprep.subr.bf16.mxu0 0
      %2094 = vmatpush1.bf16.msra.mxu0 %v1895
      %2095 = vmatprep.subr.bf16.mxu0 0
      %2096 = vmatpush1.bf16.msra.mxu0 %v1896
      %2097 = vmatprep.subr.bf16.mxu0 0
      %2098 = vmatpush1.bf16.msra.mxu0 %v1897
      %2099 = vmatprep.subr.bf16.mxu0 0
      %2100 = vmatpush1.bf16.msra.mxu0 0
      %2101 = vmatprep.subr.bf16.mxu0 0
      %2102 = vmatpush1.bf16.msra.mxu0 0
      %2103 = vmatprep.subr.bf16.mxu0 0
      %2104 = vmatpush1.bf16.msra.mxu0 0
      %2105 = vmatprep.subr.bf16.mxu0 0
      %2106 = vmatpush1.bf16.msra.mxu0 0
      %2107 = vmatprep.subr.bf16.mxu0 0
      %2108 = vmatpush1.bf16.msra.mxu0 0
      %2109 = vmatprep.subr.bf16.mxu0 0
      %2110 = vmatpush1.bf16.msra.mxu0 0
      %2111 = vmatprep.subr.bf16.mxu0 0
      %2112 = vmatpush1.bf16.msra.mxu0 0
      %2113 = vmatprep.subr.bf16.mxu0 0
      %2114 = vmatpush1.bf16.msra.mxu0 0
      %2115 = vmatprep.mubr.bf16.mxu0 0
      %2116 = vmatmul.mubr.bf16.gmra.mrb[0].mxu0 %v1134
      %v2117 = vpop.f32.mrb[0].mxu0
      %v2118 = vadd.f32 %v1957, %v2117
      %v2119 = vpop.f32.mrb[0].mxu0
      %v2120 = vpop.f32.mrb[0].mxu0
      %v2121 = vadd.f32 %v1960, %v2120
      %v2122 = vpop.f32.mrb[0].mxu0
      %2123 = vmatprep.mubr.bf16.mxu0 0
      %2124 = vmatmul.mubr.bf16.gmra.mrb[0].mxu0 %v1137
      %v2125 = vpop.f32.mrb[0].mxu0
      %v2126 = vadd.f32 %v1965, %v2125
      %v2127 = vpop.f32.mrb[0].mxu0
      %v2128 = vpop.f32.mrb[0].mxu0
      %v2129 = vadd.f32 %v1968, %v2128
      %v2130 = vpop.f32.mrb[0].mxu0
      %2131 = vmatprep.mubr.bf16.mxu0 0
      %2132 = vmatmul.mubr.bf16.gmra.mrb[0].mxu0 %v1140
      %v2133 = vpop.f32.mrb[0].mxu0
      %v2134 = vadd.f32 %v1973, %v2133
      %v2135 = vpop.f32.mrb[0].mxu0
      %v2136 = vpop.f32.mrb[0].mxu0
      %v2137 = vadd.f32 %v1976, %v2136
      %v2138 = vpop.f32.mrb[0].mxu0
      %2139 = vmatprep.mubr.bf16.mxu0 0
      %2140 = vmatmul.mubr.bf16.gmra.mrb[0].mxu0 %v1143
      %v2141 = vpop.f32.mrb[0].mxu0
      %v2142 = vadd.f32 %v1981, %v2141
      %v2143 = vpop.f32.mrb[0].mxu0
      %v2144 = vpop.f32.mrb[0].mxu0
      %v2145 = vadd.f32 %v1984, %v2144
      %v2146 = vpop.f32.mrb[0].mxu0
      %2147 = vmatprep.mubr.bf16.mxu0 0
      %2148 = vmatmul.mubr.bf16.gmra.mrb[0].mxu0 %v1146
      %v2149 = vpop.f32.mrb[0].mxu0
      %v2150 = vadd.f32 %v1989, %v2149
      %v2151 = vpop.f32.mrb[0].mxu0
      %v2152 = vpop.f32.mrb[0].mxu0
      %v2153 = vadd.f32 %v1992, %v2152
      %v2154 = vpop.f32.mrb[0].mxu0
      %2155 = vmatprep.mubr.bf16.mxu0 0
      %2156 = vmatmul.mubr.bf16.gmra.mrb[0].mxu0 %v1149
      %v2157 = vpop.f32.mrb[0].mxu0
      %v2158 = vadd.f32 %v1997, %v2157
      %v2159 = vpop.f32.mrb[0].mxu0
      %v2160 = vpop.f32.mrb[0].mxu0
      %v2161 = vadd.f32 %v2000, %v2160
      %v2162 = vpop.f32.mrb[0].mxu0
      %2163 = vmatprep.mubr.bf16.mxu0 0
      %2164 = vmatmul.mubr.bf16.gmra.mrb[0].mxu0 %v1152
      %v2165 = vpop.f32.mrb[0].mxu0
      %v2166 = vadd.f32 %v2005, %v2165
      %v2167 = vpop.f32.mrb[0].mxu0
      %v2168 = vpop.f32.mrb[0].mxu0
      %v2169 = vadd.f32 %v2008, %v2168
      %v2170 = vpop.f32.mrb[0].mxu0
      %2171 = vmatprep.mubr.bf16.mxu0 0
      %2172 = vmatmul.mubr.bf16.gmra.mrb[0].mxu0 %v1155
      %v2173 = vpop.f32.mrb[0].mxu0
      %v2174 = vadd.f32 %v2013, %v2173
      %v2175 = vpop.f32.mrb[0].mxu0
      %v2176 = vpop.f32.mrb[0].mxu0
      %v2177 = vadd.f32 %v2016, %v2176
      %v2178 = vpop.f32.mrb[0].mxu0
      %2179 = vmatprep.mubr.bf16.mxu0 0
      %2180 = vmatmul.mubr.bf16.gmra.mrb[0].mxu0 %v1158
      %v2181 = vpop.f32.mrb[0].mxu0
      %v2182 = vadd.f32 %v2021, %v2181
      %v2183 = vpop.f32.mrb[0].mxu0
      %v2184 = vpop.f32.mrb[0].mxu0
      %v2185 = vadd.f32 %v2024, %v2184
      %v2186 = vpop.f32.mrb[0].mxu0
      %2187 = vmatprep.mubr.bf16.mxu0 0
      %2188 = vmatmul.mubr.bf16.gmra.mrb[0].mxu0 %v1161
      %v2189 = vpop.f32.mrb[0].mxu0
      %v2190 = vadd.f32 %v2029, %v2189
      %v2191 = vpop.f32.mrb[0].mxu0
      %v2192 = vpop.f32.mrb[0].mxu0
      %v2193 = vadd.f32 %v2032, %v2192
      %v2194 = vpop.f32.mrb[0].mxu0
      %2195 = vmatprep.mubr.bf16.mxu0 0
      %2196 = vmatmul.mubr.bf16.gmra.mrb[0].mxu0 %v1164
      %v2197 = vpop.f32.mrb[0].mxu0
      %v2198 = vadd.f32 %v2037, %v2197
      %v2199 = vpop.f32.mrb[0].mxu0
      %v2200 = vpop.f32.mrb[0].mxu0
      %v2201 = vadd.f32 %v2040, %v2200
      %v2202 = vpop.f32.mrb[0].mxu0
      %2203 = vmatprep.mubr.bf16.mxu0 0
      %2204 = vmatmul.mubr.bf16.gmra.mrb[0].mxu0 %v1167
      %v2205 = vpop.f32.mrb[0].mxu0
      %v2206 = vadd.f32 %v2045, %v2205
      %v2207 = vpop.f32.mrb[0].mxu0
      %v2208 = vpop.f32.mrb[0].mxu0
      %v2209 = vadd.f32 %v2048, %v2208
      %v2210 = vpop.f32.mrb[0].mxu0
      %2211 = vmatprep.mubr.bf16.mxu0 0
      %2212 = vmatmul.mubr.bf16.gmra.mrb[0].mxu0 %v1170
      %v2213 = vpop.f32.mrb[0].mxu0
      %v2214 = vadd.f32 %v2053, %v2213
      %v2215 = vpop.f32.mrb[0].mxu0
      %v2216 = vpop.f32.mrb[0].mxu0
      %v2217 = vadd.f32 %v2056, %v2216
      %v2218 = vpop.f32.mrb[0].mxu0
      %2219 = vmatprep.mubr.bf16.mxu0 0
      %2220 = vmatmul.mubr.bf16.gmra.mrb[0].mxu0 %v1173
      %v2221 = vpop.f32.mrb[0].mxu0
      %v2222 = vadd.f32 %v2061, %v2221
      %v2223 = vpop.f32.mrb[0].mxu0
      %v2224 = vpop.f32.mrb[0].mxu0
      %v2225 = vadd.f32 %v2064, %v2224
      %v2226 = vpop.f32.mrb[0].mxu0
      %2227 = vmatprep.mubr.bf16.mxu0 0
      %2228 = vmatmul.mubr.bf16.gmra.mrb[0].mxu0 %v1176
      %v2229 = vpop.f32.mrb[0].mxu0
      %v2230 = vadd.f32 %v2069, %v2229
      %v2231 = vpop.f32.mrb[0].mxu0
      %v2232 = vpop.f32.mrb[0].mxu0
      %v2233 = vadd.f32 %v2072, %v2232
      %v2234 = vpop.f32.mrb[0].mxu0
      %2235 = vmatprep.mubr.bf16.mxu0 0
      %2236 = vmatmul.mubr.bf16.gmra.mrb[0].mxu0 %v1179
      %v2237 = vpop.f32.mrb[0].mxu0
      %v2238 = vadd.f32 %v2077, %v2237
      %v2239 = vpop.f32.mrb[0].mxu0
      %v2240 = vpop.f32.mrb[0].mxu0
      %v2241 = vadd.f32 %v2080, %v2240
      %v2242 = vpop.f32.mrb[0].mxu0
      %2243 = vdwg.mxu0
      %v2245 = vshrl.u32 %v871, 16
      %v2247 = vshll.u32 %v871, 16
      %v2249 = vrot.slane %v2247, 1
      %v2250 = vor.u32 %v2245, %v2249
      %v2252 = vshll.u32 %v889, 16
      %v2254 = vrot.slane %v2252, 1
      %v2255 = vsel %vm890, %v2250, %v2254
      %v2259 = vrot.slane %v871, 1
      %v2260 = vrot.slane %v889, 1
      %v2261 = vsel %vm1131, %v2259, %v2260
      %s2263 = scalar_lea.vmem %s3, 384
      %v2264 = vld [vmem:[%s2263] sm:$0xf]
      %v2265 = vld [vmem:[%s2263 + $0x4] sm:$0xf]
      %v2266 = vld [vmem:[%s2263 + $0x8] sm:$0xf]
      %v2267 = vld [vmem:[%s2263 + $0xc] sm:$0xf]
      %v2268 = vld [vmem:[%s2263 + $0x10] sm:$0xf]
      %v2269 = vld [vmem:[%s2263 + $0x14] sm:$0xf]
      %v2270 = vld [vmem:[%s2263 + $0x18] sm:$0xf]
      %v2271 = vld [vmem:[%s2263 + $0x1c] sm:$0xf]
      %v2272 = vld [vmem:[%s2263 + $0x20] sm:$0xf]
      %v2273 = vld [vmem:[%s2263 + $0x24] sm:$0xf]
      %v2274 = vld [vmem:[%s2263 + $0x28] sm:$0xf]
      %v2275 = vld [vmem:[%s2263 + $0x2c] sm:$0xf]
      %v2276 = vld [vmem:[%s2263 + $0x30] sm:$0xf]
      %v2277 = vld [vmem:[%s2263 + $0x34] sm:$0xf]
      %v2278 = vld [vmem:[%s2263 + $0x38] sm:$0xf]
      %v2279 = vld [vmem:[%s2263 + $0x3c] sm:$0xf]
      %v2280 = vld [vmem:[%s2263 + $0x40] sm:$0xf]
      %v2281 = vld [vmem:[%s2263 + $0x44] sm:$0xf]
      %v2282 = vld [vmem:[%s2263 + $0x48] sm:$0xf]
      %v2283 = vld [vmem:[%s2263 + $0x4c] sm:$0xf]
      %v2284 = vld [vmem:[%s2263 + $0x50] sm:$0xf]
      %v2285 = vld [vmem:[%s2263 + $0x54] sm:$0xf]
      %v2286 = vld [vmem:[%s2263 + $0x58] sm:$0xf]
      %v2287 = vld [vmem:[%s2263 + $0x5c] sm:$0xf]
      %v2288 = vld [vmem:[%s2263 + $0x60] sm:$0xf]
      %v2289 = vld [vmem:[%s2263 + $0x64] sm:$0xf]
      %v2290 = vld [vmem:[%s2263 + $0x68] sm:$0xf]
      %v2291 = vld [vmem:[%s2263 + $0x6c] sm:$0xf]
      %v2292 = vld [vmem:[%s2263 + $0x70] sm:$0xf]
      %v2293 = vld [vmem:[%s2263 + $0x74] sm:$0xf]
      %v2294 = vld [vmem:[%s2263 + $0x78] sm:$0xf]
      %v2295 = vld [vmem:[%s2263 + $0x7c] sm:$0xf]
      %v2296 = vld [vmem:[%s2263 + $0x80] sm:$0xf]
      %v2297 = vld [vmem:[%s2263 + $0x84] sm:$0xf]
      %v2298 = vld [vmem:[%s2263 + $0x88] sm:$0xf]
      %v2299 = vld [vmem:[%s2263 + $0x8c] sm:$0xf]
      %v2300 = vld [vmem:[%s2263 + $0x90] sm:$0xf]
      %v2301 = vld [vmem:[%s2263 + $0x94] sm:$0xf]
      %v2302 = vld [vmem:[%s2263 + $0x98] sm:$0xf]
      %v2303 = vld [vmem:[%s2263 + $0x9c] sm:$0xf]
      %v2304 = vld [vmem:[%s2263 + $0xa0] sm:$0xf]
      %v2305 = vld [vmem:[%s2263 + $0xa4] sm:$0xf]
      %v2306 = vld [vmem:[%s2263 + $0xa8] sm:$0xf]
      %v2307 = vld [vmem:[%s2263 + $0xac] sm:$0xf]
      %v2308 = vld [vmem:[%s2263 + $0xb0] sm:$0xf]
      %v2309 = vld [vmem:[%s2263 + $0xb4] sm:$0xf]
      %v2310 = vld [vmem:[%s2263 + $0xb8] sm:$0xf]
      %v2311 = vld [vmem:[%s2263 + $0xbc] sm:$0xf]
      %v2360 = vunpack.c.l.b16 %v2264
      %v2361 = vunpack.c.l.b16 %v2265
      %v2362 = vunpack.c.l.b16 %v2266
      %v2363 = vunpack.c.l.b16 %v2267
      %v2364 = vunpack.c.l.b16 %v2268
      %v2365 = vunpack.c.l.b16 %v2269
      %v2366 = vunpack.c.l.b16 %v2270
      %v2367 = vunpack.c.l.b16 %v2271
      %v2368 = vunpack.c.l.b16 %v2272
      %v2369 = vunpack.c.l.b16 %v2273
      %v2370 = vunpack.c.l.b16 %v2274
      %v2371 = vunpack.c.l.b16 %v2275
      %v2372 = vunpack.c.l.b16 %v2276
      %v2373 = vunpack.c.l.b16 %v2277
      %v2374 = vunpack.c.l.b16 %v2278
      %v2375 = vunpack.c.l.b16 %v2279
      %v2376 = vunpack.c.l.b16 %v2280
      %v2377 = vunpack.c.l.b16 %v2281
      %v2378 = vunpack.c.l.b16 %v2282
      %v2379 = vunpack.c.l.b16 %v2283
      %v2380 = vunpack.c.l.b16 %v2284
      %v2381 = vunpack.c.l.b16 %v2285
      %v2382 = vunpack.c.l.b16 %v2286
      %v2383 = vunpack.c.l.b16 %v2287
      %v2384 = vunpack.c.l.b16 %v2288
      %v2385 = vunpack.c.l.b16 %v2289
      %v2386 = vunpack.c.l.b16 %v2290
      %v2387 = vunpack.c.l.b16 %v2291
      %v2388 = vunpack.c.l.b16 %v2292
      %v2389 = vunpack.c.l.b16 %v2293
      %v2390 = vunpack.c.l.b16 %v2294
      %v2391 = vunpack.c.l.b16 %v2295
      %v2392 = vunpack.c.l.b16 %v2296
      %v2393 = vunpack.c.l.b16 %v2297
      %v2394 = vunpack.c.l.b16 %v2298
      %v2395 = vunpack.c.l.b16 %v2299
      %v2396 = vunpack.c.l.b16 %v2300
      %v2397 = vunpack.c.l.b16 %v2301
      %v2398 = vunpack.c.l.b16 %v2302
      %v2399 = vunpack.c.l.b16 %v2303
      %v2400 = vunpack.c.l.b16 %v2304
      %v2401 = vunpack.c.l.b16 %v2305
      %v2402 = vunpack.c.l.b16 %v2306
      %v2403 = vunpack.c.l.b16 %v2307
      %v2404 = vunpack.c.l.b16 %v2308
      %v2405 = vunpack.c.l.b16 %v2309
      %v2406 = vunpack.c.l.b16 %v2310
      %v2407 = vunpack.c.l.b16 %v2311
      %v2408 = vpack.c.b16 %v2361, %v2360
      %v2409 = vpack.c.b16 %v2363, %v2362
      %v2410 = vpack.c.b16 %v2365, %v2364
      %v2411 = vpack.c.b16 %v2367, %v2366
      %v2412 = vpack.c.b16 %v2369, %v2368
      %v2413 = vpack.c.b16 %v2371, %v2370
      %v2414 = vpack.c.b16 %v2373, %v2372
      %v2415 = vpack.c.b16 %v2375, %v2374
      %v2416 = vpack.c.b16 %v2377, %v2376
      %v2417 = vpack.c.b16 %v2379, %v2378
      %v2418 = vpack.c.b16 %v2381, %v2380
      %v2419 = vpack.c.b16 %v2383, %v2382
      %v2420 = vpack.c.b16 %v2385, %v2384
      %v2421 = vpack.c.b16 %v2387, %v2386
      %v2422 = vpack.c.b16 %v2389, %v2388
      %v2423 = vpack.c.b16 %v2391, %v2390
      %v2424 = vpack.c.b16 %v2393, %v2392
      %v2425 = vpack.c.b16 %v2395, %v2394
      %v2426 = vpack.c.b16 %v2397, %v2396
      %v2427 = vpack.c.b16 %v2399, %v2398
      %v2428 = vpack.c.b16 %v2401, %v2400
      %v2429 = vpack.c.b16 %v2403, %v2402
      %v2430 = vpack.c.b16 %v2405, %v2404
      %v2431 = vpack.c.b16 %v2407, %v2406
      %2456 = vmatprep.subr.bf16.mxu0 0
      %2457 = vmatpush1.bf16.msra.mxu0 %v2408
      %2458 = vmatprep.subr.bf16.mxu0 0
      %2459 = vmatpush1.bf16.msra.mxu0 %v2409
      %2460 = vmatprep.subr.bf16.mxu0 0
      %2461 = vmatpush1.bf16.msra.mxu0 %v2410
      %2462 = vmatprep.subr.bf16.mxu0 0
      %2463 = vmatpush1.bf16.msra.mxu0 %v2411
      %2464 = vmatprep.subr.bf16.mxu0 0
      %2465 = vmatpush1.bf16.msra.mxu0 %v2412
      %2466 = vmatprep.subr.bf16.mxu0 0
      %2467 = vmatpush1.bf16.msra.mxu0 %v2413
      %2468 = vmatprep.subr.bf16.mxu0 0
      %2469 = vmatpush1.bf16.msra.mxu0 %v2414
      %2470 = vmatprep.subr.bf16.mxu0 0
      %2471 = vmatpush1.bf16.msra.mxu0 %v2415
      %2472 = vmatprep.subr.bf16.mxu0 0
      %2473 = vmatpush1.bf16.msra.mxu0 %v2416
      %2474 = vmatprep.subr.bf16.mxu0 0
      %2475 = vmatpush1.bf16.msra.mxu0 %v2417
      %2476 = vmatprep.subr.bf16.mxu0 0
      %2477 = vmatpush1.bf16.msra.mxu0 %v2418
      %2478 = vmatprep.subr.bf16.mxu0 0
      %2479 = vmatpush1.bf16.msra.mxu0 %v2419
      %2480 = vmatprep.subr.bf16.mxu0 0
      %2481 = vmatpush1.bf16.msra.mxu0 %v2420
      %2482 = vmatprep.subr.bf16.mxu0 0
      %2483 = vmatpush1.bf16.msra.mxu0 %v2421
      %2484 = vmatprep.subr.bf16.mxu0 0
      %2485 = vmatpush1.bf16.msra.mxu0 %v2422
      %2486 = vmatprep.subr.bf16.mxu0 0
      %2487 = vmatpush1.bf16.msra.mxu0 %v2423
      %2488 = vmatprep.mubr.bf16.mxu0 %v926
      %2489 = vmatmul.mubr.bf16.gmra.mrb[0].mxu0 %v856
      %v2490 = vpop.f32.mrb[0].mxu0
      %v2491 = vadd.f32 0.0, %v2490
      %v2492 = vpop.f32.mrb[0].mxu0
      %v2493 = vpop.f32.mrb[0].mxu0
      %v2494 = vadd.f32 0.0, %v2493
      %v2495 = vpop.f32.mrb[0].mxu0
      %2496 = vmatprep.mubr.bf16.mxu0 %v938
      %2497 = vmatmul.mubr.bf16.gmra.mrb[0].mxu0 %v857
      %v2498 = vpop.f32.mrb[0].mxu0
      %v2499 = vadd.f32 0.0, %v2498
      %v2500 = vpop.f32.mrb[0].mxu0
      %v2501 = vpop.f32.mrb[0].mxu0
      %v2502 = vadd.f32 0.0, %v2501
      %v2503 = vpop.f32.mrb[0].mxu0
      %2504 = vmatprep.mubr.bf16.mxu0 %v950
      %2505 = vmatmul.mubr.bf16.gmra.mrb[0].mxu0 %v858
      %v2506 = vpop.f32.mrb[0].mxu0
      %v2507 = vadd.f32 0.0, %v2506
      %v2508 = vpop.f32.mrb[0].mxu0
      %v2509 = vpop.f32.mrb[0].mxu0
      %v2510 = vadd.f32 0.0, %v2509
      %v2511 = vpop.f32.mrb[0].mxu0
      %2512 = vmatprep.mubr.bf16.mxu0 %v962
      %2513 = vmatmul.mubr.bf16.gmra.mrb[0].mxu0 %v859
      %v2514 = vpop.f32.mrb[0].mxu0
      %v2515 = vadd.f32 0.0, %v2514
      %v2516 = vpop.f32.mrb[0].mxu0
      %v2517 = vpop.f32.mrb[0].mxu0
      %v2518 = vadd.f32 0.0, %v2517
      %v2519 = vpop.f32.mrb[0].mxu0
      %2520 = vmatprep.mubr.bf16.mxu0 %v974
      %2521 = vmatmul.mubr.bf16.gmra.mrb[0].mxu0 %v860
      %v2522 = vpop.f32.mrb[0].mxu0
      %v2523 = vadd.f32 0.0, %v2522
      %v2524 = vpop.f32.mrb[0].mxu0
      %v2525 = vpop.f32.mrb[0].mxu0
      %v2526 = vadd.f32 0.0, %v2525
      %v2527 = vpop.f32.mrb[0].mxu0
      %2528 = vmatprep.mubr.bf16.mxu0 %v986
      %2529 = vmatmul.mubr.bf16.gmra.mrb[0].mxu0 %v861
      %v2530 = vpop.f32.mrb[0].mxu0
      %v2531 = vadd.f32 0.0, %v2530
      %v2532 = vpop.f32.mrb[0].mxu0
      %v2533 = vpop.f32.mrb[0].mxu0
      %v2534 = vadd.f32 0.0, %v2533
      %v2535 = vpop.f32.mrb[0].mxu0
      %2536 = vmatprep.mubr.bf16.mxu0 %v998
      %2537 = vmatmul.mubr.bf16.gmra.mrb[0].mxu0 %v862
      %v2538 = vpop.f32.mrb[0].mxu0
      %v2539 = vadd.f32 0.0, %v2538
      %v2540 = vpop.f32.mrb[0].mxu0
      %v2541 = vpop.f32.mrb[0].mxu0
      %v2542 = vadd.f32 0.0, %v2541
      %v2543 = vpop.f32.mrb[0].mxu0
      %2544 = vmatprep.mubr.bf16.mxu0 %v1010
      %2545 = vmatmul.mubr.bf16.gmra.mrb[0].mxu0 %v863
      %v2546 = vpop.f32.mrb[0].mxu0
      %v2547 = vadd.f32 0.0, %v2546
      %v2548 = vpop.f32.mrb[0].mxu0
      %v2549 = vpop.f32.mrb[0].mxu0
      %v2550 = vadd.f32 0.0, %v2549
      %v2551 = vpop.f32.mrb[0].mxu0
      %2552 = vmatprep.mubr.bf16.mxu0 %v1022
      %2553 = vmatmul.mubr.bf16.gmra.mrb[0].mxu0 %v864
      %v2554 = vpop.f32.mrb[0].mxu0
      %v2555 = vadd.f32 0.0, %v2554
      %v2556 = vpop.f32.mrb[0].mxu0
      %v2557 = vpop.f32.mrb[0].mxu0
      %v2558 = vadd.f32 0.0, %v2557
      %v2559 = vpop.f32.mrb[0].mxu0
      %2560 = vmatprep.mubr.bf16.mxu0 %v1034
      %2561 = vmatmul.mubr.bf16.gmra.mrb[0].mxu0 %v865
      %v2562 = vpop.f32.mrb[0].mxu0
      %v2563 = vadd.f32 0.0, %v2562
      %v2564 = vpop.f32.mrb[0].mxu0
      %v2565 = vpop.f32.mrb[0].mxu0
      %v2566 = vadd.f32 0.0, %v2565
      %v2567 = vpop.f32.mrb[0].mxu0
      %2568 = vmatprep.mubr.bf16.mxu0 %v1046
      %2569 = vmatmul.mubr.bf16.gmra.mrb[0].mxu0 %v866
      %v2570 = vpop.f32.mrb[0].mxu0
      %v2571 = vadd.f32 0.0, %v2570
      %v2572 = vpop.f32.mrb[0].mxu0
      %v2573 = vpop.f32.mrb[0].mxu0
      %v2574 = vadd.f32 0.0, %v2573
      %v2575 = vpop.f32.mrb[0].mxu0
      %2576 = vmatprep.mubr.bf16.mxu0 %v1058
      %2577 = vmatmul.mubr.bf16.gmra.mrb[0].mxu0 %v867
      %v2578 = vpop.f32.mrb[0].mxu0
      %v2579 = vadd.f32 0.0, %v2578
      %v2580 = vpop.f32.mrb[0].mxu0
      %v2581 = vpop.f32.mrb[0].mxu0
      %v2582 = vadd.f32 0.0, %v2581
      %v2583 = vpop.f32.mrb[0].mxu0
      %2584 = vmatprep.mubr.bf16.mxu0 %v1070
      %2585 = vmatmul.mubr.bf16.gmra.mrb[0].mxu0 %v868
      %v2586 = vpop.f32.mrb[0].mxu0
      %v2587 = vadd.f32 0.0, %v2586
      %v2588 = vpop.f32.mrb[0].mxu0
      %v2589 = vpop.f32.mrb[0].mxu0
      %v2590 = vadd.f32 0.0, %v2589
      %v2591 = vpop.f32.mrb[0].mxu0
      %2592 = vmatprep.mubr.bf16.mxu0 %v1082
      %2593 = vmatmul.mubr.bf16.gmra.mrb[0].mxu0 %v869
      %v2594 = vpop.f32.mrb[0].mxu0
      %v2595 = vadd.f32 0.0, %v2594
      %v2596 = vpop.f32.mrb[0].mxu0
      %v2597 = vpop.f32.mrb[0].mxu0
      %v2598 = vadd.f32 0.0, %v2597
      %v2599 = vpop.f32.mrb[0].mxu0
      %2600 = vmatprep.mubr.bf16.mxu0 %v1255
      %2601 = vmatmul.mubr.bf16.gmra.mrb[0].mxu0 %v870
      %v2602 = vpop.f32.mrb[0].mxu0
      %v2603 = vadd.f32 0.0, %v2602
      %v2604 = vpop.f32.mrb[0].mxu0
      %v2605 = vpop.f32.mrb[0].mxu0
      %v2606 = vadd.f32 0.0, %v2605
      %v2607 = vpop.f32.mrb[0].mxu0
      %2608 = vmatprep.mubr.bf16.mxu0 %v2255
      %2609 = vmatmul.mubr.bf16.gmra.mrb[0].mxu0 %v871
      %v2610 = vpop.f32.mrb[0].mxu0
      %v2611 = vadd.f32 0.0, %v2610
      %v2612 = vpop.f32.mrb[0].mxu0
      %v2613 = vpop.f32.mrb[0].mxu0
      %v2614 = vadd.f32 0.0, %v2613
      %v2615 = vpop.f32.mrb[0].mxu0
      %2616 = vdwg.mxu0
      %2617 = vmatprep.subr.bf16.mxu0 0
      %2618 = vmatpush1.bf16.msra.mxu0 %v2424
      %2619 = vmatprep.subr.bf16.mxu0 0
      %2620 = vmatpush1.bf16.msra.mxu0 %v2425
      %2621 = vmatprep.subr.bf16.mxu0 0
      %2622 = vmatpush1.bf16.msra.mxu0 %v2426
      %2623 = vmatprep.subr.bf16.mxu0 0
      %2624 = vmatpush1.bf16.msra.mxu0 %v2427
      %2625 = vmatprep.subr.bf16.mxu0 0
      %2626 = vmatpush1.bf16.msra.mxu0 %v2428
      %2627 = vmatprep.subr.bf16.mxu0 0
      %2628 = vmatpush1.bf16.msra.mxu0 %v2429
      %2629 = vmatprep.subr.bf16.mxu0 0
      %2630 = vmatpush1.bf16.msra.mxu0 %v2430
      %2631 = vmatprep.subr.bf16.mxu0 0
      %2632 = vmatpush1.bf16.msra.mxu0 %v2431
      %2633 = vmatprep.subr.bf16.mxu0 0
      %2634 = vmatpush1.bf16.msra.mxu0 0
      %2635 = vmatprep.subr.bf16.mxu0 0
      %2636 = vmatpush1.bf16.msra.mxu0 0
      %2637 = vmatprep.subr.bf16.mxu0 0
      %2638 = vmatpush1.bf16.msra.mxu0 0
      %2639 = vmatprep.subr.bf16.mxu0 0
      %2640 = vmatpush1.bf16.msra.mxu0 0
      %2641 = vmatprep.subr.bf16.mxu0 0
      %2642 = vmatpush1.bf16.msra.mxu0 0
      %2643 = vmatprep.subr.bf16.mxu0 0
      %2644 = vmatpush1.bf16.msra.mxu0 0
      %2645 = vmatprep.subr.bf16.mxu0 0
      %2646 = vmatpush1.bf16.msra.mxu0 0
      %2647 = vmatprep.subr.bf16.mxu0 0
      %2648 = vmatpush1.bf16.msra.mxu0 0
      %2649 = vmatprep.mubr.bf16.mxu0 0
      %2650 = vmatmul.mubr.bf16.gmra.mrb[0].mxu0 %v1140
      %v2651 = vpop.f32.mrb[0].mxu0
      %v2652 = vadd.f32 %v2491, %v2651
      %v2653 = vpop.f32.mrb[0].mxu0
      %v2654 = vpop.f32.mrb[0].mxu0
      %v2655 = vadd.f32 %v2494, %v2654
      %v2656 = vpop.f32.mrb[0].mxu0
      %2657 = vmatprep.mubr.bf16.mxu0 0
      %2658 = vmatmul.mubr.bf16.gmra.mrb[0].mxu0 %v1143
      %v2659 = vpop.f32.mrb[0].mxu0
      %v2660 = vadd.f32 %v2499, %v2659
      %v2661 = vpop.f32.mrb[0].mxu0
      %v2662 = vpop.f32.mrb[0].mxu0
      %v2663 = vadd.f32 %v2502, %v2662
      %v2664 = vpop.f32.mrb[0].mxu0
      %2665 = vmatprep.mubr.bf16.mxu0 0
      %2666 = vmatmul.mubr.bf16.gmra.mrb[0].mxu0 %v1146
      %v2667 = vpop.f32.mrb[0].mxu0
      %v2668 = vadd.f32 %v2507, %v2667
      %v2669 = vpop.f32.mrb[0].mxu0
      %v2670 = vpop.f32.mrb[0].mxu0
      %v2671 = vadd.f32 %v2510, %v2670
      %v2672 = vpop.f32.mrb[0].mxu0
      %2673 = vmatprep.mubr.bf16.mxu0 0
      %2674 = vmatmul.mubr.bf16.gmra.mrb[0].mxu0 %v1149
      %v2675 = vpop.f32.mrb[0].mxu0
      %v2676 = vadd.f32 %v2515, %v2675
      %v2677 = vpop.f32.mrb[0].mxu0
      %v2678 = vpop.f32.mrb[0].mxu0
      %v2679 = vadd.f32 %v2518, %v2678
      %v2680 = vpop.f32.mrb[0].mxu0
      %2681 = vmatprep.mubr.bf16.mxu0 0
      %2682 = vmatmul.mubr.bf16.gmra.mrb[0].mxu0 %v1152
      %v2683 = vpop.f32.mrb[0].mxu0
      %v2684 = vadd.f32 %v2523, %v2683
      %v2685 = vpop.f32.mrb[0].mxu0
      %v2686 = vpop.f32.mrb[0].mxu0
      %v2687 = vadd.f32 %v2526, %v2686
      %v2688 = vpop.f32.mrb[0].mxu0
      %2689 = vmatprep.mubr.bf16.mxu0 0
      %2690 = vmatmul.mubr.bf16.gmra.mrb[0].mxu0 %v1155
      %v2691 = vpop.f32.mrb[0].mxu0
      %v2692 = vadd.f32 %v2531, %v2691
      %v2693 = vpop.f32.mrb[0].mxu0
      %v2694 = vpop.f32.mrb[0].mxu0
      %v2695 = vadd.f32 %v2534, %v2694
      %v2696 = vpop.f32.mrb[0].mxu0
      %2697 = vmatprep.mubr.bf16.mxu0 0
      %2698 = vmatmul.mubr.bf16.gmra.mrb[0].mxu0 %v1158
      %v2699 = vpop.f32.mrb[0].mxu0
      %v2700 = vadd.f32 %v2539, %v2699
      %v2701 = vpop.f32.mrb[0].mxu0
      %v2702 = vpop.f32.mrb[0].mxu0
      %v2703 = vadd.f32 %v2542, %v2702
      %v2704 = vpop.f32.mrb[0].mxu0
      %2705 = vmatprep.mubr.bf16.mxu0 0
      %2706 = vmatmul.mubr.bf16.gmra.mrb[0].mxu0 %v1161
      %v2707 = vpop.f32.mrb[0].mxu0
      %v2708 = vadd.f32 %v2547, %v2707
      %v2709 = vpop.f32.mrb[0].mxu0
      %v2710 = vpop.f32.mrb[0].mxu0
      %v2711 = vadd.f32 %v2550, %v2710
      %v2712 = vpop.f32.mrb[0].mxu0
      %2713 = vmatprep.mubr.bf16.mxu0 0
      %2714 = vmatmul.mubr.bf16.gmra.mrb[0].mxu0 %v1164
      %v2715 = vpop.f32.mrb[0].mxu0
      %v2716 = vadd.f32 %v2555, %v2715
      %v2717 = vpop.f32.mrb[0].mxu0
      %v2718 = vpop.f32.mrb[0].mxu0
      %v2719 = vadd.f32 %v2558, %v2718
      %v2720 = vpop.f32.mrb[0].mxu0
      %2721 = vmatprep.mubr.bf16.mxu0 0
      %2722 = vmatmul.mubr.bf16.gmra.mrb[0].mxu0 %v1167
      %v2723 = vpop.f32.mrb[0].mxu0
      %v2724 = vadd.f32 %v2563, %v2723
      %v2725 = vpop.f32.mrb[0].mxu0
      %v2726 = vpop.f32.mrb[0].mxu0
      %v2727 = vadd.f32 %v2566, %v2726
      %v2728 = vpop.f32.mrb[0].mxu0
      %2729 = vmatprep.mubr.bf16.mxu0 0
      %2730 = vmatmul.mubr.bf16.gmra.mrb[0].mxu0 %v1170
      %v2731 = vpop.f32.mrb[0].mxu0
      %v2732 = vadd.f32 %v2571, %v2731
      %v2733 = vpop.f32.mrb[0].mxu0
      %v2734 = vpop.f32.mrb[0].mxu0
      %v2735 = vadd.f32 %v2574, %v2734
      %v2736 = vpop.f32.mrb[0].mxu0
      %2737 = vmatprep.mubr.bf16.mxu0 0
      %2738 = vmatmul.mubr.bf16.gmra.mrb[0].mxu0 %v1173
      %v2739 = vpop.f32.mrb[0].mxu0
      %v2740 = vadd.f32 %v2579, %v2739
      %v2741 = vpop.f32.mrb[0].mxu0
      %v2742 = vpop.f32.mrb[0].mxu0
      %v2743 = vadd.f32 %v2582, %v2742
      %v2744 = vpop.f32.mrb[0].mxu0
      %2745 = vmatprep.mubr.bf16.mxu0 0
      %2746 = vmatmul.mubr.bf16.gmra.mrb[0].mxu0 %v1176
      %v2747 = vpop.f32.mrb[0].mxu0
      %v2748 = vadd.f32 %v2587, %v2747
      %v2749 = vpop.f32.mrb[0].mxu0
      %v2750 = vpop.f32.mrb[0].mxu0
      %v2751 = vadd.f32 %v2590, %v2750
      %v2752 = vpop.f32.mrb[0].mxu0
      %2753 = vmatprep.mubr.bf16.mxu0 0
      %2754 = vmatmul.mubr.bf16.gmra.mrb[0].mxu0 %v1179
      %v2755 = vpop.f32.mrb[0].mxu0
      %v2756 = vadd.f32 %v2595, %v2755
      %v2757 = vpop.f32.mrb[0].mxu0
      %v2758 = vpop.f32.mrb[0].mxu0
      %v2759 = vadd.f32 %v2598, %v2758
      %v2760 = vpop.f32.mrb[0].mxu0
      %2761 = vmatprep.mubr.bf16.mxu0 0
      %2762 = vmatmul.mubr.bf16.gmra.mrb[0].mxu0 %v1261
      %v2763 = vpop.f32.mrb[0].mxu0
      %v2764 = vadd.f32 %v2603, %v2763
      %v2765 = vpop.f32.mrb[0].mxu0
      %v2766 = vpop.f32.mrb[0].mxu0
      %v2767 = vadd.f32 %v2606, %v2766
      %v2768 = vpop.f32.mrb[0].mxu0
      %2769 = vmatprep.mubr.bf16.mxu0 0
      %2770 = vmatmul.mubr.bf16.gmra.mrb[0].mxu0 %v2261
      %v2771 = vpop.f32.mrb[0].mxu0
      %v2772 = vadd.f32 %v2611, %v2771
      %v2773 = vpop.f32.mrb[0].mxu0
      %v2774 = vpop.f32.mrb[0].mxu0
      %v2775 = vadd.f32 %v2614, %v2774
      %v2776 = vpop.f32.mrb[0].mxu0
      %2777 = vdwg.mxu0
      %v2778 = vadd.f32 %v2118, %v2652
      %v2779 = vadd.f32 %v2121, %v2655
      %v2780 = vadd.f32 %v2126, %v2660
      %v2781 = vadd.f32 %v2129, %v2663
      %v2782 = vadd.f32 %v2134, %v2668
      %v2783 = vadd.f32 %v2137, %v2671
      %v2784 = vadd.f32 %v2142, %v2676
      %v2785 = vadd.f32 %v2145, %v2679
      %v2786 = vadd.f32 %v2150, %v2684
      %v2787 = vadd.f32 %v2153, %v2687
      %v2788 = vadd.f32 %v2158, %v2692
      %v2789 = vadd.f32 %v2161, %v2695
      %v2790 = vadd.f32 %v2166, %v2700
      %v2791 = vadd.f32 %v2169, %v2703
      %v2792 = vadd.f32 %v2174, %v2708
      %v2793 = vadd.f32 %v2177, %v2711
      %v2794 = vadd.f32 %v2182, %v2716
      %v2795 = vadd.f32 %v2185, %v2719
      %v2796 = vadd.f32 %v2190, %v2724
      %v2797 = vadd.f32 %v2193, %v2727
      %v2798 = vadd.f32 %v2198, %v2732
      %v2799 = vadd.f32 %v2201, %v2735
      %v2800 = vadd.f32 %v2206, %v2740
      %v2801 = vadd.f32 %v2209, %v2743
      %v2802 = vadd.f32 %v2214, %v2748
      %v2803 = vadd.f32 %v2217, %v2751
      %v2804 = vadd.f32 %v2222, %v2756
      %v2805 = vadd.f32 %v2225, %v2759
      %v2806 = vadd.f32 %v2230, %v2764
      %v2807 = vadd.f32 %v2233, %v2767
      %v2808 = vadd.f32 %v2238, %v2772
      %v2809 = vadd.f32 %v2241, %v2775
      %v2810 = vpack.c.bf16 %v2779, %v2778
      %v2811 = vpack.c.bf16 %v2781, %v2780
      %v2812 = vpack.c.bf16 %v2783, %v2782
      %v2813 = vpack.c.bf16 %v2785, %v2784
      %v2814 = vpack.c.bf16 %v2787, %v2786
      %v2815 = vpack.c.bf16 %v2789, %v2788
      %v2816 = vpack.c.bf16 %v2791, %v2790
      %v2817 = vpack.c.bf16 %v2793, %v2792
      %v2818 = vpack.c.bf16 %v2795, %v2794
      %v2819 = vpack.c.bf16 %v2797, %v2796
      %v2820 = vpack.c.bf16 %v2799, %v2798
      %v2821 = vpack.c.bf16 %v2801, %v2800
      %v2822 = vpack.c.bf16 %v2803, %v2802
      %v2823 = vpack.c.bf16 %v2805, %v2804
      %v2824 = vpack.c.bf16 %v2807, %v2806
      %v2825 = vpack.c.bf16 %v2809, %v2808
      %v2842 = vunpack.c.l.b16 %v2810
      %v2843 = vunpack.c.h.b16 %v2810
      %v2844 = vunpack.c.l.b16 %v2811
      %v2845 = vunpack.c.h.b16 %v2811
      %v2846 = vunpack.c.l.b16 %v2812
      %v2847 = vunpack.c.h.b16 %v2812
      %v2848 = vunpack.c.l.b16 %v2813
      %v2849 = vunpack.c.h.b16 %v2813
      %v2850 = vunpack.c.l.b16 %v2814
      %v2851 = vunpack.c.h.b16 %v2814
      %v2852 = vunpack.c.l.b16 %v2815
      %v2853 = vunpack.c.h.b16 %v2815
      %v2854 = vunpack.c.l.b16 %v2816
      %v2855 = vunpack.c.h.b16 %v2816
      %v2856 = vunpack.c.l.b16 %v2817
      %v2857 = vunpack.c.h.b16 %v2817
      %v2858 = vunpack.c.l.b16 %v2818
      %v2859 = vunpack.c.h.b16 %v2818
      %v2860 = vunpack.c.l.b16 %v2819
      %v2861 = vunpack.c.h.b16 %v2819
      %v2862 = vunpack.c.l.b16 %v2820
      %v2863 = vunpack.c.h.b16 %v2820
      %v2864 = vunpack.c.l.b16 %v2821
      %v2865 = vunpack.c.h.b16 %v2821
      %v2866 = vunpack.c.l.b16 %v2822
      %v2867 = vunpack.c.h.b16 %v2822
      %v2868 = vunpack.c.l.b16 %v2823
      %v2869 = vunpack.c.h.b16 %v2823
      %v2870 = vunpack.c.l.b16 %v2824
      %v2871 = vunpack.c.h.b16 %v2824
      %v2872 = vunpack.c.l.b16 %v2825
      %v2873 = vunpack.c.h.b16 %v2825
      %v2874 = vpack.c.b16 %v2842, %v2842
      %v2875 = vpack.c.b16 %v2843, %v2843
      %v2876 = vpack.c.b16 %v2844, %v2844
      %v2877 = vpack.c.b16 %v2845, %v2845
      %v2878 = vpack.c.b16 %v2846, %v2846
      %v2879 = vpack.c.b16 %v2847, %v2847
      %v2880 = vpack.c.b16 %v2848, %v2848
      %v2881 = vpack.c.b16 %v2849, %v2849
      %v2882 = vpack.c.b16 %v2850, %v2850
      %v2883 = vpack.c.b16 %v2851, %v2851
      %v2884 = vpack.c.b16 %v2852, %v2852
      %v2885 = vpack.c.b16 %v2853, %v2853
      %v2886 = vpack.c.b16 %v2854, %v2854
      %v2887 = vpack.c.b16 %v2855, %v2855
      %v2888 = vpack.c.b16 %v2856, %v2856
      %v2889 = vpack.c.b16 %v2857, %v2857
      %v2890 = vpack.c.b16 %v2858, %v2858
      %v2891 = vpack.c.b16 %v2859, %v2859
      %v2892 = vpack.c.b16 %v2860, %v2860
      %v2893 = vpack.c.b16 %v2861, %v2861
      %v2894 = vpack.c.b16 %v2862, %v2862
      %v2895 = vpack.c.b16 %v2863, %v2863
      %v2896 = vpack.c.b16 %v2864, %v2864
      %v2897 = vpack.c.b16 %v2865, %v2865
      %v2898 = vpack.c.b16 %v2866, %v2866
      %v2899 = vpack.c.b16 %v2867, %v2867
      %v2900 = vpack.c.b16 %v2868, %v2868
      %v2901 = vpack.c.b16 %v2869, %v2869
      %v2902 = vpack.c.b16 %v2870, %v2870
      %v2903 = vpack.c.b16 %v2871, %v2871
      %v2904 = vpack.c.b16 %v2872, %v2872
      %v2905 = vpack.c.b16 %v2873, %v2873
      %2938 = vst [vmem:[%s457] sm:$0xf] %v2874
      %2939 = vst [vmem:[%s457 + $0x4] sm:$0xf] %v2875
      %2940 = vst [vmem:[%s457 + $0x8] sm:$0xf] %v2876
      %2941 = vst [vmem:[%s457 + $0xc] sm:$0xf] %v2877
      %2942 = vst [vmem:[%s457 + $0x10] sm:$0xf] %v2878
      %2943 = vst [vmem:[%s457 + $0x14] sm:$0xf] %v2879
      %2944 = vst [vmem:[%s457 + $0x18] sm:$0xf] %v2880
      %2945 = vst [vmem:[%s457 + $0x1c] sm:$0xf] %v2881
      %2946 = vst [vmem:[%s457 + $0x20] sm:$0xf] %v2882
      %2947 = vst [vmem:[%s457 + $0x24] sm:$0xf] %v2883
      %2948 = vst [vmem:[%s457 + $0x28] sm:$0xf] %v2884
      %2949 = vst [vmem:[%s457 + $0x2c] sm:$0xf] %v2885
      %2950 = vst [vmem:[%s457 + $0x30] sm:$0xf] %v2886
      %2951 = vst [vmem:[%s457 + $0x34] sm:$0xf] %v2887
      %2952 = vst [vmem:[%s457 + $0x38] sm:$0xf] %v2888
      %2953 = vst [vmem:[%s457 + $0x3c] sm:$0xf] %v2889
      %2954 = vst [vmem:[%s457 + $0x40] sm:$0xf] %v2890
      %2955 = vst [vmem:[%s457 + $0x44] sm:$0xf] %v2891
      %2956 = vst [vmem:[%s457 + $0x48] sm:$0xf] %v2892
      %2957 = vst [vmem:[%s457 + $0x4c] sm:$0xf] %v2893
      %2958 = vst [vmem:[%s457 + $0x50] sm:$0xf] %v2894
      %2959 = vst [vmem:[%s457 + $0x54] sm:$0xf] %v2895
      %2960 = vst [vmem:[%s457 + $0x58] sm:$0xf] %v2896
      %2961 = vst [vmem:[%s457 + $0x5c] sm:$0xf] %v2897
      %2962 = vst [vmem:[%s457 + $0x60] sm:$0xf] %v2898
      %2963 = vst [vmem:[%s457 + $0x64] sm:$0xf] %v2899
      %2964 = vst [vmem:[%s457 + $0x68] sm:$0xf] %v2900
      %2965 = vst [vmem:[%s457 + $0x6c] sm:$0xf] %v2901
      %2966 = vst [vmem:[%s457 + $0x70] sm:$0xf] %v2902
      %2967 = vst [vmem:[%s457 + $0x74] sm:$0xf] %v2903
      %2968 = vst [vmem:[%s457 + $0x78] sm:$0xf] %v2904
      %2969 = vst [vmem:[%s457 + $0x7c] sm:$0xf] %v2905
      %v2970 = vadd.f32 %v2778, %v2779
      %v2971 = vadd.f32 %v2970, %v2780
      %v2972 = vadd.f32 %v2971, %v2781
      %v2973 = vadd.f32 %v2972, %v2782
      %v2974 = vadd.f32 %v2973, %v2783
      %v2975 = vadd.f32 %v2974, %v2784
      %v2976 = vadd.f32 %v2975, %v2785
      %v2977 = vadd.f32 %v2976, %v2786
      %v2978 = vadd.f32 %v2977, %v2787
      %v2979 = vadd.f32 %v2978, %v2788
      %v2980 = vadd.f32 %v2979, %v2789
      %v2981 = vadd.f32 %v2980, %v2790
      %v2982 = vadd.f32 %v2981, %v2791
      %v2983 = vadd.f32 %v2982, %v2792
      %v2984 = vadd.f32 %v2983, %v2793
      %v2985 = vadd.f32 %v2984, %v2794
      %v2986 = vadd.f32 %v2985, %v2795
      %v2987 = vadd.f32 %v2986, %v2796
      %v2988 = vadd.f32 %v2987, %v2797
      %v2989 = vadd.f32 %v2988, %v2798
      %v2990 = vadd.f32 %v2989, %v2799
      %v2991 = vadd.f32 %v2990, %v2800
      %v2992 = vadd.f32 %v2991, %v2801
      %v2993 = vadd.f32 %v2992, %v2802
      %v2994 = vadd.f32 %v2993, %v2803
      %v2995 = vadd.f32 %v2994, %v2804
      %v2996 = vadd.f32 %v2995, %v2805
      %v2997 = vadd.f32 %v2996, %v2806
      %v2998 = vadd.f32 %v2997, %v2807
      %v2999 = vadd.f32 %v2998, %v2808
      %v3000 = vadd.f32 %v2999, %v2809
      %v3001 = vrot.slane %v3000, 4
      %v3002 = vadd.f32 %v3000, %v3001
      %v3003 = vrot.slane %v3002, 2
      %v3004 = vadd.f32 %v3002, %v3003
      %v3005 = vrot.slane %v3004, 1
      %v3006 = vadd.f32 %v3004, %v3005
      %v3007 = vmul.f32 %v2778, %v2778
      %v3008 = vmul.f32 %v2779, %v2779
      %v3009 = vmul.f32 %v2780, %v2780
      %v3010 = vmul.f32 %v2781, %v2781
      %v3011 = vmul.f32 %v2782, %v2782
      %v3012 = vmul.f32 %v2783, %v2783
      %v3013 = vmul.f32 %v2784, %v2784
      %v3014 = vmul.f32 %v2785, %v2785
      %v3015 = vmul.f32 %v2786, %v2786
      %v3016 = vmul.f32 %v2787, %v2787
      %v3017 = vmul.f32 %v2788, %v2788
      %v3018 = vmul.f32 %v2789, %v2789
      %v3019 = vmul.f32 %v2790, %v2790
      %v3020 = vmul.f32 %v2791, %v2791
      %v3021 = vmul.f32 %v2792, %v2792
      %v3022 = vmul.f32 %v2793, %v2793
      %v3023 = vmul.f32 %v2794, %v2794
      %v3024 = vmul.f32 %v2795, %v2795
      %v3025 = vmul.f32 %v2796, %v2796
      %v3026 = vmul.f32 %v2797, %v2797
      %v3027 = vmul.f32 %v2798, %v2798
      %v3028 = vmul.f32 %v2799, %v2799
      %v3029 = vmul.f32 %v2800, %v2800
      %v3030 = vmul.f32 %v2801, %v2801
      %v3031 = vmul.f32 %v2802, %v2802
      %v3032 = vmul.f32 %v2803, %v2803
      %v3033 = vmul.f32 %v2804, %v2804
      %v3034 = vmul.f32 %v2805, %v2805
      %v3035 = vmul.f32 %v2806, %v2806
      %v3036 = vmul.f32 %v2807, %v2807
      %v3037 = vmul.f32 %v2808, %v2808
      %v3038 = vmul.f32 %v2809, %v2809
      %v3039 = vadd.f32 %v3007, %v3008
      %v3040 = vadd.f32 %v3039, %v3009
      %v3041 = vadd.f32 %v3040, %v3010
      %v3042 = vadd.f32 %v3041, %v3011
      %v3043 = vadd.f32 %v3042, %v3012
      %v3044 = vadd.f32 %v3043, %v3013
      %v3045 = vadd.f32 %v3044, %v3014
      %v3046 = vadd.f32 %v3045, %v3015
      %v3047 = vadd.f32 %v3046, %v3016
      %v3048 = vadd.f32 %v3047, %v3017
      %v3049 = vadd.f32 %v3048, %v3018
      %v3050 = vadd.f32 %v3049, %v3019
      %v3051 = vadd.f32 %v3050, %v3020
      %v3052 = vadd.f32 %v3051, %v3021
      %v3053 = vadd.f32 %v3052, %v3022
      %v3054 = vadd.f32 %v3053, %v3023
      %v3055 = vadd.f32 %v3054, %v3024
      %v3056 = vadd.f32 %v3055, %v3025
      %v3057 = vadd.f32 %v3056, %v3026
      %v3058 = vadd.f32 %v3057, %v3027
      %v3059 = vadd.f32 %v3058, %v3028
      %v3060 = vadd.f32 %v3059, %v3029
      %v3061 = vadd.f32 %v3060, %v3030
      %v3062 = vadd.f32 %v3061, %v3031
      %v3063 = vadd.f32 %v3062, %v3032
      %v3064 = vadd.f32 %v3063, %v3033
      %v3065 = vadd.f32 %v3064, %v3034
      %v3066 = vadd.f32 %v3065, %v3035
      %v3067 = vadd.f32 %v3066, %v3036
      %v3068 = vadd.f32 %v3067, %v3037
      %v3069 = vadd.f32 %v3068, %v3038
      %v3070 = vrot.slane %v3069, 4
      %v3071 = vadd.f32 %v3069, %v3070
      %v3072 = vrot.slane %v3071, 2
      %v3073 = vadd.f32 %v3071, %v3072
      %v3074 = vrot.slane %v3073, 1
      %v3075 = vadd.f32 %v3073, %v3074
      %vm3076 = vcmask 1040384
      %v3077 = vsel %vm3076, %v3006, %v3075
      %3078 = vst [vmem:[%s465] sm:$0x3] %v3077
      %s3079 = smul.u32 16, %s24
      %p3080 = scmp.lt.s32.totalorder %s23, 1
      %s3081 = scalar_select %p3080, %s23, 1
      %p3082 = scmp.lt.s32.totalorder %s3079, 15
      %s3083 = scalar_select %p3082, %s3079, 15
      %s3084 = smul.addr %s3083, 2
      %s3085 = smul.addr %s3081, 32
      %s3086 = sadd.s32 %s3084, %s3085
      %s3087 = smul.addr %s3086, 4
      %s3088 = scalar_lea.vmem %s6, %s3087
      %p3089 = scmp.lt.s32.totalorder %s23, 1
      %s3090 = scalar_select %p3089, %s23, 1
      %p3091 = scmp.lt.s32.totalorder %s24, 0
      %s3092 = scalar_select %p3091, %s24, 0
      %s3093 = sadd.s32 %s3092, %s3090
      %s3094 = smul.addr %s3093, 2
      %s3095 = scalar_lea.vmem %s7, %s3094
      // Predicated region
      $region45: #{down_forward.4} parent=43 // pred_check
        %p3096 = pneg %p214
      $region46: #{down_forward.4} parent=43 // pred_check_branch
        %3098 = sbr.rel (%p3096) target = $region48
      $region47: #{down_forward.4} parent=43 // pred_region
        %s3099 = smul.u32 16, %s24
      $region48: #{down_forward.4} parent=43 // pred_fallthru
        _
      // Predicated region
      $region49: #{down_forward.4} parent=43 // pred_check
        %p3100 = pneg %p242
      $region50: #{down_forward.4} parent=43 // pred_check_branch
        %3102 = sbr.rel (%p3100) target = $region52
      $region51: #{down_forward.4} parent=43 // pred_region
        _
      $region52: #{down_forward.4} parent=43 // pred_fallthru
        _
    $region44: #{down_forward.4} parent=5 // pred_fallthru
      _
    %p3103 = scmp.le.s32.totalorder 2, %s14
    // Predicated region
    $region53: #{down_forward.4} parent=5 // pred_check
      %p3104 = pneg %p3103
    $region54: #{down_forward.4} parent=5 // pred_check_branch
      %3106 = sbr.rel (%p3104) target = $region56
    $region55: #{down_forward.4} parent=5 // pred_region
      %s3107 = ssub.s32 %s14, 2
      // Predicated region
      $region57: #{down_forward.4} parent=55 // pred_check
        %p3108 = pneg %p220
      $region58: #{down_forward.4} parent=55 // pred_check_branch
        %3110 = sbr.rel (%p3108) target = $region60
      $region59: #{down_forward.4} parent=55 // pred_region
        %s3111 = smul.u32 16, %s26
        %p3112 = scmp.lt.s32.totalorder %s25, 1
        %s3113 = scalar_select %p3112, %s25, 1
        %p3114 = scmp.lt.s32.totalorder %s3111, 15
        %s3115 = scalar_select %p3114, %s3111, 15
        %s3116 = smul.addr %s3115, 2
        %s3117 = smul.addr %s3113, 32
        %s3118 = sadd.s32 %s3116, %s3117
        %s3119 = smul.addr %s3118, 4
        %s3120 = scalar_lea.vmem %s6, %s3119
      $region60: #{down_forward.4} parent=55 // pred_fallthru
        _
      // Predicated region
      $region61: #{down_forward.4} parent=55 // pred_check
        %p3121 = pneg %p248
      $region62: #{down_forward.4} parent=55 // pred_check_branch
        %3123 = sbr.rel (%p3121) target = $region64
      $region63: #{down_forward.4} parent=55 // pred_region
        %p3124 = scmp.lt.s32.totalorder %s25, 1
        %s3125 = scalar_select %p3124, %s25, 1
        %p3126 = scmp.lt.s32.totalorder %s26, 0
        %s3127 = scalar_select %p3126, %s26, 0
        %s3128 = sadd.s32 %s3127, %s3125
        %s3129 = smul.addr %s3128, 2
        %s3130 = scalar_lea.vmem %s7, %s3129
      $region64: #{down_forward.4} parent=55 // pred_fallthru
        _
    $region56: #{down_forward.4} parent=5 // pred_fallthru
      _
  $region6: #{down_forward.4} parent=0 // loop_footer
    %s18 = sadd.s32 1, %s14
  $region7: #{down_forward.4} parent=0 // loop_footer_branch
    %13 = sbr.rel target = $region3
  $region8: #{down_forward.4} parent=0 // loop_exit
    _

</llo_original>
